<compile_context>
chip_gen: v7x
topology: tpu7x:2x2x1
jax: 0.10.0
libtpu: 0.0.40
codegen_flags: <defaults>
</compile_context>

<pallas_src>
import functools
import math

import jax
import jax.numpy as jnp
from jax import lax
from jax.experimental import pallas as pl
from jax.experimental.pallas import tpu as pltpu


# ----------------------------- fused kernel ------------------------------

def _mrgcn_fused_kernel(a_ref, x_ref, w0_ref, b0_ref, w1_ref, b1_ref,
                        mrw_ref, wl1_ref, bl1_ref, wl2_ref, bl2_ref, o_ref):
    """Whole MRGCN forward (eval mode) -> per-node logits [N, num_class].

    a_ref   [R, N, N]      raw adjacencies (relation-major)
    x_ref   [N, C_in]      node features
    w0_ref  [R, C_in, C]   per-relation GCN layer-0 weights
    b0_ref  [R, 1, C]      per-relation GCN layer-0 bias
    w1_ref  [R, C, C]      per-relation GCN layer-1 weights
    b1_ref  [R, 1, C]      per-relation GCN layer-1 bias
    mrw_ref [L*R, C, C]    MRGCO weights, relation-major per layer
    wl1_ref [R, C, C]      linear1 weight split into per-relation row blocks
    bl1_ref [1, C]         linear1 bias
    wl2_ref [C, K]         linear2 weight
    bl2_ref [1, K]         linear2 bias
    """
    R = a_ref.shape[0]
    N = a_ref.shape[1]
    L = mrw_ref.shape[0] // R
    f32 = jnp.float32

    # Compile-time cosine-DFT coefficients (R is static and tiny).
    cm = [[math.cos(2.0 * math.pi * r * k / R) for k in range(R)]
          for r in range(R)]

    def dft_combine(arrays, coeffs):
        """sum_i coeffs[i] * arrays[i] (Python-unrolled, skips trivial coeffs)."""
        acc = None
        for arr, c in zip(arrays, coeffs):
            if c == 0.0:
                continue
            term = arr if c == 1.0 else arr * c
            acc = term if acc is None else acc + term
        if acc is None:
            acc = jnp.zeros_like(arrays[0])
        return acc

    row = lax.broadcasted_iota(jnp.int32, (N, N), 0)
    col = lax.broadcasted_iota(jnp.int32, (N, N), 1)
    eye = (row == col).astype(f32)

    x = x_ref[...]

    # ----- per-relation GCN stack (shared normalized adjacency) -----
    norm_adj = []   # [N, N] per relation
    hx = []         # [N, C] per relation (== tensor_X[:, :, r])
    for r in range(R):
        adj = a_ref[r]
        adj1 = adj * (1.0 - eye) + eye                     # force diagonal to 1
        deg = jnp.sum(adj1, axis=-1, keepdims=True)        # [N, 1]
        dis = lax.rsqrt(jnp.maximum(deg, 1.0))             # clamp(min=1); deg>=1 so
                                                           # identical to gcn_norm's mask
        # D^-1/2 (A+I) D^-1/2: column scale via diag matmul (MXU), row scale on VPU.
        na = dis * jnp.dot(adj1, dis * eye, preferred_element_type=f32)
        norm_adj.append(na)

        # relu(DenseGCNConv_0(X))
        h = jnp.dot(x, w0_ref[r], preferred_element_type=f32)
        h = jnp.maximum(jnp.dot(na, h, preferred_element_type=f32) + b0_ref[r], 0.0)
        # TODO(synk): F.dropout between the two convs omitted (eval mode -> identity)
        # relu(DenseGCNConv_1(h))
        h = jnp.dot(h, w1_ref[r], preferred_element_type=f32)
        h = jnp.maximum(jnp.dot(na, h, preferred_element_type=f32) + b1_ref[r], 0.0)
        hx.append(h)

    # Re(fft(tensor_A)) along the relation axis is layer-invariant -> hoist.
    afft = [dft_combine(norm_adj, [cm[r][k] for r in range(R)]) for k in range(R)]

    inv_r = 1.0 / R
    for l in range(L):
        # res = tensor_product(tensor_A, tensor_X)
        bfft = [dft_combine(hx, [cm[r][k] for r in range(R)]) for k in range(R)]
        ct = [jnp.dot(afft[k], bfft[k], preferred_element_type=f32) for k in range(R)]
        res = [dft_combine(ct, [cm[k][r] * inv_r for k in range(R)]) for r in range(R)]

        # res = tensor_product(res, weight_l)
        wfft = [dft_combine([mrw_ref[l * R + rr] for rr in range(R)],
                            [cm[rr][k] for rr in range(R)]) for k in range(R)]
        rfft = [dft_combine(res, [cm[r][k] for r in range(R)]) for k in range(R)]
        dt = [jnp.dot(rfft[k], wfft[k], preferred_element_type=f32) for k in range(R)]
        out = [dft_combine(dt, [cm[k][r] * inv_r for k in range(R)]) for r in range(R)]

        hx = [jnp.maximum(o, 0.0) for o in out]            # F.relu
        # TODO(synk): inter-layer F.dropout omitted (eval mode -> identity)

    # linear1 over flatten(tensor_X, 1, 2):  X_[:, c*R + r] = hx[r][:, c]
    #   X_ @ W_lin1 == sum_r hx[r] @ W_lin1[rows c*R + r]  (rearranged host-side)
    lin1 = bl1_ref[...]
    for r in range(R):
        lin1 = lin1 + jnp.dot(hx[r], wl1_ref[r], preferred_element_type=f32)
    lin1 = jnp.maximum(lin1, 0.0)

    # linear2 for all nodes; the target_x gather + loss happen outside in JAX.
    o_ref[...] = jnp.dot(lin1, wl2_ref[...], preferred_element_type=f32) + bl2_ref[...]


def mrgcn_pallas(A, X, gcn_params, mrgco_ws, w1, b1, w2, b2):
    """Single fused pallas_call for the whole forward; returns per-node logits."""
    R, N, _ = A.shape
    c_out = gcn_params[0][0].shape[1]
    num_class = w2.shape[1]

    # Stack per-relation GCN params relation-major.
    w0s = jnp.stack([p[0] for p in gcn_params])               # [R, c_in, c_out]
    b0s = jnp.stack([p[1] for p in gcn_params])[:, None, :]   # [R, 1, c_out]
    w1s = jnp.stack([p[2] for p in gcn_params])               # [R, c_out, c_out]
    b1s = jnp.stack([p[3] for p in gcn_params])[:, None, :]   # [R, 1, c_out]

    # MRGCO weights [c_out, c_out, R] per layer -> relation-major [L*R, c_out, c_out].
    mrw = jnp.concatenate([jnp.transpose(w, (2, 0, 1)) for w in mrgco_ws], axis=0)

    # linear1 weight [c_out*R, c_out] with torch.flatten(., 1, 2) row order
    # (row index = c*R + r) -> per-relation row blocks [R, c_out, c_out].
    wl1 = jnp.transpose(w1.reshape(c_out, R, c_out), (1, 0, 2))

    return pl.pallas_call(
        _mrgcn_fused_kernel,
        out_shape=jax.ShapeDtypeStruct((N, num_class), jnp.float32),
        # Tiny kernel; explicit limit keeps the v7x 64 MiB VMEM constraint visible.
        compiler_params=pltpu.CompilerParams(vmem_limit_bytes=32 * 1024 * 1024),
    )(A, X, w0s, b0s, w1s, b1s, mrw, wl1,
      b1.reshape(1, c_out), w2, b2.reshape(1, num_class))


# ----------------------------- MRGCN model -------------------------------

def init_params(key, num_rel, in_ch, out_ch, num_class, num_layers):
    keys = jax.random.split(key, 2 * num_rel + num_layers + 2)
    it = iter(keys)
    gcn = []
    for _ in range(num_rel):
        w0 = 0.1 * jax.random.normal(next(it), (in_ch, out_ch), jnp.float32)
        b0 = jnp.zeros((out_ch,), jnp.float32)
        w1 = 0.1 * jax.random.normal(next(it), (out_ch, out_ch), jnp.float32)
        b1 = jnp.zeros((out_ch,), jnp.float32)
        gcn.append((w0, b0, w1, b1))
    mrgco = [0.01 * jax.random.normal(next(it), (out_ch, out_ch, num_rel), jnp.float32)
             for _ in range(num_layers)]
    w1 = 0.1 * jax.random.normal(next(it), (out_ch * num_rel, out_ch), jnp.float32)
    b1 = jnp.zeros((out_ch,), jnp.float32)
    w2 = 0.1 * jax.random.normal(next(it), (out_ch, num_class), jnp.float32)
    b2 = jnp.zeros((num_class,), jnp.float32)
    return {'gcn': gcn, 'mrgco': mrgco, 'w1': w1, 'b1': b1, 'w2': w2, 'b2': b2}


@functools.partial(jax.jit, static_argnames=("num_layers",))
def mrgcn_forward(params, A, X, target_x, target, *, num_layers):
    logits_all = mrgcn_pallas(A, X, params['gcn'], params['mrgco'][:num_layers],
                              params['w1'], params['b1'],
                              params['w2'], params['b2'])            # [N, num_class]
    y = logits_all[target_x]                                         # tiny gather: plain JAX

    # nn.CrossEntropyLoss (tiny scalar reduction, plain JAX)
    lse = jax.scipy.special.logsumexp(y, axis=-1)
    picked = jnp.take_along_axis(y, target[:, None], axis=-1)[:, 0]
    loss = jnp.mean(lse - picked)
    return loss, y


# --------------------------------- main -----------------------------------

if __name__ == "__main__":
    N, R, C_IN, C_OUT, NUM_CLASS, NUM_LAYERS, T = 16, 3, 8, 32, 4, 2, 4

    key = jax.random.PRNGKey(0)
    k_adj, k_x, k_param = jax.random.split(key, 3)
    adj_keys = jax.random.split(k_adj, R)
    A = jnp.stack([(jax.random.uniform(adj_keys[i], (N, N)) < 0.3).astype(jnp.float32)
                   for i in range(R)], axis=0)                    # [R, N, N]
    X = jax.random.normal(k_x, (N, C_IN), dtype=jnp.float32)      # [N, in_channels]
    target_x = jnp.array([0, 3, 7, 11], dtype=jnp.int32)          # [T]
    target = jnp.array([0, 1, 2, 3], dtype=jnp.int32)             # [T]

    params = init_params(k_param, R, C_IN, C_OUT, NUM_CLASS, NUM_LAYERS)

    loss, y = mrgcn_forward(params, A, X, target_x, target, num_layers=NUM_LAYERS)
    jax.block_until_ready((loss, y))
    assert y.shape == (T, NUM_CLASS)
    print("KERNEL_OK")
</pallas_src>

<mosaic_0001>
module attributes {stable_mosaic.version = 11 : i64} {
  func.func @_mrgcn_fused_kernel(%arg0: memref<3x16x16xf32, #tpu.memory_space<vmem>>, %arg1: memref<16x8xf32, #tpu.memory_space<vmem>>, %arg2: memref<3x8x32xf32, #tpu.memory_space<vmem>>, %arg3: memref<3x1x32xf32, #tpu.memory_space<vmem>>, %arg4: memref<3x32x32xf32, #tpu.memory_space<vmem>>, %arg5: memref<3x1x32xf32, #tpu.memory_space<vmem>>, %arg6: memref<6x32x32xf32, #tpu.memory_space<vmem>>, %arg7: memref<3x32x32xf32, #tpu.memory_space<vmem>>, %arg8: memref<1x32xf32, #tpu.memory_space<vmem>>, %arg9: memref<32x4xf32, #tpu.memory_space<vmem>>, %arg10: memref<1x4xf32, #tpu.memory_space<vmem>>, %arg11: memref<16x4xf32, #tpu.memory_space<vmem>>) attributes {dimension_semantics = [], scalar_prefetch = 0 : i64, scratch_operands = 0 : i64, tpu.core_type = #tpu.core_type<tc>} {
    %0 = tpu.iota {dimensions = array<i32: 0>} : vector<16x16xi32>
    %1 = tpu.iota {dimensions = array<i32: 1>} : vector<16x16xi32>
    %2 = arith.cmpi eq, %0, %1 : vector<16x16xi32>
    %3 = arith.extui %2 : vector<16x16xi1> to vector<16x16xi32>
    %4 = arith.sitofp %3 : vector<16x16xi32> to vector<16x16xf32>
    %c0 = arith.constant 0 : index
    %c0_0 = arith.constant 0 : index
    %5 = vector.load %arg1[%c0, %c0_0] : memref<16x8xf32, #tpu.memory_space<vmem>>, vector<16x8xf32>
    %c0_1 = arith.constant 0 : index
    %c0_2 = arith.constant 0 : index
    %c0_3 = arith.constant 0 : index
    %6 = vector.load %arg0[%c0_1, %c0_2, %c0_3] : memref<3x16x16xf32, #tpu.memory_space<vmem>>, vector<1x16x16xf32>
    %7 = vector.shape_cast %6 : vector<1x16x16xf32> to vector<16x16xf32>
    %cst = arith.constant 1.000000e+00 : f32
    %8 = vector.broadcast %cst : f32 to vector<16x16xf32>
    %9 = arith.subf %8, %4 : vector<16x16xf32>
    %10 = arith.mulf %7, %9 : vector<16x16xf32>
    %11 = arith.addf %10, %4 : vector<16x16xf32>
    %cst_4 = arith.constant dense<0.000000e+00> : vector<16xf32>
    %12 = vector.multi_reduction <add>, %11, %cst_4 [1] : vector<16x16xf32> to vector<16xf32>
    %13 = vector.shape_cast %12 : vector<16xf32> to vector<16x1xf32>
    %cst_5 = arith.constant 1.000000e+00 : f32
    %14 = vector.broadcast %cst_5 : f32 to vector<16x1xf32>
    %15 = arith.maximumf %13, %14 : vector<16x1xf32>
    %16 = math.rsqrt %15 : vector<16x1xf32>
    %17 = vector.broadcast %16 : vector<16x1xf32> to vector<16x16xf32>
    %18 = arith.mulf %17, %4 : vector<16x16xf32>
    %cst_6 = arith.constant dense<0.000000e+00> : vector<16x16xf32>
    %19 = tpu.matmul %11, %18, %cst_6 {dimension_numbers = #tpu.dot_dimension_numbers<[1], [0], [0], [1], [0, 0, 1, 1], [], []>} : vector<16x16xf32>, vector<16x16xf32>, vector<16x16xf32> -> vector<16x16xf32>
    %20 = vector.broadcast %16 : vector<16x1xf32> to vector<16x16xf32>
    %21 = arith.mulf %20, %19 : vector<16x16xf32>
    %c0_7 = arith.constant 0 : index
    %c0_8 = arith.constant 0 : index
    %c0_9 = arith.constant 0 : index
    %22 = vector.load %arg2[%c0_7, %c0_8, %c0_9] : memref<3x8x32xf32, #tpu.memory_space<vmem>>, vector<1x8x32xf32>
    %23 = vector.shape_cast %22 : vector<1x8x32xf32> to vector<8x32xf32>
    %cst_10 = arith.constant dense<0.000000e+00> : vector<16x32xf32>
    %24 = tpu.matmul %5, %23, %cst_10 {dimension_numbers = #tpu.dot_dimension_numbers<[1], [0], [0], [1], [0, 0, 1, 1], [], []>} : vector<16x8xf32>, vector<8x32xf32>, vector<16x32xf32> -> vector<16x32xf32>
    %cst_11 = arith.constant dense<0.000000e+00> : vector<16x32xf32>
    %25 = tpu.matmul %21, %24, %cst_11 {dimension_numbers = #tpu.dot_dimension_numbers<[1], [0], [0], [1], [0, 0, 1, 1], [], []>} : vector<16x16xf32>, vector<16x32xf32>, vector<16x32xf32> -> vector<16x32xf32>
    %c0_12 = arith.constant 0 : index
    %c0_13 = arith.constant 0 : index
    %c0_14 = arith.constant 0 : index
    %26 = vector.load %arg3[%c0_12, %c0_13, %c0_14] : memref<3x1x32xf32, #tpu.memory_space<vmem>>, vector<1x1x32xf32>
    %27 = vector.shape_cast %26 : vector<1x1x32xf32> to vector<1x32xf32>
    %28 = vector.broadcast %27 : vector<1x32xf32> to vector<16x32xf32>
    %29 = arith.addf %25, %28 : vector<16x32xf32>
    %cst_15 = arith.constant 0.000000e+00 : f32
    %30 = vector.broadcast %cst_15 : f32 to vector<16x32xf32>
    %31 = arith.maximumf %29, %30 : vector<16x32xf32>
    %c0_16 = arith.constant 0 : index
    %c0_17 = arith.constant 0 : index
    %c0_18 = arith.constant 0 : index
    %32 = vector.load %arg4[%c0_16, %c0_17, %c0_18] : memref<3x32x32xf32, #tpu.memory_space<vmem>>, vector<1x32x32xf32>
    %33 = vector.shape_cast %32 : vector<1x32x32xf32> to vector<32x32xf32>
    %cst_19 = arith.constant dense<0.000000e+00> : vector<16x32xf32>
    %34 = tpu.matmul %31, %33, %cst_19 {dimension_numbers = #tpu.dot_dimension_numbers<[1], [0], [0], [1], [0, 0, 1, 1], [], []>} : vector<16x32xf32>, vector<32x32xf32>, vector<16x32xf32> -> vector<16x32xf32>
    %cst_20 = arith.constant dense<0.000000e+00> : vector<16x32xf32>
    %35 = tpu.matmul %21, %34, %cst_20 {dimension_numbers = #tpu.dot_dimension_numbers<[1], [0], [0], [1], [0, 0, 1, 1], [], []>} : vector<16x16xf32>, vector<16x32xf32>, vector<16x32xf32> -> vector<16x32xf32>
    %c0_21 = arith.constant 0 : index
    %c0_22 = arith.constant 0 : index
    %c0_23 = arith.constant 0 : index
    %36 = vector.load %arg5[%c0_21, %c0_22, %c0_23] : memref<3x1x32xf32, #tpu.memory_space<vmem>>, vector<1x1x32xf32>
    %37 = vector.shape_cast %36 : vector<1x1x32xf32> to vector<1x32xf32>
    %38 = vector.broadcast %37 : vector<1x32xf32> to vector<16x32xf32>
    %39 = arith.addf %35, %38 : vector<16x32xf32>
    %cst_24 = arith.constant 0.000000e+00 : f32
    %40 = vector.broadcast %cst_24 : f32 to vector<16x32xf32>
    %41 = arith.maximumf %39, %40 : vector<16x32xf32>
    %c1 = arith.constant 1 : index
    %c0_25 = arith.constant 0 : index
    %c0_26 = arith.constant 0 : index
    %42 = vector.load %arg0[%c1, %c0_25, %c0_26] : memref<3x16x16xf32, #tpu.memory_space<vmem>>, vector<1x16x16xf32>
    %43 = vector.shape_cast %42 : vector<1x16x16xf32> to vector<16x16xf32>
    %cst_27 = arith.constant 1.000000e+00 : f32
    %44 = vector.broadcast %cst_27 : f32 to vector<16x16xf32>
    %45 = arith.subf %44, %4 : vector<16x16xf32>
    %46 = arith.mulf %43, %45 : vector<16x16xf32>
    %47 = arith.addf %46, %4 : vector<16x16xf32>
    %cst_28 = arith.constant dense<0.000000e+00> : vector<16xf32>
    %48 = vector.multi_reduction <add>, %47, %cst_28 [1] : vector<16x16xf32> to vector<16xf32>
    %49 = vector.shape_cast %48 : vector<16xf32> to vector<16x1xf32>
    %cst_29 = arith.constant 1.000000e+00 : f32
    %50 = vector.broadcast %cst_29 : f32 to vector<16x1xf32>
    %51 = arith.maximumf %49, %50 : vector<16x1xf32>
    %52 = math.rsqrt %51 : vector<16x1xf32>
    %53 = vector.broadcast %52 : vector<16x1xf32> to vector<16x16xf32>
    %54 = arith.mulf %53, %4 : vector<16x16xf32>
    %cst_30 = arith.constant dense<0.000000e+00> : vector<16x16xf32>
    %55 = tpu.matmul %47, %54, %cst_30 {dimension_numbers = #tpu.dot_dimension_numbers<[1], [0], [0], [1], [0, 0, 1, 1], [], []>} : vector<16x16xf32>, vector<16x16xf32>, vector<16x16xf32> -> vector<16x16xf32>
    %56 = vector.broadcast %52 : vector<16x1xf32> to vector<16x16xf32>
    %57 = arith.mulf %56, %55 : vector<16x16xf32>
    %c1_31 = arith.constant 1 : index
    %c0_32 = arith.constant 0 : index
    %c0_33 = arith.constant 0 : index
    %58 = vector.load %arg2[%c1_31, %c0_32, %c0_33] : memref<3x8x32xf32, #tpu.memory_space<vmem>>, vector<1x8x32xf32>
    %59 = vector.shape_cast %58 : vector<1x8x32xf32> to vector<8x32xf32>
    %cst_34 = arith.constant dense<0.000000e+00> : vector<16x32xf32>
    %60 = tpu.matmul %5, %59, %cst_34 {dimension_numbers = #tpu.dot_dimension_numbers<[1], [0], [0], [1], [0, 0, 1, 1], [], []>} : vector<16x8xf32>, vector<8x32xf32>, vector<16x32xf32> -> vector<16x32xf32>
    %cst_35 = arith.constant dense<0.000000e+00> : vector<16x32xf32>
    %61 = tpu.matmul %57, %60, %cst_35 {dimension_numbers = #tpu.dot_dimension_numbers<[1], [0], [0], [1], [0, 0, 1, 1], [], []>} : vector<16x16xf32>, vector<16x32xf32>, vector<16x32xf32> -> vector<16x32xf32>
    %c1_36 = arith.constant 1 : index
    %c0_37 = arith.constant 0 : index
    %c0_38 = arith.constant 0 : index
    %62 = vector.load %arg3[%c1_36, %c0_37, %c0_38] : memref<3x1x32xf32, #tpu.memory_space<vmem>>, vector<1x1x32xf32>
    %63 = vector.shape_cast %62 : vector<1x1x32xf32> to vector<1x32xf32>
    %64 = vector.broadcast %63 : vector<1x32xf32> to vector<16x32xf32>
    %65 = arith.addf %61, %64 : vector<16x32xf32>
    %cst_39 = arith.constant 0.000000e+00 : f32
    %66 = vector.broadcast %cst_39 : f32 to vector<16x32xf32>
    %67 = arith.maximumf %65, %66 : vector<16x32xf32>
    %c1_40 = arith.constant 1 : index
    %c0_41 = arith.constant 0 : index
    %c0_42 = arith.constant 0 : index
    %68 = vector.load %arg4[%c1_40, %c0_41, %c0_42] : memref<3x32x32xf32, #tpu.memory_space<vmem>>, vector<1x32x32xf32>
    %69 = vector.shape_cast %68 : vector<1x32x32xf32> to vector<32x32xf32>
    %cst_43 = arith.constant dense<0.000000e+00> : vector<16x32xf32>
    %70 = tpu.matmul %67, %69, %cst_43 {dimension_numbers = #tpu.dot_dimension_numbers<[1], [0], [0], [1], [0, 0, 1, 1], [], []>} : vector<16x32xf32>, vector<32x32xf32>, vector<16x32xf32> -> vector<16x32xf32>
    %cst_44 = arith.constant dense<0.000000e+00> : vector<16x32xf32>
    %71 = tpu.matmul %57, %70, %cst_44 {dimension_numbers = #tpu.dot_dimension_numbers<[1], [0], [0], [1], [0, 0, 1, 1], [], []>} : vector<16x16xf32>, vector<16x32xf32>, vector<16x32xf32> -> vector<16x32xf32>
    %c1_45 = arith.constant 1 : index
    %c0_46 = arith.constant 0 : index
    %c0_47 = arith.constant 0 : index
    %72 = vector.load %arg5[%c1_45, %c0_46, %c0_47] : memref<3x1x32xf32, #tpu.memory_space<vmem>>, vector<1x1x32xf32>
    %73 = vector.shape_cast %72 : vector<1x1x32xf32> to vector<1x32xf32>
    %74 = vector.broadcast %73 : vector<1x32xf32> to vector<16x32xf32>
    %75 = arith.addf %71, %74 : vector<16x32xf32>
    %cst_48 = arith.constant 0.000000e+00 : f32
    %76 = vector.broadcast %cst_48 : f32 to vector<16x32xf32>
    %77 = arith.maximumf %75, %76 : vector<16x32xf32>
    %c2 = arith.constant 2 : index
    %c0_49 = arith.constant 0 : index
    %c0_50 = arith.constant 0 : index
    %78 = vector.load %arg0[%c2, %c0_49, %c0_50] : memref<3x16x16xf32, #tpu.memory_space<vmem>>, vector<1x16x16xf32>
    %79 = vector.shape_cast %78 : vector<1x16x16xf32> to vector<16x16xf32>
    %cst_51 = arith.constant 1.000000e+00 : f32
    %80 = vector.broadcast %cst_51 : f32 to vector<16x16xf32>
    %81 = arith.subf %80, %4 : vector<16x16xf32>
    %82 = arith.mulf %79, %81 : vector<16x16xf32>
    %83 = arith.addf %82, %4 : vector<16x16xf32>
    %cst_52 = arith.constant dense<0.000000e+00> : vector<16xf32>
    %84 = vector.multi_reduction <add>, %83, %cst_52 [1] : vector<16x16xf32> to vector<16xf32>
    %85 = vector.shape_cast %84 : vector<16xf32> to vector<16x1xf32>
    %cst_53 = arith.constant 1.000000e+00 : f32
    %86 = vector.broadcast %cst_53 : f32 to vector<16x1xf32>
    %87 = arith.maximumf %85, %86 : vector<16x1xf32>
    %88 = math.rsqrt %87 : vector<16x1xf32>
    %89 = vector.broadcast %88 : vector<16x1xf32> to vector<16x16xf32>
    %90 = arith.mulf %89, %4 : vector<16x16xf32>
    %cst_54 = arith.constant dense<0.000000e+00> : vector<16x16xf32>
    %91 = tpu.matmul %83, %90, %cst_54 {dimension_numbers = #tpu.dot_dimension_numbers<[1], [0], [0], [1], [0, 0, 1, 1], [], []>} : vector<16x16xf32>, vector<16x16xf32>, vector<16x16xf32> -> vector<16x16xf32>
    %92 = vector.broadcast %88 : vector<16x1xf32> to vector<16x16xf32>
    %93 = arith.mulf %92, %91 : vector<16x16xf32>
    %c2_55 = arith.constant 2 : index
    %c0_56 = arith.constant 0 : index
    %c0_57 = arith.constant 0 : index
    %94 = vector.load %arg2[%c2_55, %c0_56, %c0_57] : memref<3x8x32xf32, #tpu.memory_space<vmem>>, vector<1x8x32xf32>
    %95 = vector.shape_cast %94 : vector<1x8x32xf32> to vector<8x32xf32>
    %cst_58 = arith.constant dense<0.000000e+00> : vector<16x32xf32>
    %96 = tpu.matmul %5, %95, %cst_58 {dimension_numbers = #tpu.dot_dimension_numbers<[1], [0], [0], [1], [0, 0, 1, 1], [], []>} : vector<16x8xf32>, vector<8x32xf32>, vector<16x32xf32> -> vector<16x32xf32>
    %cst_59 = arith.constant dense<0.000000e+00> : vector<16x32xf32>
    %97 = tpu.matmul %93, %96, %cst_59 {dimension_numbers = #tpu.dot_dimension_numbers<[1], [0], [0], [1], [0, 0, 1, 1], [], []>} : vector<16x16xf32>, vector<16x32xf32>, vector<16x32xf32> -> vector<16x32xf32>
    %c2_60 = arith.constant 2 : index
    %c0_61 = arith.constant 0 : index
    %c0_62 = arith.constant 0 : index
    %98 = vector.load %arg3[%c2_60, %c0_61, %c0_62] : memref<3x1x32xf32, #tpu.memory_space<vmem>>, vector<1x1x32xf32>
    %99 = vector.shape_cast %98 : vector<1x1x32xf32> to vector<1x32xf32>
    %100 = vector.broadcast %99 : vector<1x32xf32> to vector<16x32xf32>
    %101 = arith.addf %97, %100 : vector<16x32xf32>
    %cst_63 = arith.constant 0.000000e+00 : f32
    %102 = vector.broadcast %cst_63 : f32 to vector<16x32xf32>
    %103 = arith.maximumf %101, %102 : vector<16x32xf32>
    %c2_64 = arith.constant 2 : index
    %c0_65 = arith.constant 0 : index
    %c0_66 = arith.constant 0 : index
    %104 = vector.load %arg4[%c2_64, %c0_65, %c0_66] : memref<3x32x32xf32, #tpu.memory_space<vmem>>, vector<1x32x32xf32>
    %105 = vector.shape_cast %104 : vector<1x32x32xf32> to vector<32x32xf32>
    %cst_67 = arith.constant dense<0.000000e+00> : vector<16x32xf32>
    %106 = tpu.matmul %103, %105, %cst_67 {dimension_numbers = #tpu.dot_dimension_numbers<[1], [0], [0], [1], [0, 0, 1, 1], [], []>} : vector<16x32xf32>, vector<32x32xf32>, vector<16x32xf32> -> vector<16x32xf32>
    %cst_68 = arith.constant dense<0.000000e+00> : vector<16x32xf32>
    %107 = tpu.matmul %93, %106, %cst_68 {dimension_numbers = #tpu.dot_dimension_numbers<[1], [0], [0], [1], [0, 0, 1, 1], [], []>} : vector<16x16xf32>, vector<16x32xf32>, vector<16x32xf32> -> vector<16x32xf32>
    %c2_69 = arith.constant 2 : index
    %c0_70 = arith.constant 0 : index
    %c0_71 = arith.constant 0 : index
    %108 = vector.load %arg5[%c2_69, %c0_70, %c0_71] : memref<3x1x32xf32, #tpu.memory_space<vmem>>, vector<1x1x32xf32>
    %109 = vector.shape_cast %108 : vector<1x1x32xf32> to vector<1x32xf32>
    %110 = vector.broadcast %109 : vector<1x32xf32> to vector<16x32xf32>
    %111 = arith.addf %107, %110 : vector<16x32xf32>
    %cst_72 = arith.constant 0.000000e+00 : f32
    %112 = vector.broadcast %cst_72 : f32 to vector<16x32xf32>
    %113 = arith.maximumf %111, %112 : vector<16x32xf32>
    %114 = arith.addf %21, %57 : vector<16x16xf32>
    %115 = arith.addf %114, %93 : vector<16x16xf32>
    %cst_73 = arith.constant -5.000000e-01 : f32
    %116 = vector.broadcast %cst_73 : f32 to vector<16x16xf32>
    %117 = arith.mulf %57, %116 : vector<16x16xf32>
    %118 = arith.addf %21, %117 : vector<16x16xf32>
    %cst_74 = arith.constant -5.000000e-01 : f32
    %119 = vector.broadcast %cst_74 : f32 to vector<16x16xf32>
    %120 = arith.mulf %93, %119 : vector<16x16xf32>
    %121 = arith.addf %118, %120 : vector<16x16xf32>
    %cst_75 = arith.constant -5.000000e-01 : f32
    %122 = vector.broadcast %cst_75 : f32 to vector<16x16xf32>
    %123 = arith.mulf %57, %122 : vector<16x16xf32>
    %124 = arith.addf %21, %123 : vector<16x16xf32>
    %cst_76 = arith.constant -5.000000e-01 : f32
    %125 = vector.broadcast %cst_76 : f32 to vector<16x16xf32>
    %126 = arith.mulf %93, %125 : vector<16x16xf32>
    %127 = arith.addf %124, %126 : vector<16x16xf32>
    %128 = arith.addf %41, %77 : vector<16x32xf32>
    %129 = arith.addf %128, %113 : vector<16x32xf32>
    %cst_77 = arith.constant -5.000000e-01 : f32
    %130 = vector.broadcast %cst_77 : f32 to vector<16x32xf32>
    %131 = arith.mulf %77, %130 : vector<16x32xf32>
    %132 = arith.addf %41, %131 : vector<16x32xf32>
    %cst_78 = arith.constant -5.000000e-01 : f32
    %133 = vector.broadcast %cst_78 : f32 to vector<16x32xf32>
    %134 = arith.mulf %113, %133 : vector<16x32xf32>
    %135 = arith.addf %132, %134 : vector<16x32xf32>
    %cst_79 = arith.constant -5.000000e-01 : f32
    %136 = vector.broadcast %cst_79 : f32 to vector<16x32xf32>
    %137 = arith.mulf %77, %136 : vector<16x32xf32>
    %138 = arith.addf %41, %137 : vector<16x32xf32>
    %cst_80 = arith.constant -5.000000e-01 : f32
    %139 = vector.broadcast %cst_80 : f32 to vector<16x32xf32>
    %140 = arith.mulf %113, %139 : vector<16x32xf32>
    %141 = arith.addf %138, %140 : vector<16x32xf32>
    %cst_81 = arith.constant dense<0.000000e+00> : vector<16x32xf32>
    %142 = tpu.matmul %115, %129, %cst_81 {dimension_numbers = #tpu.dot_dimension_numbers<[1], [0], [0], [1], [0, 0, 1, 1], [], []>} : vector<16x16xf32>, vector<16x32xf32>, vector<16x32xf32> -> vector<16x32xf32>
    %cst_82 = arith.constant dense<0.000000e+00> : vector<16x32xf32>
    %143 = tpu.matmul %121, %135, %cst_82 {dimension_numbers = #tpu.dot_dimension_numbers<[1], [0], [0], [1], [0, 0, 1, 1], [], []>} : vector<16x16xf32>, vector<16x32xf32>, vector<16x32xf32> -> vector<16x32xf32>
    %cst_83 = arith.constant dense<0.000000e+00> : vector<16x32xf32>
    %144 = tpu.matmul %127, %141, %cst_83 {dimension_numbers = #tpu.dot_dimension_numbers<[1], [0], [0], [1], [0, 0, 1, 1], [], []>} : vector<16x16xf32>, vector<16x32xf32>, vector<16x32xf32> -> vector<16x32xf32>
    %cst_84 = arith.constant 0.333333343 : f32
    %145 = vector.broadcast %cst_84 : f32 to vector<16x32xf32>
    %146 = arith.mulf %142, %145 : vector<16x32xf32>
    %cst_85 = arith.constant 0.333333343 : f32
    %147 = vector.broadcast %cst_85 : f32 to vector<16x32xf32>
    %148 = arith.mulf %143, %147 : vector<16x32xf32>
    %149 = arith.addf %146, %148 : vector<16x32xf32>
    %cst_86 = arith.constant 0.333333343 : f32
    %150 = vector.broadcast %cst_86 : f32 to vector<16x32xf32>
    %151 = arith.mulf %144, %150 : vector<16x32xf32>
    %152 = arith.addf %149, %151 : vector<16x32xf32>
    %cst_87 = arith.constant 0.333333343 : f32
    %153 = vector.broadcast %cst_87 : f32 to vector<16x32xf32>
    %154 = arith.mulf %142, %153 : vector<16x32xf32>
    %cst_88 = arith.constant -0.166666672 : f32
    %155 = vector.broadcast %cst_88 : f32 to vector<16x32xf32>
    %156 = arith.mulf %143, %155 : vector<16x32xf32>
    %157 = arith.addf %154, %156 : vector<16x32xf32>
    %cst_89 = arith.constant -0.166666672 : f32
    %158 = vector.broadcast %cst_89 : f32 to vector<16x32xf32>
    %159 = arith.mulf %144, %158 : vector<16x32xf32>
    %160 = arith.addf %157, %159 : vector<16x32xf32>
    %cst_90 = arith.constant 0.333333343 : f32
    %161 = vector.broadcast %cst_90 : f32 to vector<16x32xf32>
    %162 = arith.mulf %142, %161 : vector<16x32xf32>
    %cst_91 = arith.constant -0.166666672 : f32
    %163 = vector.broadcast %cst_91 : f32 to vector<16x32xf32>
    %164 = arith.mulf %143, %163 : vector<16x32xf32>
    %165 = arith.addf %162, %164 : vector<16x32xf32>
    %cst_92 = arith.constant -0.166666672 : f32
    %166 = vector.broadcast %cst_92 : f32 to vector<16x32xf32>
    %167 = arith.mulf %144, %166 : vector<16x32xf32>
    %168 = arith.addf %165, %167 : vector<16x32xf32>
    %c0_93 = arith.constant 0 : index
    %c0_94 = arith.constant 0 : index
    %c0_95 = arith.constant 0 : index
    %169 = vector.load %arg6[%c0_93, %c0_94, %c0_95] : memref<6x32x32xf32, #tpu.memory_space<vmem>>, vector<1x32x32xf32>
    %170 = vector.shape_cast %169 : vector<1x32x32xf32> to vector<32x32xf32>
    %c1_96 = arith.constant 1 : index
    %c0_97 = arith.constant 0 : index
    %c0_98 = arith.constant 0 : index
    %171 = vector.load %arg6[%c1_96, %c0_97, %c0_98] : memref<6x32x32xf32, #tpu.memory_space<vmem>>, vector<1x32x32xf32>
    %172 = vector.shape_cast %171 : vector<1x32x32xf32> to vector<32x32xf32>
    %c2_99 = arith.constant 2 : index
    %c0_100 = arith.constant 0 : index
    %c0_101 = arith.constant 0 : index
    %173 = vector.load %arg6[%c2_99, %c0_100, %c0_101] : memref<6x32x32xf32, #tpu.memory_space<vmem>>, vector<1x32x32xf32>
    %174 = vector.shape_cast %173 : vector<1x32x32xf32> to vector<32x32xf32>
    %175 = arith.addf %170, %172 : vector<32x32xf32>
    %176 = arith.addf %175, %174 : vector<32x32xf32>
    %c0_102 = arith.constant 0 : index
    %c0_103 = arith.constant 0 : index
    %c0_104 = arith.constant 0 : index
    %177 = vector.load %arg6[%c0_102, %c0_103, %c0_104] : memref<6x32x32xf32, #tpu.memory_space<vmem>>, vector<1x32x32xf32>
    %178 = vector.shape_cast %177 : vector<1x32x32xf32> to vector<32x32xf32>
    %c1_105 = arith.constant 1 : index
    %c0_106 = arith.constant 0 : index
    %c0_107 = arith.constant 0 : index
    %179 = vector.load %arg6[%c1_105, %c0_106, %c0_107] : memref<6x32x32xf32, #tpu.memory_space<vmem>>, vector<1x32x32xf32>
    %180 = vector.shape_cast %179 : vector<1x32x32xf32> to vector<32x32xf32>
    %c2_108 = arith.constant 2 : index
    %c0_109 = arith.constant 0 : index
    %c0_110 = arith.constant 0 : index
    %181 = vector.load %arg6[%c2_108, %c0_109, %c0_110] : memref<6x32x32xf32, #tpu.memory_space<vmem>>, vector<1x32x32xf32>
    %182 = vector.shape_cast %181 : vector<1x32x32xf32> to vector<32x32xf32>
    %cst_111 = arith.constant -5.000000e-01 : f32
    %183 = vector.broadcast %cst_111 : f32 to vector<32x32xf32>
    %184 = arith.mulf %180, %183 : vector<32x32xf32>
    %185 = arith.addf %178, %184 : vector<32x32xf32>
    %cst_112 = arith.constant -5.000000e-01 : f32
    %186 = vector.broadcast %cst_112 : f32 to vector<32x32xf32>
    %187 = arith.mulf %182, %186 : vector<32x32xf32>
    %188 = arith.addf %185, %187 : vector<32x32xf32>
    %c0_113 = arith.constant 0 : index
    %c0_114 = arith.constant 0 : index
    %c0_115 = arith.constant 0 : index
    %189 = vector.load %arg6[%c0_113, %c0_114, %c0_115] : memref<6x32x32xf32, #tpu.memory_space<vmem>>, vector<1x32x32xf32>
    %190 = vector.shape_cast %189 : vector<1x32x32xf32> to vector<32x32xf32>
    %c1_116 = arith.constant 1 : index
    %c0_117 = arith.constant 0 : index
    %c0_118 = arith.constant 0 : index
    %191 = vector.load %arg6[%c1_116, %c0_117, %c0_118] : memref<6x32x32xf32, #tpu.memory_space<vmem>>, vector<1x32x32xf32>
    %192 = vector.shape_cast %191 : vector<1x32x32xf32> to vector<32x32xf32>
    %c2_119 = arith.constant 2 : index
    %c0_120 = arith.constant 0 : index
    %c0_121 = arith.constant 0 : index
    %193 = vector.load %arg6[%c2_119, %c0_120, %c0_121] : memref<6x32x32xf32, #tpu.memory_space<vmem>>, vector<1x32x32xf32>
    %194 = vector.shape_cast %193 : vector<1x32x32xf32> to vector<32x32xf32>
    %cst_122 = arith.constant -5.000000e-01 : f32
    %195 = vector.broadcast %cst_122 : f32 to vector<32x32xf32>
    %196 = arith.mulf %192, %195 : vector<32x32xf32>
    %197 = arith.addf %190, %196 : vector<32x32xf32>
    %cst_123 = arith.constant -5.000000e-01 : f32
    %198 = vector.broadcast %cst_123 : f32 to vector<32x32xf32>
    %199 = arith.mulf %194, %198 : vector<32x32xf32>
    %200 = arith.addf %197, %199 : vector<32x32xf32>
    %201 = arith.addf %152, %160 : vector<16x32xf32>
    %202 = arith.addf %201, %168 : vector<16x32xf32>
    %cst_124 = arith.constant -5.000000e-01 : f32
    %203 = vector.broadcast %cst_124 : f32 to vector<16x32xf32>
    %204 = arith.mulf %160, %203 : vector<16x32xf32>
    %205 = arith.addf %152, %204 : vector<16x32xf32>
    %cst_125 = arith.constant -5.000000e-01 : f32
    %206 = vector.broadcast %cst_125 : f32 to vector<16x32xf32>
    %207 = arith.mulf %168, %206 : vector<16x32xf32>
    %208 = arith.addf %205, %207 : vector<16x32xf32>
    %cst_126 = arith.constant -5.000000e-01 : f32
    %209 = vector.broadcast %cst_126 : f32 to vector<16x32xf32>
    %210 = arith.mulf %160, %209 : vector<16x32xf32>
    %211 = arith.addf %152, %210 : vector<16x32xf32>
    %cst_127 = arith.constant -5.000000e-01 : f32
    %212 = vector.broadcast %cst_127 : f32 to vector<16x32xf32>
    %213 = arith.mulf %168, %212 : vector<16x32xf32>
    %214 = arith.addf %211, %213 : vector<16x32xf32>
    %cst_128 = arith.constant dense<0.000000e+00> : vector<16x32xf32>
    %215 = tpu.matmul %202, %176, %cst_128 {dimension_numbers = #tpu.dot_dimension_numbers<[1], [0], [0], [1], [0, 0, 1, 1], [], []>} : vector<16x32xf32>, vector<32x32xf32>, vector<16x32xf32> -> vector<16x32xf32>
    %cst_129 = arith.constant dense<0.000000e+00> : vector<16x32xf32>
    %216 = tpu.matmul %208, %188, %cst_129 {dimension_numbers = #tpu.dot_dimension_numbers<[1], [0], [0], [1], [0, 0, 1, 1], [], []>} : vector<16x32xf32>, vector<32x32xf32>, vector<16x32xf32> -> vector<16x32xf32>
    %cst_130 = arith.constant dense<0.000000e+00> : vector<16x32xf32>
    %217 = tpu.matmul %214, %200, %cst_130 {dimension_numbers = #tpu.dot_dimension_numbers<[1], [0], [0], [1], [0, 0, 1, 1], [], []>} : vector<16x32xf32>, vector<32x32xf32>, vector<16x32xf32> -> vector<16x32xf32>
    %cst_131 = arith.constant 0.333333343 : f32
    %218 = vector.broadcast %cst_131 : f32 to vector<16x32xf32>
    %219 = arith.mulf %215, %218 : vector<16x32xf32>
    %cst_132 = arith.constant 0.333333343 : f32
    %220 = vector.broadcast %cst_132 : f32 to vector<16x32xf32>
    %221 = arith.mulf %216, %220 : vector<16x32xf32>
    %222 = arith.addf %219, %221 : vector<16x32xf32>
    %cst_133 = arith.constant 0.333333343 : f32
    %223 = vector.broadcast %cst_133 : f32 to vector<16x32xf32>
    %224 = arith.mulf %217, %223 : vector<16x32xf32>
    %225 = arith.addf %222, %224 : vector<16x32xf32>
    %cst_134 = arith.constant 0.333333343 : f32
    %226 = vector.broadcast %cst_134 : f32 to vector<16x32xf32>
    %227 = arith.mulf %215, %226 : vector<16x32xf32>
    %cst_135 = arith.constant -0.166666672 : f32
    %228 = vector.broadcast %cst_135 : f32 to vector<16x32xf32>
    %229 = arith.mulf %216, %228 : vector<16x32xf32>
    %230 = arith.addf %227, %229 : vector<16x32xf32>
    %cst_136 = arith.constant -0.166666672 : f32
    %231 = vector.broadcast %cst_136 : f32 to vector<16x32xf32>
    %232 = arith.mulf %217, %231 : vector<16x32xf32>
    %233 = arith.addf %230, %232 : vector<16x32xf32>
    %cst_137 = arith.constant 0.333333343 : f32
    %234 = vector.broadcast %cst_137 : f32 to vector<16x32xf32>
    %235 = arith.mulf %215, %234 : vector<16x32xf32>
    %cst_138 = arith.constant -0.166666672 : f32
    %236 = vector.broadcast %cst_138 : f32 to vector<16x32xf32>
    %237 = arith.mulf %216, %236 : vector<16x32xf32>
    %238 = arith.addf %235, %237 : vector<16x32xf32>
    %cst_139 = arith.constant -0.166666672 : f32
    %239 = vector.broadcast %cst_139 : f32 to vector<16x32xf32>
    %240 = arith.mulf %217, %239 : vector<16x32xf32>
    %241 = arith.addf %238, %240 : vector<16x32xf32>
    %cst_140 = arith.constant 0.000000e+00 : f32
    %242 = vector.broadcast %cst_140 : f32 to vector<16x32xf32>
    %243 = arith.maximumf %225, %242 : vector<16x32xf32>
    %cst_141 = arith.constant 0.000000e+00 : f32
    %244 = vector.broadcast %cst_141 : f32 to vector<16x32xf32>
    %245 = arith.maximumf %233, %244 : vector<16x32xf32>
    %cst_142 = arith.constant 0.000000e+00 : f32
    %246 = vector.broadcast %cst_142 : f32 to vector<16x32xf32>
    %247 = arith.maximumf %241, %246 : vector<16x32xf32>
    %248 = arith.addf %243, %245 : vector<16x32xf32>
    %249 = arith.addf %248, %247 : vector<16x32xf32>
    %cst_143 = arith.constant -5.000000e-01 : f32
    %250 = vector.broadcast %cst_143 : f32 to vector<16x32xf32>
    %251 = arith.mulf %245, %250 : vector<16x32xf32>
    %252 = arith.addf %243, %251 : vector<16x32xf32>
    %cst_144 = arith.constant -5.000000e-01 : f32
    %253 = vector.broadcast %cst_144 : f32 to vector<16x32xf32>
    %254 = arith.mulf %247, %253 : vector<16x32xf32>
    %255 = arith.addf %252, %254 : vector<16x32xf32>
    %cst_145 = arith.constant -5.000000e-01 : f32
    %256 = vector.broadcast %cst_145 : f32 to vector<16x32xf32>
    %257 = arith.mulf %245, %256 : vector<16x32xf32>
    %258 = arith.addf %243, %257 : vector<16x32xf32>
    %cst_146 = arith.constant -5.000000e-01 : f32
    %259 = vector.broadcast %cst_146 : f32 to vector<16x32xf32>
    %260 = arith.mulf %247, %259 : vector<16x32xf32>
    %261 = arith.addf %258, %260 : vector<16x32xf32>
    %cst_147 = arith.constant dense<0.000000e+00> : vector<16x32xf32>
    %262 = tpu.matmul %115, %249, %cst_147 {dimension_numbers = #tpu.dot_dimension_numbers<[1], [0], [0], [1], [0, 0, 1, 1], [], []>} : vector<16x16xf32>, vector<16x32xf32>, vector<16x32xf32> -> vector<16x32xf32>
    %cst_148 = arith.constant dense<0.000000e+00> : vector<16x32xf32>
    %263 = tpu.matmul %121, %255, %cst_148 {dimension_numbers = #tpu.dot_dimension_numbers<[1], [0], [0], [1], [0, 0, 1, 1], [], []>} : vector<16x16xf32>, vector<16x32xf32>, vector<16x32xf32> -> vector<16x32xf32>
    %cst_149 = arith.constant dense<0.000000e+00> : vector<16x32xf32>
    %264 = tpu.matmul %127, %261, %cst_149 {dimension_numbers = #tpu.dot_dimension_numbers<[1], [0], [0], [1], [0, 0, 1, 1], [], []>} : vector<16x16xf32>, vector<16x32xf32>, vector<16x32xf32> -> vector<16x32xf32>
    %cst_150 = arith.constant 0.333333343 : f32
    %265 = vector.broadcast %cst_150 : f32 to vector<16x32xf32>
    %266 = arith.mulf %262, %265 : vector<16x32xf32>
    %cst_151 = arith.constant 0.333333343 : f32
    %267 = vector.broadcast %cst_151 : f32 to vector<16x32xf32>
    %268 = arith.mulf %263, %267 : vector<16x32xf32>
    %269 = arith.addf %266, %268 : vector<16x32xf32>
    %cst_152 = arith.constant 0.333333343 : f32
    %270 = vector.broadcast %cst_152 : f32 to vector<16x32xf32>
    %271 = arith.mulf %264, %270 : vector<16x32xf32>
    %272 = arith.addf %269, %271 : vector<16x32xf32>
    %cst_153 = arith.constant 0.333333343 : f32
    %273 = vector.broadcast %cst_153 : f32 to vector<16x32xf32>
    %274 = arith.mulf %262, %273 : vector<16x32xf32>
    %cst_154 = arith.constant -0.166666672 : f32
    %275 = vector.broadcast %cst_154 : f32 to vector<16x32xf32>
    %276 = arith.mulf %263, %275 : vector<16x32xf32>
    %277 = arith.addf %274, %276 : vector<16x32xf32>
    %cst_155 = arith.constant -0.166666672 : f32
    %278 = vector.broadcast %cst_155 : f32 to vector<16x32xf32>
    %279 = arith.mulf %264, %278 : vector<16x32xf32>
    %280 = arith.addf %277, %279 : vector<16x32xf32>
    %cst_156 = arith.constant 0.333333343 : f32
    %281 = vector.broadcast %cst_156 : f32 to vector<16x32xf32>
    %282 = arith.mulf %262, %281 : vector<16x32xf32>
    %cst_157 = arith.constant -0.166666672 : f32
    %283 = vector.broadcast %cst_157 : f32 to vector<16x32xf32>
    %284 = arith.mulf %263, %283 : vector<16x32xf32>
    %285 = arith.addf %282, %284 : vector<16x32xf32>
    %cst_158 = arith.constant -0.166666672 : f32
    %286 = vector.broadcast %cst_158 : f32 to vector<16x32xf32>
    %287 = arith.mulf %264, %286 : vector<16x32xf32>
    %288 = arith.addf %285, %287 : vector<16x32xf32>
    %c3 = arith.constant 3 : index
    %c0_159 = arith.constant 0 : index
    %c0_160 = arith.constant 0 : index
    %289 = vector.load %arg6[%c3, %c0_159, %c0_160] : memref<6x32x32xf32, #tpu.memory_space<vmem>>, vector<1x32x32xf32>
    %290 = vector.shape_cast %289 : vector<1x32x32xf32> to vector<32x32xf32>
    %c4 = arith.constant 4 : index
    %c0_161 = arith.constant 0 : index
    %c0_162 = arith.constant 0 : index
    %291 = vector.load %arg6[%c4, %c0_161, %c0_162] : memref<6x32x32xf32, #tpu.memory_space<vmem>>, vector<1x32x32xf32>
    %292 = vector.shape_cast %291 : vector<1x32x32xf32> to vector<32x32xf32>
    %c5 = arith.constant 5 : index
    %c0_163 = arith.constant 0 : index
    %c0_164 = arith.constant 0 : index
    %293 = vector.load %arg6[%c5, %c0_163, %c0_164] : memref<6x32x32xf32, #tpu.memory_space<vmem>>, vector<1x32x32xf32>
    %294 = vector.shape_cast %293 : vector<1x32x32xf32> to vector<32x32xf32>
    %295 = arith.addf %290, %292 : vector<32x32xf32>
    %296 = arith.addf %295, %294 : vector<32x32xf32>
    %c3_165 = arith.constant 3 : index
    %c0_166 = arith.constant 0 : index
    %c0_167 = arith.constant 0 : index
    %297 = vector.load %arg6[%c3_165, %c0_166, %c0_167] : memref<6x32x32xf32, #tpu.memory_space<vmem>>, vector<1x32x32xf32>
    %298 = vector.shape_cast %297 : vector<1x32x32xf32> to vector<32x32xf32>
    %c4_168 = arith.constant 4 : index
    %c0_169 = arith.constant 0 : index
    %c0_170 = arith.constant 0 : index
    %299 = vector.load %arg6[%c4_168, %c0_169, %c0_170] : memref<6x32x32xf32, #tpu.memory_space<vmem>>, vector<1x32x32xf32>
    %300 = vector.shape_cast %299 : vector<1x32x32xf32> to vector<32x32xf32>
    %c5_171 = arith.constant 5 : index
    %c0_172 = arith.constant 0 : index
    %c0_173 = arith.constant 0 : index
    %301 = vector.load %arg6[%c5_171, %c0_172, %c0_173] : memref<6x32x32xf32, #tpu.memory_space<vmem>>, vector<1x32x32xf32>
    %302 = vector.shape_cast %301 : vector<1x32x32xf32> to vector<32x32xf32>
    %cst_174 = arith.constant -5.000000e-01 : f32
    %303 = vector.broadcast %cst_174 : f32 to vector<32x32xf32>
    %304 = arith.mulf %300, %303 : vector<32x32xf32>
    %305 = arith.addf %298, %304 : vector<32x32xf32>
    %cst_175 = arith.constant -5.000000e-01 : f32
    %306 = vector.broadcast %cst_175 : f32 to vector<32x32xf32>
    %307 = arith.mulf %302, %306 : vector<32x32xf32>
    %308 = arith.addf %305, %307 : vector<32x32xf32>
    %c3_176 = arith.constant 3 : index
    %c0_177 = arith.constant 0 : index
    %c0_178 = arith.constant 0 : index
    %309 = vector.load %arg6[%c3_176, %c0_177, %c0_178] : memref<6x32x32xf32, #tpu.memory_space<vmem>>, vector<1x32x32xf32>
    %310 = vector.shape_cast %309 : vector<1x32x32xf32> to vector<32x32xf32>
    %c4_179 = arith.constant 4 : index
    %c0_180 = arith.constant 0 : index
    %c0_181 = arith.constant 0 : index
    %311 = vector.load %arg6[%c4_179, %c0_180, %c0_181] : memref<6x32x32xf32, #tpu.memory_space<vmem>>, vector<1x32x32xf32>
    %312 = vector.shape_cast %311 : vector<1x32x32xf32> to vector<32x32xf32>
    %c5_182 = arith.constant 5 : index
    %c0_183 = arith.constant 0 : index
    %c0_184 = arith.constant 0 : index
    %313 = vector.load %arg6[%c5_182, %c0_183, %c0_184] : memref<6x32x32xf32, #tpu.memory_space<vmem>>, vector<1x32x32xf32>
    %314 = vector.shape_cast %313 : vector<1x32x32xf32> to vector<32x32xf32>
    %cst_185 = arith.constant -5.000000e-01 : f32
    %315 = vector.broadcast %cst_185 : f32 to vector<32x32xf32>
    %316 = arith.mulf %312, %315 : vector<32x32xf32>
    %317 = arith.addf %310, %316 : vector<32x32xf32>
    %cst_186 = arith.constant -5.000000e-01 : f32
    %318 = vector.broadcast %cst_186 : f32 to vector<32x32xf32>
    %319 = arith.mulf %314, %318 : vector<32x32xf32>
    %320 = arith.addf %317, %319 : vector<32x32xf32>
    %321 = arith.addf %272, %280 : vector<16x32xf32>
    %322 = arith.addf %321, %288 : vector<16x32xf32>
    %cst_187 = arith.constant -5.000000e-01 : f32
    %323 = vector.broadcast %cst_187 : f32 to vector<16x32xf32>
    %324 = arith.mulf %280, %323 : vector<16x32xf32>
    %325 = arith.addf %272, %324 : vector<16x32xf32>
    %cst_188 = arith.constant -5.000000e-01 : f32
    %326 = vector.broadcast %cst_188 : f32 to vector<16x32xf32>
    %327 = arith.mulf %288, %326 : vector<16x32xf32>
    %328 = arith.addf %325, %327 : vector<16x32xf32>
    %cst_189 = arith.constant -5.000000e-01 : f32
    %329 = vector.broadcast %cst_189 : f32 to vector<16x32xf32>
    %330 = arith.mulf %280, %329 : vector<16x32xf32>
    %331 = arith.addf %272, %330 : vector<16x32xf32>
    %cst_190 = arith.constant -5.000000e-01 : f32
    %332 = vector.broadcast %cst_190 : f32 to vector<16x32xf32>
    %333 = arith.mulf %288, %332 : vector<16x32xf32>
    %334 = arith.addf %331, %333 : vector<16x32xf32>
    %cst_191 = arith.constant dense<0.000000e+00> : vector<16x32xf32>
    %335 = tpu.matmul %322, %296, %cst_191 {dimension_numbers = #tpu.dot_dimension_numbers<[1], [0], [0], [1], [0, 0, 1, 1], [], []>} : vector<16x32xf32>, vector<32x32xf32>, vector<16x32xf32> -> vector<16x32xf32>
    %cst_192 = arith.constant dense<0.000000e+00> : vector<16x32xf32>
    %336 = tpu.matmul %328, %308, %cst_192 {dimension_numbers = #tpu.dot_dimension_numbers<[1], [0], [0], [1], [0, 0, 1, 1], [], []>} : vector<16x32xf32>, vector<32x32xf32>, vector<16x32xf32> -> vector<16x32xf32>
    %cst_193 = arith.constant dense<0.000000e+00> : vector<16x32xf32>
    %337 = tpu.matmul %334, %320, %cst_193 {dimension_numbers = #tpu.dot_dimension_numbers<[1], [0], [0], [1], [0, 0, 1, 1], [], []>} : vector<16x32xf32>, vector<32x32xf32>, vector<16x32xf32> -> vector<16x32xf32>
    %cst_194 = arith.constant 0.333333343 : f32
    %338 = vector.broadcast %cst_194 : f32 to vector<16x32xf32>
    %339 = arith.mulf %335, %338 : vector<16x32xf32>
    %cst_195 = arith.constant 0.333333343 : f32
    %340 = vector.broadcast %cst_195 : f32 to vector<16x32xf32>
    %341 = arith.mulf %336, %340 : vector<16x32xf32>
    %342 = arith.addf %339, %341 : vector<16x32xf32>
    %cst_196 = arith.constant 0.333333343 : f32
    %343 = vector.broadcast %cst_196 : f32 to vector<16x32xf32>
    %344 = arith.mulf %337, %343 : vector<16x32xf32>
    %345 = arith.addf %342, %344 : vector<16x32xf32>
    %cst_197 = arith.constant 0.333333343 : f32
    %346 = vector.broadcast %cst_197 : f32 to vector<16x32xf32>
    %347 = arith.mulf %335, %346 : vector<16x32xf32>
    %cst_198 = arith.constant -0.166666672 : f32
    %348 = vector.broadcast %cst_198 : f32 to vector<16x32xf32>
    %349 = arith.mulf %336, %348 : vector<16x32xf32>
    %350 = arith.addf %347, %349 : vector<16x32xf32>
    %cst_199 = arith.constant -0.166666672 : f32
    %351 = vector.broadcast %cst_199 : f32 to vector<16x32xf32>
    %352 = arith.mulf %337, %351 : vector<16x32xf32>
    %353 = arith.addf %350, %352 : vector<16x32xf32>
    %cst_200 = arith.constant 0.333333343 : f32
    %354 = vector.broadcast %cst_200 : f32 to vector<16x32xf32>
    %355 = arith.mulf %335, %354 : vector<16x32xf32>
    %cst_201 = arith.constant -0.166666672 : f32
    %356 = vector.broadcast %cst_201 : f32 to vector<16x32xf32>
    %357 = arith.mulf %336, %356 : vector<16x32xf32>
    %358 = arith.addf %355, %357 : vector<16x32xf32>
    %cst_202 = arith.constant -0.166666672 : f32
    %359 = vector.broadcast %cst_202 : f32 to vector<16x32xf32>
    %360 = arith.mulf %337, %359 : vector<16x32xf32>
    %361 = arith.addf %358, %360 : vector<16x32xf32>
    %cst_203 = arith.constant 0.000000e+00 : f32
    %362 = vector.broadcast %cst_203 : f32 to vector<16x32xf32>
    %363 = arith.maximumf %345, %362 : vector<16x32xf32>
    %cst_204 = arith.constant 0.000000e+00 : f32
    %364 = vector.broadcast %cst_204 : f32 to vector<16x32xf32>
    %365 = arith.maximumf %353, %364 : vector<16x32xf32>
    %cst_205 = arith.constant 0.000000e+00 : f32
    %366 = vector.broadcast %cst_205 : f32 to vector<16x32xf32>
    %367 = arith.maximumf %361, %366 : vector<16x32xf32>
    %c0_206 = arith.constant 0 : index
    %c0_207 = arith.constant 0 : index
    %368 = vector.load %arg8[%c0_206, %c0_207] : memref<1x32xf32, #tpu.memory_space<vmem>>, vector<1x32xf32>
    %c0_208 = arith.constant 0 : index
    %c0_209 = arith.constant 0 : index
    %c0_210 = arith.constant 0 : index
    %369 = vector.load %arg7[%c0_208, %c0_209, %c0_210] : memref<3x32x32xf32, #tpu.memory_space<vmem>>, vector<1x32x32xf32>
    %370 = vector.shape_cast %369 : vector<1x32x32xf32> to vector<32x32xf32>
    %cst_211 = arith.constant dense<0.000000e+00> : vector<16x32xf32>
    %371 = tpu.matmul %363, %370, %cst_211 {dimension_numbers = #tpu.dot_dimension_numbers<[1], [0], [0], [1], [0, 0, 1, 1], [], []>} : vector<16x32xf32>, vector<32x32xf32>, vector<16x32xf32> -> vector<16x32xf32>
    %372 = vector.broadcast %368 : vector<1x32xf32> to vector<16x32xf32>
    %373 = arith.addf %372, %371 : vector<16x32xf32>
    %c1_212 = arith.constant 1 : index
    %c0_213 = arith.constant 0 : index
    %c0_214 = arith.constant 0 : index
    %374 = vector.load %arg7[%c1_212, %c0_213, %c0_214] : memref<3x32x32xf32, #tpu.memory_space<vmem>>, vector<1x32x32xf32>
    %375 = vector.shape_cast %374 : vector<1x32x32xf32> to vector<32x32xf32>
    %cst_215 = arith.constant dense<0.000000e+00> : vector<16x32xf32>
    %376 = tpu.matmul %365, %375, %cst_215 {dimension_numbers = #tpu.dot_dimension_numbers<[1], [0], [0], [1], [0, 0, 1, 1], [], []>} : vector<16x32xf32>, vector<32x32xf32>, vector<16x32xf32> -> vector<16x32xf32>
    %377 = arith.addf %373, %376 : vector<16x32xf32>
    %c2_216 = arith.constant 2 : index
    %c0_217 = arith.constant 0 : index
    %c0_218 = arith.constant 0 : index
    %378 = vector.load %arg7[%c2_216, %c0_217, %c0_218] : memref<3x32x32xf32, #tpu.memory_space<vmem>>, vector<1x32x32xf32>
    %379 = vector.shape_cast %378 : vector<1x32x32xf32> to vector<32x32xf32>
    %cst_219 = arith.constant dense<0.000000e+00> : vector<16x32xf32>
    %380 = tpu.matmul %367, %379, %cst_219 {dimension_numbers = #tpu.dot_dimension_numbers<[1], [0], [0], [1], [0, 0, 1, 1], [], []>} : vector<16x32xf32>, vector<32x32xf32>, vector<16x32xf32> -> vector<16x32xf32>
    %381 = arith.addf %377, %380 : vector<16x32xf32>
    %cst_220 = arith.constant 0.000000e+00 : f32
    %382 = vector.broadcast %cst_220 : f32 to vector<16x32xf32>
    %383 = arith.maximumf %381, %382 : vector<16x32xf32>
    %c0_221 = arith.constant 0 : index
    %c0_222 = arith.constant 0 : index
    %384 = vector.load %arg9[%c0_221, %c0_222] : memref<32x4xf32, #tpu.memory_space<vmem>>, vector<32x4xf32>
    %cst_223 = arith.constant dense<0.000000e+00> : vector<16x4xf32>
    %385 = tpu.matmul %383, %384, %cst_223 {dimension_numbers = #tpu.dot_dimension_numbers<[1], [0], [0], [1], [0, 0, 1, 1], [], []>} : vector<16x32xf32>, vector<32x4xf32>, vector<16x4xf32> -> vector<16x4xf32>
    %c0_224 = arith.constant 0 : index
    %c0_225 = arith.constant 0 : index
    %386 = vector.load %arg10[%c0_224, %c0_225] : memref<1x4xf32, #tpu.memory_space<vmem>>, vector<1x4xf32>
    %387 = vector.broadcast %386 : vector<1x4xf32> to vector<16x4xf32>
    %388 = arith.addf %385, %387 : vector<16x4xf32>
    %c0_226 = arith.constant 0 : index
    %c0_227 = arith.constant 0 : index
    %389 = vector.load %arg11[%c0_226, %c0_227] : memref<16x4xf32, #tpu.memory_space<vmem>>, vector<16x4xf32>
    tpu.vector_store %arg11[%c0_226, %c0_227], %388 {strides = array<i32>} : memref<16x4xf32, #tpu.memory_space<vmem>>, vector<16x4xf32>,
    return
  }
}

</mosaic_0001>

<llo_original>
// kernel: mrgcn_forward.1
$region0: #{mrgcn_forward.1}
  #allocation0 [shape = 'u32[]', space=smem, size = 0x4, offset = 0x4, fixed_abs, tag = 'smem constant byte address 0x4 - core index']
  #allocation1 [shape = 'u32[144,128]{1,0:T(1,128)}', space=vmem, size = 0x12000, scoped, tag = 'internal scratch']
  %s0 = inlined_call_operand.vmem [shape: f32[3,16,16], index: 0, kind: input, shape index: {}]
  %s1 = inlined_call_operand.vmem [shape: f32[16,8], index: 1, kind: input, shape index: {}]
  %s2 = inlined_call_operand.vmem [shape: f32[3,8,32], index: 2, kind: input, shape index: {}]
  %s3 = inlined_call_operand.vmem [shape: f32[3,1,32], index: 3, kind: input, shape index: {}]
  %s4 = inlined_call_operand.vmem [shape: f32[3,32,32], index: 4, kind: input, shape index: {}]
  %s5 = inlined_call_operand.vmem [shape: f32[3,1,32], index: 5, kind: input, shape index: {}]
  %s6 = inlined_call_operand.vmem [shape: f32[6,32,32], index: 6, kind: input, shape index: {}]
  %s7 = inlined_call_operand.vmem [shape: f32[3,32,32], index: 7, kind: input, shape index: {}]
  %s8 = inlined_call_operand.vmem [shape: f32[1,32], index: 8, kind: input, shape index: {}]
  %s9 = inlined_call_operand.vmem [shape: f32[32,4], index: 9, kind: input, shape index: {}]
  %s10 = inlined_call_operand.vmem [shape: f32[1,4], index: 10, kind: input, shape index: {}]
  %s11 = inlined_call_operand.vmem [shape: f32[16,4], index: 11, kind: output, shape index: {}]
  %s12 = sld [smem:[#allocation0]]
  $region54: #{mrgcn_forward.1} parent=0
    _
  %s14 = ssub.s32 1, %s12
  %s15 = scalar_select 0, %s14, %s12
  // Predicated region
  $region2: #{mrgcn_forward.1} parent=0 // pred_check
    _
  $region3: #{mrgcn_forward.1} parent=0 // pred_check_branch
    %17 = sbr.rel (0) target = $region5
  $region4: #{mrgcn_forward.1} parent=0 // pred_region
    _
  $region5: #{mrgcn_forward.1} parent=0 // pred_fallthru
    _
  // Predicated region
  $region6: #{mrgcn_forward.1} parent=0 // pred_check
    _
  $region7: #{mrgcn_forward.1} parent=0 // pred_check_branch
    %19 = sbr.rel (0) target = $region9
  $region8: #{mrgcn_forward.1} parent=0 // pred_region
    _
  $region9: #{mrgcn_forward.1} parent=0 // pred_fallthru
    _
  // Predicated region
  $region10: #{mrgcn_forward.1} parent=0 // pred_check
    _
  $region11: #{mrgcn_forward.1} parent=0 // pred_check_branch
    %21 = sbr.rel (0) target = $region13
  $region12: #{mrgcn_forward.1} parent=0 // pred_region
    _
  $region13: #{mrgcn_forward.1} parent=0 // pred_fallthru
    _
  // Predicated region
  $region14: #{mrgcn_forward.1} parent=0 // pred_check
    _
  $region15: #{mrgcn_forward.1} parent=0 // pred_check_branch
    %23 = sbr.rel (0) target = $region17
  $region16: #{mrgcn_forward.1} parent=0 // pred_region
    _
  $region17: #{mrgcn_forward.1} parent=0 // pred_fallthru
    _
  // Predicated region
  $region18: #{mrgcn_forward.1} parent=0 // pred_check
    _
  $region19: #{mrgcn_forward.1} parent=0 // pred_check_branch
    %25 = sbr.rel (0) target = $region21
  $region20: #{mrgcn_forward.1} parent=0 // pred_region
    _
  $region21: #{mrgcn_forward.1} parent=0 // pred_fallthru
    _
  // Predicated region
  $region22: #{mrgcn_forward.1} parent=0 // pred_check
    _
  $region23: #{mrgcn_forward.1} parent=0 // pred_check_branch
    %27 = sbr.rel (0) target = $region25
  $region24: #{mrgcn_forward.1} parent=0 // pred_region
    _
  $region25: #{mrgcn_forward.1} parent=0 // pred_fallthru
    _
  // Predicated region
  $region26: #{mrgcn_forward.1} parent=0 // pred_check
    _
  $region27: #{mrgcn_forward.1} parent=0 // pred_check_branch
    %29 = sbr.rel (0) target = $region29
  $region28: #{mrgcn_forward.1} parent=0 // pred_region
    _
  $region29: #{mrgcn_forward.1} parent=0 // pred_fallthru
    _
  // Predicated region
  $region30: #{mrgcn_forward.1} parent=0 // pred_check
    _
  $region31: #{mrgcn_forward.1} parent=0 // pred_check_branch
    %31 = sbr.rel (0) target = $region33
  $region32: #{mrgcn_forward.1} parent=0 // pred_region
    _
  $region33: #{mrgcn_forward.1} parent=0 // pred_fallthru
    _
  // Predicated region
  $region34: #{mrgcn_forward.1} parent=0 // pred_check
    _
  $region35: #{mrgcn_forward.1} parent=0 // pred_check_branch
    %33 = sbr.rel (0) target = $region37
  $region36: #{mrgcn_forward.1} parent=0 // pred_region
    _
  $region37: #{mrgcn_forward.1} parent=0 // pred_fallthru
    _
  // Predicated region
  $region38: #{mrgcn_forward.1} parent=0 // pred_check
    _
  $region39: #{mrgcn_forward.1} parent=0 // pred_check_branch
    %35 = sbr.rel (0) target = $region41
  $region40: #{mrgcn_forward.1} parent=0 // pred_region
    _
  $region41: #{mrgcn_forward.1} parent=0 // pred_fallthru
    _
  // Predicated region
  $region42: #{mrgcn_forward.1} parent=0 // pred_check
    _
  $region43: #{mrgcn_forward.1} parent=0 // pred_check_branch
    %37 = sbr.rel (0) target = $region45
  $region44: #{mrgcn_forward.1} parent=0 // pred_region
    _
  $region45: #{mrgcn_forward.1} parent=0 // pred_fallthru
    _
  %v38 = vlaneseq
  %v39 = vshrl.u32 %v38, 7
  %v40 = vadd.s32 %v39, 8
  %v41 = vlaneseq
  %v42 = vand.u32 %v41, 127
  %vm43 = vcmp.eq.s32.totalorder %v39, %v42
  %vm44 = vcmp.eq.s32.totalorder %v40, %v42
  %v45 = vsel %vm43, 1, 0
  %v46 = vsel %vm44, 1, 0
  %v47 = vcvt.s32.f32 %v45
  %v48 = vcvt.s32.f32 %v46
  %v49 = vld [vmem:[%s1] sm:$0xff]
  %v50 = vld [vmem:[%s1 + $0x8] sm:$0xff]
  %v51 = vld [vmem:[%s0] sm:$0xff]
  %v52 = vld [vmem:[%s0 + $0x8] sm:$0xff]
  %v53 = vsub.f32 1.0, %v47
  %v54 = vsub.f32 1.0, %v48
  %v55 = vmul.f32 %v51, %v53
  %v56 = vmul.f32 %v52, %v54
  %v57 = vadd.f32 %v55, %v47
  %v58 = vadd.f32 %v56, %v48
  %vm59 = vcmask 130048
  %v60 = vsel %vm59, %v57, 0.0
  %61 = vadd.xlane.f32.xlu0 %v60
  %v62 = vpop.xlane.xlu0 %61
  %v63 = vsel %vm59, %v58, 0.0
  %64 = vadd.xlane.f32.xlu0 %v63
  %v65 = vpop.xlane.xlu0 %64
  %v66 = vmax.f32 %v62, 1.0
  %v67 = vmax.f32 %v65, 1.0
  %v68 = vrsqrt.pop %v66
  %v69 = vrsqrt.pop %v67
  %v70 = vmul.f32 %v68, %v47
  %v71 = vmul.f32 %v69, %v48
  %v73 = vsel %vm59, %v57, 0
  %v76 = vsel %vm59, %v58, 0
  %78 = vmatprep.subr.mxu0 0.0
  %79 = vmatpush1.msra.mxu0 %v70
  %80 = vmatprep.subr.mxu0 0.0
  %81 = vmatpush1.msra.mxu0 %v71
  %82 = vmatprep.subr.mxu0 0.0
  %83 = vmatpush1.msra.mxu0 0.0
  %84 = vmatprep.subr.mxu0 0.0
  %85 = vmatpush1.msra.mxu0 0.0
  %86 = vmatprep.subr.mxu0 0.0
  %87 = vmatpush1.msra.mxu0 0.0
  %88 = vmatprep.subr.mxu0 0.0
  %89 = vmatpush1.msra.mxu0 0.0
  %90 = vmatprep.subr.mxu0 0.0
  %91 = vmatpush1.msra.mxu0 0.0
  %92 = vmatprep.subr.mxu0 0.0
  %93 = vmatpush1.msra.mxu0 0.0
  %94 = vmatprep.subr.mxu0 0.0
  %95 = vmatpush1.msra.mxu0 0.0
  %96 = vmatprep.subr.mxu0 0.0
  %97 = vmatpush1.msra.mxu0 0.0
  %98 = vmatprep.subr.mxu0 0.0
  %99 = vmatpush1.msra.mxu0 0.0
  %100 = vmatprep.subr.mxu0 0.0
  %101 = vmatpush1.msra.mxu0 0.0
  %102 = vmatprep.subr.mxu0 0.0
  %103 = vmatpush1.msra.mxu0 0.0
  %104 = vmatprep.subr.mxu0 0.0
  %105 = vmatpush1.msra.mxu0 0.0
  %106 = vmatprep.subr.mxu0 0.0
  %107 = vmatpush1.msra.mxu0 0.0
  %108 = vmatprep.subr.mxu0 0.0
  %109 = vmatpush1.msra.mxu0 0.0
  %110 = vmatprep.subr.mxu0 0.0
  %111 = vmatpush1.msra.mxu0 0.0
  %112 = vmatprep.subr.mxu0 0.0
  %113 = vmatpush1.msra.mxu0 0.0
  %114 = vmatprep.subr.mxu0 0.0
  %115 = vmatpush1.msra.mxu0 0.0
  %116 = vmatprep.subr.mxu0 0.0
  %117 = vmatpush1.msra.mxu0 0.0
  %118 = vmatprep.subr.mxu0 0.0
  %119 = vmatpush1.msra.mxu0 0.0
  %120 = vmatprep.subr.mxu0 0.0
  %121 = vmatpush1.msra.mxu0 0.0
  %122 = vmatprep.subr.mxu0 0.0
  %123 = vmatpush1.msra.mxu0 0.0
  %124 = vmatprep.subr.mxu0 0.0
  %125 = vmatpush1.msra.mxu0 0.0
  %126 = vmatprep.subr.mxu0 0.0
  %127 = vmatpush1.msra.mxu0 0.0
  %128 = vmatprep.subr.mxu0 0.0
  %129 = vmatpush1.msra.mxu0 0.0
  %130 = vmatprep.subr.mxu0 0.0
  %131 = vmatpush1.msra.mxu0 0.0
  %132 = vmatprep.subr.mxu0 0.0
  %133 = vmatpush1.msra.mxu0 0.0
  %134 = vmatprep.subr.mxu0 0.0
  %135 = vmatpush1.msra.mxu0 0.0
  %136 = vmatprep.subr.mxu0 0.0
  %137 = vmatpush1.msra.mxu0 0.0
  %138 = vmatprep.subr.mxu0 0.0
  %139 = vmatpush1.msra.mxu0 0.0
  %140 = vmatprep.subr.mxu0 0.0
  %141 = vmatpush1.msra.mxu0 0.0
  %142 = vmatprep.mubr.f32.mxu0 0.0
  %143 = vmatmul.mubr.f32.gmra.mrb[0].mxu0 %v73
  %v144 = vpop.f32.mrb[0].mxu0
  %v145 = vadd.f32 0.0, %v144
  %v146 = vpop.f32.mrb[0].mxu0
  %147 = vmatprep.mubr.f32.mxu0 0.0
  %148 = vmatmul.mubr.f32.gmra.mrb[0].mxu0 %v76
  %v149 = vpop.f32.mrb[0].mxu0
  %v150 = vadd.f32 0.0, %v149
  %v151 = vpop.f32.mrb[0].mxu0
  %152 = vdwg.mxu0
  %v153 = vmul.f32 %v68, %v145
  %v154 = vmul.f32 %v69, %v150
  %v155 = vld [vmem:[%s2] sm:$0xff]
  %vm156 = vcmask 64512
  %v158 = vsel %vm156, %v49, 0
  %v161 = vsel %vm156, %v50, 0
  %163 = vmatprep.subr.mxu0 0.0
  %164 = vmatpush1.msra.mxu0 %v155
  %165 = vmatprep.subr.mxu0 0.0
  %166 = vmatpush1.msra.mxu0 0.0
  %167 = vmatprep.subr.mxu0 0.0
  %168 = vmatpush1.msra.mxu0 0.0
  %169 = vmatprep.subr.mxu0 0.0
  %170 = vmatpush1.msra.mxu0 0.0
  %171 = vmatprep.subr.mxu0 0.0
  %172 = vmatpush1.msra.mxu0 0.0
  %173 = vmatprep.subr.mxu0 0.0
  %174 = vmatpush1.msra.mxu0 0.0
  %175 = vmatprep.subr.mxu0 0.0
  %176 = vmatpush1.msra.mxu0 0.0
  %177 = vmatprep.subr.mxu0 0.0
  %178 = vmatpush1.msra.mxu0 0.0
  %179 = vmatprep.subr.mxu0 0.0
  %180 = vmatpush1.msra.mxu0 0.0
  %181 = vmatprep.subr.mxu0 0.0
  %182 = vmatpush1.msra.mxu0 0.0
  %183 = vmatprep.subr.mxu0 0.0
  %184 = vmatpush1.msra.mxu0 0.0
  %185 = vmatprep.subr.mxu0 0.0
  %186 = vmatpush1.msra.mxu0 0.0
  %187 = vmatprep.subr.mxu0 0.0
  %188 = vmatpush1.msra.mxu0 0.0
  %189 = vmatprep.subr.mxu0 0.0
  %190 = vmatpush1.msra.mxu0 0.0
  %191 = vmatprep.subr.mxu0 0.0
  %192 = vmatpush1.msra.mxu0 0.0
  %193 = vmatprep.subr.mxu0 0.0
  %194 = vmatpush1.msra.mxu0 0.0
  %195 = vmatprep.subr.mxu0 0.0
  %196 = vmatpush1.msra.mxu0 0.0
  %197 = vmatprep.subr.mxu0 0.0
  %198 = vmatpush1.msra.mxu0 0.0
  %199 = vmatprep.subr.mxu0 0.0
  %200 = vmatpush1.msra.mxu0 0.0
  %201 = vmatprep.subr.mxu0 0.0
  %202 = vmatpush1.msra.mxu0 0.0
  %203 = vmatprep.subr.mxu0 0.0
  %204 = vmatpush1.msra.mxu0 0.0
  %205 = vmatprep.subr.mxu0 0.0
  %206 = vmatpush1.msra.mxu0 0.0
  %207 = vmatprep.subr.mxu0 0.0
  %208 = vmatpush1.msra.mxu0 0.0
  %209 = vmatprep.subr.mxu0 0.0
  %210 = vmatpush1.msra.mxu0 0.0
  %211 = vmatprep.subr.mxu0 0.0
  %212 = vmatpush1.msra.mxu0 0.0
  %213 = vmatprep.subr.mxu0 0.0
  %214 = vmatpush1.msra.mxu0 0.0
  %215 = vmatprep.subr.mxu0 0.0
  %216 = vmatpush1.msra.mxu0 0.0
  %217 = vmatprep.subr.mxu0 0.0
  %218 = vmatpush1.msra.mxu0 0.0
  %219 = vmatprep.subr.mxu0 0.0
  %220 = vmatpush1.msra.mxu0 0.0
  %221 = vmatprep.subr.mxu0 0.0
  %222 = vmatpush1.msra.mxu0 0.0
  %223 = vmatprep.subr.mxu0 0.0
  %224 = vmatpush1.msra.mxu0 0.0
  %225 = vmatprep.subr.mxu0 0.0
  %226 = vmatpush1.msra.mxu0 0.0
  %227 = vmatprep.mubr.f32.mxu0 0.0
  %228 = vmatmul.mubr.f32.gmra.mrb[0].mxu0 %v158
  %v229 = vpop.f32.mrb[0].mxu0
  %v230 = vadd.f32 0.0, %v229
  %v231 = vpop.f32.mrb[0].mxu0
  %232 = vmatprep.mubr.f32.mxu0 0.0
  %233 = vmatmul.mubr.f32.gmra.mrb[0].mxu0 %v161
  %v234 = vpop.f32.mrb[0].mxu0
  %v235 = vadd.f32 0.0, %v234
  %v236 = vpop.f32.mrb[0].mxu0
  %237 = vdwg.mxu0
  %v238 = vld [vmem:[%s3] sm:$0x1]
  %v240 = vlaneseq
  %v241 = vshrl.u32 %v240, 7
  %v242 = vsub.s32 0, %v241
  %v243 = vrot.slane %v238, %v242
  %v246 = vsel %vm59, %v153, 0
  %v249 = vsel %vm59, %v154, 0
  %251 = vmatprep.subr.mxu0 0.0
  %252 = vmatpush1.msra.mxu0 %v230
  %253 = vmatprep.subr.mxu0 0.0
  %254 = vmatpush1.msra.mxu0 %v235
  %255 = vmatprep.subr.mxu0 0.0
  %256 = vmatpush1.msra.mxu0 0.0
  %257 = vmatprep.subr.mxu0 0.0
  %258 = vmatpush1.msra.mxu0 0.0
  %259 = vmatprep.subr.mxu0 0.0
  %260 = vmatpush1.msra.mxu0 0.0
  %261 = vmatprep.subr.mxu0 0.0
  %262 = vmatpush1.msra.mxu0 0.0
  %263 = vmatprep.subr.mxu0 0.0
  %264 = vmatpush1.msra.mxu0 0.0
  %265 = vmatprep.subr.mxu0 0.0
  %266 = vmatpush1.msra.mxu0 0.0
  %267 = vmatprep.subr.mxu0 0.0
  %268 = vmatpush1.msra.mxu0 0.0
  %269 = vmatprep.subr.mxu0 0.0
  %270 = vmatpush1.msra.mxu0 0.0
  %271 = vmatprep.subr.mxu0 0.0
  %272 = vmatpush1.msra.mxu0 0.0
  %273 = vmatprep.subr.mxu0 0.0
  %274 = vmatpush1.msra.mxu0 0.0
  %275 = vmatprep.subr.mxu0 0.0
  %276 = vmatpush1.msra.mxu0 0.0
  %277 = vmatprep.subr.mxu0 0.0
  %278 = vmatpush1.msra.mxu0 0.0
  %279 = vmatprep.subr.mxu0 0.0
  %280 = vmatpush1.msra.mxu0 0.0
  %281 = vmatprep.subr.mxu0 0.0
  %282 = vmatpush1.msra.mxu0 0.0
  %283 = vmatprep.subr.mxu0 0.0
  %284 = vmatpush1.msra.mxu0 0.0
  %285 = vmatprep.subr.mxu0 0.0
  %286 = vmatpush1.msra.mxu0 0.0
  %287 = vmatprep.subr.mxu0 0.0
  %288 = vmatpush1.msra.mxu0 0.0
  %289 = vmatprep.subr.mxu0 0.0
  %290 = vmatpush1.msra.mxu0 0.0
  %291 = vmatprep.subr.mxu0 0.0
  %292 = vmatpush1.msra.mxu0 0.0
  %293 = vmatprep.subr.mxu0 0.0
  %294 = vmatpush1.msra.mxu0 0.0
  %295 = vmatprep.subr.mxu0 0.0
  %296 = vmatpush1.msra.mxu0 0.0
  %297 = vmatprep.subr.mxu0 0.0
  %298 = vmatpush1.msra.mxu0 0.0
  %299 = vmatprep.subr.mxu0 0.0
  %300 = vmatpush1.msra.mxu0 0.0
  %301 = vmatprep.subr.mxu0 0.0
  %302 = vmatpush1.msra.mxu0 0.0
  %303 = vmatprep.subr.mxu0 0.0
  %304 = vmatpush1.msra.mxu0 0.0
  %305 = vmatprep.subr.mxu0 0.0
  %306 = vmatpush1.msra.mxu0 0.0
  %307 = vmatprep.subr.mxu0 0.0
  %308 = vmatpush1.msra.mxu0 0.0
  %309 = vmatprep.subr.mxu0 0.0
  %310 = vmatpush1.msra.mxu0 0.0
  %311 = vmatprep.subr.mxu0 0.0
  %312 = vmatpush1.msra.mxu0 0.0
  %313 = vmatprep.subr.mxu0 0.0
  %314 = vmatpush1.msra.mxu0 0.0
  %315 = vmatprep.mubr.f32.mxu0 0.0
  %316 = vmatmul.mubr.f32.gmra.mrb[0].mxu0 %v246
  %v317 = vpop.f32.mrb[0].mxu0
  %v318 = vadd.f32 %v243, %v317
  %v319 = vpop.f32.mrb[0].mxu0
  %320 = vmatprep.mubr.f32.mxu0 0.0
  %321 = vmatmul.mubr.f32.gmra.mrb[0].mxu0 %v249
  %v322 = vpop.f32.mrb[0].mxu0
  %v323 = vadd.f32 %v243, %v322
  %v324 = vpop.f32.mrb[0].mxu0
  %325 = vdwg.mxu0
  %v326 = vmax.f32 %v318, 0.0
  %v327 = vmax.f32 %v323, 0.0
  %v328 = vld [vmem:[%s4] sm:$0xff]
  %v329 = vld [vmem:[%s4 + $0x8] sm:$0xff]
  %v330 = vld [vmem:[%s4 + $0x10] sm:$0xff]
  %v331 = vld [vmem:[%s4 + $0x18] sm:$0xff]
  %vm332 = vcmask 261120
  %v334 = vsel %vm332, %v326, 0
  %v337 = vsel %vm332, %v327, 0
  %339 = vmatprep.subr.mxu0 0.0
  %340 = vmatpush1.msra.mxu0 %v328
  %341 = vmatprep.subr.mxu0 0.0
  %342 = vmatpush1.msra.mxu0 %v329
  %343 = vmatprep.subr.mxu0 0.0
  %344 = vmatpush1.msra.mxu0 %v330
  %345 = vmatprep.subr.mxu0 0.0
  %346 = vmatpush1.msra.mxu0 %v331
  %347 = vmatprep.subr.mxu0 0.0
  %348 = vmatpush1.msra.mxu0 0.0
  %349 = vmatprep.subr.mxu0 0.0
  %350 = vmatpush1.msra.mxu0 0.0
  %351 = vmatprep.subr.mxu0 0.0
  %352 = vmatpush1.msra.mxu0 0.0
  %353 = vmatprep.subr.mxu0 0.0
  %354 = vmatpush1.msra.mxu0 0.0
  %355 = vmatprep.subr.mxu0 0.0
  %356 = vmatpush1.msra.mxu0 0.0
  %357 = vmatprep.subr.mxu0 0.0
  %358 = vmatpush1.msra.mxu0 0.0
  %359 = vmatprep.subr.mxu0 0.0
  %360 = vmatpush1.msra.mxu0 0.0
  %361 = vmatprep.subr.mxu0 0.0
  %362 = vmatpush1.msra.mxu0 0.0
  %363 = vmatprep.subr.mxu0 0.0
  %364 = vmatpush1.msra.mxu0 0.0
  %365 = vmatprep.subr.mxu0 0.0
  %366 = vmatpush1.msra.mxu0 0.0
  %367 = vmatprep.subr.mxu0 0.0
  %368 = vmatpush1.msra.mxu0 0.0
  %369 = vmatprep.subr.mxu0 0.0
  %370 = vmatpush1.msra.mxu0 0.0
  %371 = vmatprep.subr.mxu0 0.0
  %372 = vmatpush1.msra.mxu0 0.0
  %373 = vmatprep.subr.mxu0 0.0
  %374 = vmatpush1.msra.mxu0 0.0
  %375 = vmatprep.subr.mxu0 0.0
  %376 = vmatpush1.msra.mxu0 0.0
  %377 = vmatprep.subr.mxu0 0.0
  %378 = vmatpush1.msra.mxu0 0.0
  %379 = vmatprep.subr.mxu0 0.0
  %380 = vmatpush1.msra.mxu0 0.0
  %381 = vmatprep.subr.mxu0 0.0
  %382 = vmatpush1.msra.mxu0 0.0
  %383 = vmatprep.subr.mxu0 0.0
  %384 = vmatpush1.msra.mxu0 0.0
  %385 = vmatprep.subr.mxu0 0.0
  %386 = vmatpush1.msra.mxu0 0.0
  %387 = vmatprep.subr.mxu0 0.0
  %388 = vmatpush1.msra.mxu0 0.0
  %389 = vmatprep.subr.mxu0 0.0
  %390 = vmatpush1.msra.mxu0 0.0
  %391 = vmatprep.subr.mxu0 0.0
  %392 = vmatpush1.msra.mxu0 0.0
  %393 = vmatprep.subr.mxu0 0.0
  %394 = vmatpush1.msra.mxu0 0.0
  %395 = vmatprep.subr.mxu0 0.0
  %396 = vmatpush1.msra.mxu0 0.0
  %397 = vmatprep.subr.mxu0 0.0
  %398 = vmatpush1.msra.mxu0 0.0
  %399 = vmatprep.subr.mxu0 0.0
  %400 = vmatpush1.msra.mxu0 0.0
  %401 = vmatprep.subr.mxu0 0.0
  %402 = vmatpush1.msra.mxu0 0.0
  %403 = vmatprep.mubr.f32.mxu0 0.0
  %404 = vmatmul.mubr.f32.gmra.mrb[0].mxu0 %v334
  %v405 = vpop.f32.mrb[0].mxu0
  %v406 = vadd.f32 0.0, %v405
  %v407 = vpop.f32.mrb[0].mxu0
  %408 = vmatprep.mubr.f32.mxu0 0.0
  %409 = vmatmul.mubr.f32.gmra.mrb[0].mxu0 %v337
  %v410 = vpop.f32.mrb[0].mxu0
  %v411 = vadd.f32 0.0, %v410
  %v412 = vpop.f32.mrb[0].mxu0
  %413 = vdwg.mxu0
  %v414 = vld [vmem:[%s5] sm:$0x1]
  %v416 = vlaneseq
  %v417 = vshrl.u32 %v416, 7
  %v418 = vsub.s32 0, %v417
  %v419 = vrot.slane %v414, %v418
  %421 = vmatprep.subr.mxu0 0.0
  %422 = vmatpush1.msra.mxu0 %v406
  %423 = vmatprep.subr.mxu0 0.0
  %424 = vmatpush1.msra.mxu0 %v411
  %425 = vmatprep.subr.mxu0 0.0
  %426 = vmatpush1.msra.mxu0 0.0
  %427 = vmatprep.subr.mxu0 0.0
  %428 = vmatpush1.msra.mxu0 0.0
  %429 = vmatprep.subr.mxu0 0.0
  %430 = vmatpush1.msra.mxu0 0.0
  %431 = vmatprep.subr.mxu0 0.0
  %432 = vmatpush1.msra.mxu0 0.0
  %433 = vmatprep.subr.mxu0 0.0
  %434 = vmatpush1.msra.mxu0 0.0
  %435 = vmatprep.subr.mxu0 0.0
  %436 = vmatpush1.msra.mxu0 0.0
  %437 = vmatprep.subr.mxu0 0.0
  %438 = vmatpush1.msra.mxu0 0.0
  %439 = vmatprep.subr.mxu0 0.0
  %440 = vmatpush1.msra.mxu0 0.0
  %441 = vmatprep.subr.mxu0 0.0
  %442 = vmatpush1.msra.mxu0 0.0
  %443 = vmatprep.subr.mxu0 0.0
  %444 = vmatpush1.msra.mxu0 0.0
  %445 = vmatprep.subr.mxu0 0.0
  %446 = vmatpush1.msra.mxu0 0.0
  %447 = vmatprep.subr.mxu0 0.0
  %448 = vmatpush1.msra.mxu0 0.0
  %449 = vmatprep.subr.mxu0 0.0
  %450 = vmatpush1.msra.mxu0 0.0
  %451 = vmatprep.subr.mxu0 0.0
  %452 = vmatpush1.msra.mxu0 0.0
  %453 = vmatprep.subr.mxu0 0.0
  %454 = vmatpush1.msra.mxu0 0.0
  %455 = vmatprep.subr.mxu0 0.0
  %456 = vmatpush1.msra.mxu0 0.0
  %457 = vmatprep.subr.mxu0 0.0
  %458 = vmatpush1.msra.mxu0 0.0
  %459 = vmatprep.subr.mxu0 0.0
  %460 = vmatpush1.msra.mxu0 0.0
  %461 = vmatprep.subr.mxu0 0.0
  %462 = vmatpush1.msra.mxu0 0.0
  %463 = vmatprep.subr.mxu0 0.0
  %464 = vmatpush1.msra.mxu0 0.0
  %465 = vmatprep.subr.mxu0 0.0
  %466 = vmatpush1.msra.mxu0 0.0
  %467 = vmatprep.subr.mxu0 0.0
  %468 = vmatpush1.msra.mxu0 0.0
  %469 = vmatprep.subr.mxu0 0.0
  %470 = vmatpush1.msra.mxu0 0.0
  %471 = vmatprep.subr.mxu0 0.0
  %472 = vmatpush1.msra.mxu0 0.0
  %473 = vmatprep.subr.mxu0 0.0
  %474 = vmatpush1.msra.mxu0 0.0
  %475 = vmatprep.subr.mxu0 0.0
  %476 = vmatpush1.msra.mxu0 0.0
  %477 = vmatprep.subr.mxu0 0.0
  %478 = vmatpush1.msra.mxu0 0.0
  %479 = vmatprep.subr.mxu0 0.0
  %480 = vmatpush1.msra.mxu0 0.0
  %481 = vmatprep.subr.mxu0 0.0
  %482 = vmatpush1.msra.mxu0 0.0
  %483 = vmatprep.subr.mxu0 0.0
  %484 = vmatpush1.msra.mxu0 0.0
  %485 = vmatprep.mubr.f32.mxu0 0.0
  %486 = vmatmul.mubr.f32.gmra.mrb[0].mxu0 %v246
  %v487 = vpop.f32.mrb[0].mxu0
  %v488 = vadd.f32 %v419, %v487
  %v489 = vpop.f32.mrb[0].mxu0
  %490 = vmatprep.mubr.f32.mxu0 0.0
  %491 = vmatmul.mubr.f32.gmra.mrb[0].mxu0 %v249
  %v492 = vpop.f32.mrb[0].mxu0
  %v493 = vadd.f32 %v419, %v492
  %v494 = vpop.f32.mrb[0].mxu0
  %495 = vdwg.mxu0
  %v496 = vmax.f32 %v488, 0.0
  %v497 = vmax.f32 %v493, 0.0
  %s498 = scalar_lea.vmem %s0, 16
  %v499 = vld [vmem:[%s498] sm:$0xff]
  %v500 = vld [vmem:[%s498 + $0x8] sm:$0xff]
  %v501 = vmul.f32 %v499, %v53
  %v502 = vmul.f32 %v500, %v54
  %v503 = vadd.f32 %v501, %v47
  %v504 = vadd.f32 %v502, %v48
  %v505 = vsel %vm59, %v503, 0.0
  %506 = vadd.xlane.f32.xlu0 %v505
  %v507 = vpop.xlane.xlu0 %506
  %v508 = vsel %vm59, %v504, 0.0
  %509 = vadd.xlane.f32.xlu0 %v508
  %v510 = vpop.xlane.xlu0 %509
  %v511 = vmax.f32 %v507, 1.0
  %v512 = vmax.f32 %v510, 1.0
  %v513 = vrsqrt.pop %v511
  %v514 = vrsqrt.pop %v512
  %v515 = vmul.f32 %v513, %v47
  %v516 = vmul.f32 %v514, %v48
  %v518 = vsel %vm59, %v503, 0
  %v521 = vsel %vm59, %v504, 0
  %523 = vmatprep.subr.mxu0 0.0
  %524 = vmatpush1.msra.mxu0 %v515
  %525 = vmatprep.subr.mxu0 0.0
  %526 = vmatpush1.msra.mxu0 %v516
  %527 = vmatprep.subr.mxu0 0.0
  %528 = vmatpush1.msra.mxu0 0.0
  %529 = vmatprep.subr.mxu0 0.0
  %530 = vmatpush1.msra.mxu0 0.0
  %531 = vmatprep.subr.mxu0 0.0
  %532 = vmatpush1.msra.mxu0 0.0
  %533 = vmatprep.subr.mxu0 0.0
  %534 = vmatpush1.msra.mxu0 0.0
  %535 = vmatprep.subr.mxu0 0.0
  %536 = vmatpush1.msra.mxu0 0.0
  %537 = vmatprep.subr.mxu0 0.0
  %538 = vmatpush1.msra.mxu0 0.0
  %539 = vmatprep.subr.mxu0 0.0
  %540 = vmatpush1.msra.mxu0 0.0
  %541 = vmatprep.subr.mxu0 0.0
  %542 = vmatpush1.msra.mxu0 0.0
  %543 = vmatprep.subr.mxu0 0.0
  %544 = vmatpush1.msra.mxu0 0.0
  %545 = vmatprep.subr.mxu0 0.0
  %546 = vmatpush1.msra.mxu0 0.0
  %547 = vmatprep.subr.mxu0 0.0
  %548 = vmatpush1.msra.mxu0 0.0
  %549 = vmatprep.subr.mxu0 0.0
  %550 = vmatpush1.msra.mxu0 0.0
  %551 = vmatprep.subr.mxu0 0.0
  %552 = vmatpush1.msra.mxu0 0.0
  %553 = vmatprep.subr.mxu0 0.0
  %554 = vmatpush1.msra.mxu0 0.0
  %555 = vmatprep.subr.mxu0 0.0
  %556 = vmatpush1.msra.mxu0 0.0
  %557 = vmatprep.subr.mxu0 0.0
  %558 = vmatpush1.msra.mxu0 0.0
  %559 = vmatprep.subr.mxu0 0.0
  %560 = vmatpush1.msra.mxu0 0.0
  %561 = vmatprep.subr.mxu0 0.0
  %562 = vmatpush1.msra.mxu0 0.0
  %563 = vmatprep.subr.mxu0 0.0
  %564 = vmatpush1.msra.mxu0 0.0
  %565 = vmatprep.subr.mxu0 0.0
  %566 = vmatpush1.msra.mxu0 0.0
  %567 = vmatprep.subr.mxu0 0.0
  %568 = vmatpush1.msra.mxu0 0.0
  %569 = vmatprep.subr.mxu0 0.0
  %570 = vmatpush1.msra.mxu0 0.0
  %571 = vmatprep.subr.mxu0 0.0
  %572 = vmatpush1.msra.mxu0 0.0
  %573 = vmatprep.subr.mxu0 0.0
  %574 = vmatpush1.msra.mxu0 0.0
  %575 = vmatprep.subr.mxu0 0.0
  %576 = vmatpush1.msra.mxu0 0.0
  %577 = vmatprep.subr.mxu0 0.0
  %578 = vmatpush1.msra.mxu0 0.0
  %579 = vmatprep.subr.mxu0 0.0
  %580 = vmatpush1.msra.mxu0 0.0
  %581 = vmatprep.subr.mxu0 0.0
  %582 = vmatpush1.msra.mxu0 0.0
  %583 = vmatprep.subr.mxu0 0.0
  %584 = vmatpush1.msra.mxu0 0.0
  %585 = vmatprep.subr.mxu0 0.0
  %586 = vmatpush1.msra.mxu0 0.0
  %587 = vmatprep.mubr.f32.mxu0 0.0
  %588 = vmatmul.mubr.f32.gmra.mrb[0].mxu0 %v518
  %v589 = vpop.f32.mrb[0].mxu0
  %v590 = vadd.f32 0.0, %v589
  %v591 = vpop.f32.mrb[0].mxu0
  %592 = vmatprep.mubr.f32.mxu0 0.0
  %593 = vmatmul.mubr.f32.gmra.mrb[0].mxu0 %v521
  %v594 = vpop.f32.mrb[0].mxu0
  %v595 = vadd.f32 0.0, %v594
  %v596 = vpop.f32.mrb[0].mxu0
  %597 = vdwg.mxu0
  %v598 = vmul.f32 %v513, %v590
  %v599 = vmul.f32 %v514, %v595
  %s600 = scalar_lea.vmem %s2, 8
  %v601 = vld [vmem:[%s600] sm:$0xff]
  %602 = vmatprep.subr.mxu0 0.0
  %603 = vmatpush1.msra.mxu0 %v601
  %604 = vmatprep.subr.mxu0 0.0
  %605 = vmatpush1.msra.mxu0 0.0
  %606 = vmatprep.subr.mxu0 0.0
  %607 = vmatpush1.msra.mxu0 0.0
  %608 = vmatprep.subr.mxu0 0.0
  %609 = vmatpush1.msra.mxu0 0.0
  %610 = vmatprep.subr.mxu0 0.0
  %611 = vmatpush1.msra.mxu0 0.0
  %612 = vmatprep.subr.mxu0 0.0
  %613 = vmatpush1.msra.mxu0 0.0
  %614 = vmatprep.subr.mxu0 0.0
  %615 = vmatpush1.msra.mxu0 0.0
  %616 = vmatprep.subr.mxu0 0.0
  %617 = vmatpush1.msra.mxu0 0.0
  %618 = vmatprep.subr.mxu0 0.0
  %619 = vmatpush1.msra.mxu0 0.0
  %620 = vmatprep.subr.mxu0 0.0
  %621 = vmatpush1.msra.mxu0 0.0
  %622 = vmatprep.subr.mxu0 0.0
  %623 = vmatpush1.msra.mxu0 0.0
  %624 = vmatprep.subr.mxu0 0.0
  %625 = vmatpush1.msra.mxu0 0.0
  %626 = vmatprep.subr.mxu0 0.0
  %627 = vmatpush1.msra.mxu0 0.0
  %628 = vmatprep.subr.mxu0 0.0
  %629 = vmatpush1.msra.mxu0 0.0
  %630 = vmatprep.subr.mxu0 0.0
  %631 = vmatpush1.msra.mxu0 0.0
  %632 = vmatprep.subr.mxu0 0.0
  %633 = vmatpush1.msra.mxu0 0.0
  %634 = vmatprep.subr.mxu0 0.0
  %635 = vmatpush1.msra.mxu0 0.0
  %636 = vmatprep.subr.mxu0 0.0
  %637 = vmatpush1.msra.mxu0 0.0
  %638 = vmatprep.subr.mxu0 0.0
  %639 = vmatpush1.msra.mxu0 0.0
  %640 = vmatprep.subr.mxu0 0.0
  %641 = vmatpush1.msra.mxu0 0.0
  %642 = vmatprep.subr.mxu0 0.0
  %643 = vmatpush1.msra.mxu0 0.0
  %644 = vmatprep.subr.mxu0 0.0
  %645 = vmatpush1.msra.mxu0 0.0
  %646 = vmatprep.subr.mxu0 0.0
  %647 = vmatpush1.msra.mxu0 0.0
  %648 = vmatprep.subr.mxu0 0.0
  %649 = vmatpush1.msra.mxu0 0.0
  %650 = vmatprep.subr.mxu0 0.0
  %651 = vmatpush1.msra.mxu0 0.0
  %652 = vmatprep.subr.mxu0 0.0
  %653 = vmatpush1.msra.mxu0 0.0
  %654 = vmatprep.subr.mxu0 0.0
  %655 = vmatpush1.msra.mxu0 0.0
  %656 = vmatprep.subr.mxu0 0.0
  %657 = vmatpush1.msra.mxu0 0.0
  %658 = vmatprep.subr.mxu0 0.0
  %659 = vmatpush1.msra.mxu0 0.0
  %660 = vmatprep.subr.mxu0 0.0
  %661 = vmatpush1.msra.mxu0 0.0
  %662 = vmatprep.subr.mxu0 0.0
  %663 = vmatpush1.msra.mxu0 0.0
  %664 = vmatprep.subr.mxu0 0.0
  %665 = vmatpush1.msra.mxu0 0.0
  %666 = vmatprep.mubr.f32.mxu0 0.0
  %667 = vmatmul.mubr.f32.gmra.mrb[0].mxu0 %v158
  %v668 = vpop.f32.mrb[0].mxu0
  %v669 = vadd.f32 0.0, %v668
  %v670 = vpop.f32.mrb[0].mxu0
  %671 = vmatprep.mubr.f32.mxu0 0.0
  %672 = vmatmul.mubr.f32.gmra.mrb[0].mxu0 %v161
  %v673 = vpop.f32.mrb[0].mxu0
  %v674 = vadd.f32 0.0, %v673
  %v675 = vpop.f32.mrb[0].mxu0
  %676 = vdwg.mxu0
  %s677 = scalar_lea.vmem %s3, 1
  %v678 = vld [vmem:[%s677] sm:$0x1]
  %v680 = vlaneseq
  %v681 = vshrl.u32 %v680, 7
  %v682 = vsub.s32 0, %v681
  %v683 = vrot.slane %v678, %v682
  %v686 = vsel %vm59, %v598, 0
  %v689 = vsel %vm59, %v599, 0
  %691 = vmatprep.subr.mxu0 0.0
  %692 = vmatpush1.msra.mxu0 %v669
  %693 = vmatprep.subr.mxu0 0.0
  %694 = vmatpush1.msra.mxu0 %v674
  %695 = vmatprep.subr.mxu0 0.0
  %696 = vmatpush1.msra.mxu0 0.0
  %697 = vmatprep.subr.mxu0 0.0
  %698 = vmatpush1.msra.mxu0 0.0
  %699 = vmatprep.subr.mxu0 0.0
  %700 = vmatpush1.msra.mxu0 0.0
  %701 = vmatprep.subr.mxu0 0.0
  %702 = vmatpush1.msra.mxu0 0.0
  %703 = vmatprep.subr.mxu0 0.0
  %704 = vmatpush1.msra.mxu0 0.0
  %705 = vmatprep.subr.mxu0 0.0
  %706 = vmatpush1.msra.mxu0 0.0
  %707 = vmatprep.subr.mxu0 0.0
  %708 = vmatpush1.msra.mxu0 0.0
  %709 = vmatprep.subr.mxu0 0.0
  %710 = vmatpush1.msra.mxu0 0.0
  %711 = vmatprep.subr.mxu0 0.0
  %712 = vmatpush1.msra.mxu0 0.0
  %713 = vmatprep.subr.mxu0 0.0
  %714 = vmatpush1.msra.mxu0 0.0
  %715 = vmatprep.subr.mxu0 0.0
  %716 = vmatpush1.msra.mxu0 0.0
  %717 = vmatprep.subr.mxu0 0.0
  %718 = vmatpush1.msra.mxu0 0.0
  %719 = vmatprep.subr.mxu0 0.0
  %720 = vmatpush1.msra.mxu0 0.0
  %721 = vmatprep.subr.mxu0 0.0
  %722 = vmatpush1.msra.mxu0 0.0
  %723 = vmatprep.subr.mxu0 0.0
  %724 = vmatpush1.msra.mxu0 0.0
  %725 = vmatprep.subr.mxu0 0.0
  %726 = vmatpush1.msra.mxu0 0.0
  %727 = vmatprep.subr.mxu0 0.0
  %728 = vmatpush1.msra.mxu0 0.0
  %729 = vmatprep.subr.mxu0 0.0
  %730 = vmatpush1.msra.mxu0 0.0
  %731 = vmatprep.subr.mxu0 0.0
  %732 = vmatpush1.msra.mxu0 0.0
  %733 = vmatprep.subr.mxu0 0.0
  %734 = vmatpush1.msra.mxu0 0.0
  %735 = vmatprep.subr.mxu0 0.0
  %736 = vmatpush1.msra.mxu0 0.0
  %737 = vmatprep.subr.mxu0 0.0
  %738 = vmatpush1.msra.mxu0 0.0
  %739 = vmatprep.subr.mxu0 0.0
  %740 = vmatpush1.msra.mxu0 0.0
  %741 = vmatprep.subr.mxu0 0.0
  %742 = vmatpush1.msra.mxu0 0.0
  %743 = vmatprep.subr.mxu0 0.0
  %744 = vmatpush1.msra.mxu0 0.0
  %745 = vmatprep.subr.mxu0 0.0
  %746 = vmatpush1.msra.mxu0 0.0
  %747 = vmatprep.subr.mxu0 0.0
  %748 = vmatpush1.msra.mxu0 0.0
  %749 = vmatprep.subr.mxu0 0.0
  %750 = vmatpush1.msra.mxu0 0.0
  %751 = vmatprep.subr.mxu0 0.0
  %752 = vmatpush1.msra.mxu0 0.0
  %753 = vmatprep.subr.mxu0 0.0
  %754 = vmatpush1.msra.mxu0 0.0
  %755 = vmatprep.mubr.f32.mxu0 0.0
  %756 = vmatmul.mubr.f32.gmra.mrb[0].mxu0 %v686
  %v757 = vpop.f32.mrb[0].mxu0
  %v758 = vadd.f32 %v683, %v757
  %v759 = vpop.f32.mrb[0].mxu0
  %760 = vmatprep.mubr.f32.mxu0 0.0
  %761 = vmatmul.mubr.f32.gmra.mrb[0].mxu0 %v689
  %v762 = vpop.f32.mrb[0].mxu0
  %v763 = vadd.f32 %v683, %v762
  %v764 = vpop.f32.mrb[0].mxu0
  %765 = vdwg.mxu0
  %v766 = vmax.f32 %v758, 0.0
  %v767 = vmax.f32 %v763, 0.0
  %s768 = scalar_lea.vmem %s4, 32
  %v769 = vld [vmem:[%s768] sm:$0xff]
  %v770 = vld [vmem:[%s768 + $0x8] sm:$0xff]
  %v771 = vld [vmem:[%s768 + $0x10] sm:$0xff]
  %v772 = vld [vmem:[%s768 + $0x18] sm:$0xff]
  %v774 = vsel %vm332, %v766, 0
  %v777 = vsel %vm332, %v767, 0
  %779 = vmatprep.subr.mxu0 0.0
  %780 = vmatpush1.msra.mxu0 %v769
  %781 = vmatprep.subr.mxu0 0.0
  %782 = vmatpush1.msra.mxu0 %v770
  %783 = vmatprep.subr.mxu0 0.0
  %784 = vmatpush1.msra.mxu0 %v771
  %785 = vmatprep.subr.mxu0 0.0
  %786 = vmatpush1.msra.mxu0 %v772
  %787 = vmatprep.subr.mxu0 0.0
  %788 = vmatpush1.msra.mxu0 0.0
  %789 = vmatprep.subr.mxu0 0.0
  %790 = vmatpush1.msra.mxu0 0.0
  %791 = vmatprep.subr.mxu0 0.0
  %792 = vmatpush1.msra.mxu0 0.0
  %793 = vmatprep.subr.mxu0 0.0
  %794 = vmatpush1.msra.mxu0 0.0
  %795 = vmatprep.subr.mxu0 0.0
  %796 = vmatpush1.msra.mxu0 0.0
  %797 = vmatprep.subr.mxu0 0.0
  %798 = vmatpush1.msra.mxu0 0.0
  %799 = vmatprep.subr.mxu0 0.0
  %800 = vmatpush1.msra.mxu0 0.0
  %801 = vmatprep.subr.mxu0 0.0
  %802 = vmatpush1.msra.mxu0 0.0
  %803 = vmatprep.subr.mxu0 0.0
  %804 = vmatpush1.msra.mxu0 0.0
  %805 = vmatprep.subr.mxu0 0.0
  %806 = vmatpush1.msra.mxu0 0.0
  %807 = vmatprep.subr.mxu0 0.0
  %808 = vmatpush1.msra.mxu0 0.0
  %809 = vmatprep.subr.mxu0 0.0
  %810 = vmatpush1.msra.mxu0 0.0
  %811 = vmatprep.subr.mxu0 0.0
  %812 = vmatpush1.msra.mxu0 0.0
  %813 = vmatprep.subr.mxu0 0.0
  %814 = vmatpush1.msra.mxu0 0.0
  %815 = vmatprep.subr.mxu0 0.0
  %816 = vmatpush1.msra.mxu0 0.0
  %817 = vmatprep.subr.mxu0 0.0
  %818 = vmatpush1.msra.mxu0 0.0
  %819 = vmatprep.subr.mxu0 0.0
  %820 = vmatpush1.msra.mxu0 0.0
  %821 = vmatprep.subr.mxu0 0.0
  %822 = vmatpush1.msra.mxu0 0.0
  %823 = vmatprep.subr.mxu0 0.0
  %824 = vmatpush1.msra.mxu0 0.0
  %825 = vmatprep.subr.mxu0 0.0
  %826 = vmatpush1.msra.mxu0 0.0
  %827 = vmatprep.subr.mxu0 0.0
  %828 = vmatpush1.msra.mxu0 0.0
  %829 = vmatprep.subr.mxu0 0.0
  %830 = vmatpush1.msra.mxu0 0.0
  %831 = vmatprep.subr.mxu0 0.0
  %832 = vmatpush1.msra.mxu0 0.0
  %833 = vmatprep.subr.mxu0 0.0
  %834 = vmatpush1.msra.mxu0 0.0
  %835 = vmatprep.subr.mxu0 0.0
  %836 = vmatpush1.msra.mxu0 0.0
  %837 = vmatprep.subr.mxu0 0.0
  %838 = vmatpush1.msra.mxu0 0.0
  %839 = vmatprep.subr.mxu0 0.0
  %840 = vmatpush1.msra.mxu0 0.0
  %841 = vmatprep.subr.mxu0 0.0
  %842 = vmatpush1.msra.mxu0 0.0
  %843 = vmatprep.mubr.f32.mxu0 0.0
  %844 = vmatmul.mubr.f32.gmra.mrb[0].mxu0 %v774
  %v845 = vpop.f32.mrb[0].mxu0
  %v846 = vadd.f32 0.0, %v845
  %v847 = vpop.f32.mrb[0].mxu0
  %848 = vmatprep.mubr.f32.mxu0 0.0
  %849 = vmatmul.mubr.f32.gmra.mrb[0].mxu0 %v777
  %v850 = vpop.f32.mrb[0].mxu0
  %v851 = vadd.f32 0.0, %v850
  %v852 = vpop.f32.mrb[0].mxu0
  %853 = vdwg.mxu0
  %s854 = scalar_lea.vmem %s5, 1
  %v855 = vld [vmem:[%s854] sm:$0x1]
  %v857 = vlaneseq
  %v858 = vshrl.u32 %v857, 7
  %v859 = vsub.s32 0, %v858
  %v860 = vrot.slane %v855, %v859
  %862 = vmatprep.subr.mxu0 0.0
  %863 = vmatpush1.msra.mxu0 %v846
  %864 = vmatprep.subr.mxu0 0.0
  %865 = vmatpush1.msra.mxu0 %v851
  %866 = vmatprep.subr.mxu0 0.0
  %867 = vmatpush1.msra.mxu0 0.0
  %868 = vmatprep.subr.mxu0 0.0
  %869 = vmatpush1.msra.mxu0 0.0
  %870 = vmatprep.subr.mxu0 0.0
  %871 = vmatpush1.msra.mxu0 0.0
  %872 = vmatprep.subr.mxu0 0.0
  %873 = vmatpush1.msra.mxu0 0.0
  %874 = vmatprep.subr.mxu0 0.0
  %875 = vmatpush1.msra.mxu0 0.0
  %876 = vmatprep.subr.mxu0 0.0
  %877 = vmatpush1.msra.mxu0 0.0
  %878 = vmatprep.subr.mxu0 0.0
  %879 = vmatpush1.msra.mxu0 0.0
  %880 = vmatprep.subr.mxu0 0.0
  %881 = vmatpush1.msra.mxu0 0.0
  %882 = vmatprep.subr.mxu0 0.0
  %883 = vmatpush1.msra.mxu0 0.0
  %884 = vmatprep.subr.mxu0 0.0
  %885 = vmatpush1.msra.mxu0 0.0
  %886 = vmatprep.subr.mxu0 0.0
  %887 = vmatpush1.msra.mxu0 0.0
  %888 = vmatprep.subr.mxu0 0.0
  %889 = vmatpush1.msra.mxu0 0.0
  %890 = vmatprep.subr.mxu0 0.0
  %891 = vmatpush1.msra.mxu0 0.0
  %892 = vmatprep.subr.mxu0 0.0
  %893 = vmatpush1.msra.mxu0 0.0
  %894 = vmatprep.subr.mxu0 0.0
  %895 = vmatpush1.msra.mxu0 0.0
  %896 = vmatprep.subr.mxu0 0.0
  %897 = vmatpush1.msra.mxu0 0.0
  %898 = vmatprep.subr.mxu0 0.0
  %899 = vmatpush1.msra.mxu0 0.0
  %900 = vmatprep.subr.mxu0 0.0
  %901 = vmatpush1.msra.mxu0 0.0
  %902 = vmatprep.subr.mxu0 0.0
  %903 = vmatpush1.msra.mxu0 0.0
  %904 = vmatprep.subr.mxu0 0.0
  %905 = vmatpush1.msra.mxu0 0.0
  %906 = vmatprep.subr.mxu0 0.0
  %907 = vmatpush1.msra.mxu0 0.0
  %908 = vmatprep.subr.mxu0 0.0
  %909 = vmatpush1.msra.mxu0 0.0
  %910 = vmatprep.subr.mxu0 0.0
  %911 = vmatpush1.msra.mxu0 0.0
  %912 = vmatprep.subr.mxu0 0.0
  %913 = vmatpush1.msra.mxu0 0.0
  %914 = vmatprep.subr.mxu0 0.0
  %915 = vmatpush1.msra.mxu0 0.0
  %916 = vmatprep.subr.mxu0 0.0
  %917 = vmatpush1.msra.mxu0 0.0
  %918 = vmatprep.subr.mxu0 0.0
  %919 = vmatpush1.msra.mxu0 0.0
  %920 = vmatprep.subr.mxu0 0.0
  %921 = vmatpush1.msra.mxu0 0.0
  %922 = vmatprep.subr.mxu0 0.0
  %923 = vmatpush1.msra.mxu0 0.0
  %924 = vmatprep.subr.mxu0 0.0
  %925 = vmatpush1.msra.mxu0 0.0
  %926 = vmatprep.mubr.f32.mxu0 0.0
  %927 = vmatmul.mubr.f32.gmra.mrb[0].mxu0 %v686
  %v928 = vpop.f32.mrb[0].mxu0
  %v929 = vadd.f32 %v860, %v928
  %v930 = vpop.f32.mrb[0].mxu0
  %931 = vmatprep.mubr.f32.mxu0 0.0
  %932 = vmatmul.mubr.f32.gmra.mrb[0].mxu0 %v689
  %v933 = vpop.f32.mrb[0].mxu0
  %v934 = vadd.f32 %v860, %v933
  %v935 = vpop.f32.mrb[0].mxu0
  %936 = vdwg.mxu0
  %v937 = vmax.f32 %v929, 0.0
  %v938 = vmax.f32 %v934, 0.0
  %s939 = scalar_lea.vmem %s0, 32
  %v940 = vld [vmem:[%s939] sm:$0xff]
  %v941 = vld [vmem:[%s939 + $0x8] sm:$0xff]
  %v942 = vmul.f32 %v940, %v53
  %v943 = vmul.f32 %v941, %v54
  %v944 = vadd.f32 %v942, %v47
  %v945 = vadd.f32 %v943, %v48
  %v946 = vsel %vm59, %v944, 0.0
  %947 = vadd.xlane.f32.xlu0 %v946
  %v948 = vpop.xlane.xlu0 %947
  %v949 = vsel %vm59, %v945, 0.0
  %950 = vadd.xlane.f32.xlu0 %v949
  %v951 = vpop.xlane.xlu0 %950
  %v952 = vmax.f32 %v948, 1.0
  %v953 = vmax.f32 %v951, 1.0
  %v954 = vrsqrt.pop %v952
  %v955 = vrsqrt.pop %v953
  %v956 = vmul.f32 %v954, %v47
  %v957 = vmul.f32 %v955, %v48
  %v959 = vsel %vm59, %v944, 0
  %v962 = vsel %vm59, %v945, 0
  %964 = vmatprep.subr.mxu0 0.0
  %965 = vmatpush1.msra.mxu0 %v956
  %966 = vmatprep.subr.mxu0 0.0
  %967 = vmatpush1.msra.mxu0 %v957
  %968 = vmatprep.subr.mxu0 0.0
  %969 = vmatpush1.msra.mxu0 0.0
  %970 = vmatprep.subr.mxu0 0.0
  %971 = vmatpush1.msra.mxu0 0.0
  %972 = vmatprep.subr.mxu0 0.0
  %973 = vmatpush1.msra.mxu0 0.0
  %974 = vmatprep.subr.mxu0 0.0
  %975 = vmatpush1.msra.mxu0 0.0
  %976 = vmatprep.subr.mxu0 0.0
  %977 = vmatpush1.msra.mxu0 0.0
  %978 = vmatprep.subr.mxu0 0.0
  %979 = vmatpush1.msra.mxu0 0.0
  %980 = vmatprep.subr.mxu0 0.0
  %981 = vmatpush1.msra.mxu0 0.0
  %982 = vmatprep.subr.mxu0 0.0
  %983 = vmatpush1.msra.mxu0 0.0
  %984 = vmatprep.subr.mxu0 0.0
  %985 = vmatpush1.msra.mxu0 0.0
  %986 = vmatprep.subr.mxu0 0.0
  %987 = vmatpush1.msra.mxu0 0.0
  %988 = vmatprep.subr.mxu0 0.0
  %989 = vmatpush1.msra.mxu0 0.0
  %990 = vmatprep.subr.mxu0 0.0
  %991 = vmatpush1.msra.mxu0 0.0
  %992 = vmatprep.subr.mxu0 0.0
  %993 = vmatpush1.msra.mxu0 0.0
  %994 = vmatprep.subr.mxu0 0.0
  %995 = vmatpush1.msra.mxu0 0.0
  %996 = vmatprep.subr.mxu0 0.0
  %997 = vmatpush1.msra.mxu0 0.0
  %998 = vmatprep.subr.mxu0 0.0
  %999 = vmatpush1.msra.mxu0 0.0
  %1000 = vmatprep.subr.mxu0 0.0
  %1001 = vmatpush1.msra.mxu0 0.0
  %1002 = vmatprep.subr.mxu0 0.0
  %1003 = vmatpush1.msra.mxu0 0.0
  %1004 = vmatprep.subr.mxu0 0.0
  %1005 = vmatpush1.msra.mxu0 0.0
  %1006 = vmatprep.subr.mxu0 0.0
  %1007 = vmatpush1.msra.mxu0 0.0
  %1008 = vmatprep.subr.mxu0 0.0
  %1009 = vmatpush1.msra.mxu0 0.0
  %1010 = vmatprep.subr.mxu0 0.0
  %1011 = vmatpush1.msra.mxu0 0.0
  %1012 = vmatprep.subr.mxu0 0.0
  %1013 = vmatpush1.msra.mxu0 0.0
  %1014 = vmatprep.subr.mxu0 0.0
  %1015 = vmatpush1.msra.mxu0 0.0
  %1016 = vmatprep.subr.mxu0 0.0
  %1017 = vmatpush1.msra.mxu0 0.0
  %1018 = vmatprep.subr.mxu0 0.0
  %1019 = vmatpush1.msra.mxu0 0.0
  %1020 = vmatprep.subr.mxu0 0.0
  %1021 = vmatpush1.msra.mxu0 0.0
  %1022 = vmatprep.subr.mxu0 0.0
  %1023 = vmatpush1.msra.mxu0 0.0
  %1024 = vmatprep.subr.mxu0 0.0
  %1025 = vmatpush1.msra.mxu0 0.0
  %1026 = vmatprep.subr.mxu0 0.0
  %1027 = vmatpush1.msra.mxu0 0.0
  %1028 = vmatprep.mubr.f32.mxu0 0.0
  %1029 = vmatmul.mubr.f32.gmra.mrb[0].mxu0 %v959
  %v1030 = vpop.f32.mrb[0].mxu0
  %v1031 = vadd.f32 0.0, %v1030
  %v1032 = vpop.f32.mrb[0].mxu0
  %1033 = vmatprep.mubr.f32.mxu0 0.0
  %1034 = vmatmul.mubr.f32.gmra.mrb[0].mxu0 %v962
  %v1035 = vpop.f32.mrb[0].mxu0
  %v1036 = vadd.f32 0.0, %v1035
  %v1037 = vpop.f32.mrb[0].mxu0
  %1038 = vdwg.mxu0
  %v1039 = vmul.f32 %v954, %v1031
  %v1040 = vmul.f32 %v955, %v1036
  %s1041 = scalar_lea.vmem %s2, 16
  %v1042 = vld [vmem:[%s1041] sm:$0xff]
  %1043 = vmatprep.subr.mxu0 0.0
  %1044 = vmatpush1.msra.mxu0 %v1042
  %1045 = vmatprep.subr.mxu0 0.0
  %1046 = vmatpush1.msra.mxu0 0.0
  %1047 = vmatprep.subr.mxu0 0.0
  %1048 = vmatpush1.msra.mxu0 0.0
  %1049 = vmatprep.subr.mxu0 0.0
  %1050 = vmatpush1.msra.mxu0 0.0
  %1051 = vmatprep.subr.mxu0 0.0
  %1052 = vmatpush1.msra.mxu0 0.0
  %1053 = vmatprep.subr.mxu0 0.0
  %1054 = vmatpush1.msra.mxu0 0.0
  %1055 = vmatprep.subr.mxu0 0.0
  %1056 = vmatpush1.msra.mxu0 0.0
  %1057 = vmatprep.subr.mxu0 0.0
  %1058 = vmatpush1.msra.mxu0 0.0
  %1059 = vmatprep.subr.mxu0 0.0
  %1060 = vmatpush1.msra.mxu0 0.0
  %1061 = vmatprep.subr.mxu0 0.0
  %1062 = vmatpush1.msra.mxu0 0.0
  %1063 = vmatprep.subr.mxu0 0.0
  %1064 = vmatpush1.msra.mxu0 0.0
  %1065 = vmatprep.subr.mxu0 0.0
  %1066 = vmatpush1.msra.mxu0 0.0
  %1067 = vmatprep.subr.mxu0 0.0
  %1068 = vmatpush1.msra.mxu0 0.0
  %1069 = vmatprep.subr.mxu0 0.0
  %1070 = vmatpush1.msra.mxu0 0.0
  %1071 = vmatprep.subr.mxu0 0.0
  %1072 = vmatpush1.msra.mxu0 0.0
  %1073 = vmatprep.subr.mxu0 0.0
  %1074 = vmatpush1.msra.mxu0 0.0
  %1075 = vmatprep.subr.mxu0 0.0
  %1076 = vmatpush1.msra.mxu0 0.0
  %1077 = vmatprep.subr.mxu0 0.0
  %1078 = vmatpush1.msra.mxu0 0.0
  %1079 = vmatprep.subr.mxu0 0.0
  %1080 = vmatpush1.msra.mxu0 0.0
  %1081 = vmatprep.subr.mxu0 0.0
  %1082 = vmatpush1.msra.mxu0 0.0
  %1083 = vmatprep.subr.mxu0 0.0
  %1084 = vmatpush1.msra.mxu0 0.0
  %1085 = vmatprep.subr.mxu0 0.0
  %1086 = vmatpush1.msra.mxu0 0.0
  %1087 = vmatprep.subr.mxu0 0.0
  %1088 = vmatpush1.msra.mxu0 0.0
  %1089 = vmatprep.subr.mxu0 0.0
  %1090 = vmatpush1.msra.mxu0 0.0
  %1091 = vmatprep.subr.mxu0 0.0
  %1092 = vmatpush1.msra.mxu0 0.0
  %1093 = vmatprep.subr.mxu0 0.0
  %1094 = vmatpush1.msra.mxu0 0.0
  %1095 = vmatprep.subr.mxu0 0.0
  %1096 = vmatpush1.msra.mxu0 0.0
  %1097 = vmatprep.subr.mxu0 0.0
  %1098 = vmatpush1.msra.mxu0 0.0
  %1099 = vmatprep.subr.mxu0 0.0
  %1100 = vmatpush1.msra.mxu0 0.0
  %1101 = vmatprep.subr.mxu0 0.0
  %1102 = vmatpush1.msra.mxu0 0.0
  %1103 = vmatprep.subr.mxu0 0.0
  %1104 = vmatpush1.msra.mxu0 0.0
  %1105 = vmatprep.subr.mxu0 0.0
  %1106 = vmatpush1.msra.mxu0 0.0
  %1107 = vmatprep.mubr.f32.mxu0 0.0
  %1108 = vmatmul.mubr.f32.gmra.mrb[0].mxu0 %v158
  %v1109 = vpop.f32.mrb[0].mxu0
  %v1110 = vadd.f32 0.0, %v1109
  %v1111 = vpop.f32.mrb[0].mxu0
  %1112 = vmatprep.mubr.f32.mxu0 0.0
  %1113 = vmatmul.mubr.f32.gmra.mrb[0].mxu0 %v161
  %v1114 = vpop.f32.mrb[0].mxu0
  %v1115 = vadd.f32 0.0, %v1114
  %v1116 = vpop.f32.mrb[0].mxu0
  %1117 = vdwg.mxu0
  %s1118 = scalar_lea.vmem %s3, 2
  %v1119 = vld [vmem:[%s1118] sm:$0x1]
  %v1121 = vlaneseq
  %v1122 = vshrl.u32 %v1121, 7
  %v1123 = vsub.s32 0, %v1122
  %v1124 = vrot.slane %v1119, %v1123
  %v1127 = vsel %vm59, %v1039, 0
  %v1130 = vsel %vm59, %v1040, 0
  %1132 = vmatprep.subr.mxu0 0.0
  %1133 = vmatpush1.msra.mxu0 %v1110
  %1134 = vmatprep.subr.mxu0 0.0
  %1135 = vmatpush1.msra.mxu0 %v1115
  %1136 = vmatprep.subr.mxu0 0.0
  %1137 = vmatpush1.msra.mxu0 0.0
  %1138 = vmatprep.subr.mxu0 0.0
  %1139 = vmatpush1.msra.mxu0 0.0
  %1140 = vmatprep.subr.mxu0 0.0
  %1141 = vmatpush1.msra.mxu0 0.0
  %1142 = vmatprep.subr.mxu0 0.0
  %1143 = vmatpush1.msra.mxu0 0.0
  %1144 = vmatprep.subr.mxu0 0.0
  %1145 = vmatpush1.msra.mxu0 0.0
  %1146 = vmatprep.subr.mxu0 0.0
  %1147 = vmatpush1.msra.mxu0 0.0
  %1148 = vmatprep.subr.mxu0 0.0
  %1149 = vmatpush1.msra.mxu0 0.0
  %1150 = vmatprep.subr.mxu0 0.0
  %1151 = vmatpush1.msra.mxu0 0.0
  %1152 = vmatprep.subr.mxu0 0.0
  %1153 = vmatpush1.msra.mxu0 0.0
  %1154 = vmatprep.subr.mxu0 0.0
  %1155 = vmatpush1.msra.mxu0 0.0
  %1156 = vmatprep.subr.mxu0 0.0
  %1157 = vmatpush1.msra.mxu0 0.0
  %1158 = vmatprep.subr.mxu0 0.0
  %1159 = vmatpush1.msra.mxu0 0.0
  %1160 = vmatprep.subr.mxu0 0.0
  %1161 = vmatpush1.msra.mxu0 0.0
  %1162 = vmatprep.subr.mxu0 0.0
  %1163 = vmatpush1.msra.mxu0 0.0
  %1164 = vmatprep.subr.mxu0 0.0
  %1165 = vmatpush1.msra.mxu0 0.0
  %1166 = vmatprep.subr.mxu0 0.0
  %1167 = vmatpush1.msra.mxu0 0.0
  %1168 = vmatprep.subr.mxu0 0.0
  %1169 = vmatpush1.msra.mxu0 0.0
  %1170 = vmatprep.subr.mxu0 0.0
  %1171 = vmatpush1.msra.mxu0 0.0
  %1172 = vmatprep.subr.mxu0 0.0
  %1173 = vmatpush1.msra.mxu0 0.0
  %1174 = vmatprep.subr.mxu0 0.0
  %1175 = vmatpush1.msra.mxu0 0.0
  %1176 = vmatprep.subr.mxu0 0.0
  %1177 = vmatpush1.msra.mxu0 0.0
  %1178 = vmatprep.subr.mxu0 0.0
  %1179 = vmatpush1.msra.mxu0 0.0
  %1180 = vmatprep.subr.mxu0 0.0
  %1181 = vmatpush1.msra.mxu0 0.0
  %1182 = vmatprep.subr.mxu0 0.0
  %1183 = vmatpush1.msra.mxu0 0.0
  %1184 = vmatprep.subr.mxu0 0.0
  %1185 = vmatpush1.msra.mxu0 0.0
  %1186 = vmatprep.subr.mxu0 0.0
  %1187 = vmatpush1.msra.mxu0 0.0
  %1188 = vmatprep.subr.mxu0 0.0
  %1189 = vmatpush1.msra.mxu0 0.0
  %1190 = vmatprep.subr.mxu0 0.0
  %1191 = vmatpush1.msra.mxu0 0.0
  %1192 = vmatprep.subr.mxu0 0.0
  %1193 = vmatpush1.msra.mxu0 0.0
  %1194 = vmatprep.subr.mxu0 0.0
  %1195 = vmatpush1.msra.mxu0 0.0
  %1196 = vmatprep.mubr.f32.mxu0 0.0
  %1197 = vmatmul.mubr.f32.gmra.mrb[0].mxu0 %v1127
  %v1198 = vpop.f32.mrb[0].mxu0
  %v1199 = vadd.f32 %v1124, %v1198
  %v1200 = vpop.f32.mrb[0].mxu0
  %1201 = vmatprep.mubr.f32.mxu0 0.0
  %1202 = vmatmul.mubr.f32.gmra.mrb[0].mxu0 %v1130
  %v1203 = vpop.f32.mrb[0].mxu0
  %v1204 = vadd.f32 %v1124, %v1203
  %v1205 = vpop.f32.mrb[0].mxu0
  %1206 = vdwg.mxu0
  %v1207 = vmax.f32 %v1199, 0.0
  %v1208 = vmax.f32 %v1204, 0.0
  %s1209 = scalar_lea.vmem %s4, 64
  %v1210 = vld [vmem:[%s1209] sm:$0xff]
  %v1211 = vld [vmem:[%s1209 + $0x8] sm:$0xff]
  %v1212 = vld [vmem:[%s1209 + $0x10] sm:$0xff]
  %v1213 = vld [vmem:[%s1209 + $0x18] sm:$0xff]
  %v1215 = vsel %vm332, %v1207, 0
  %v1218 = vsel %vm332, %v1208, 0
  %1220 = vmatprep.subr.mxu0 0.0
  %1221 = vmatpush1.msra.mxu0 %v1210
  %1222 = vmatprep.subr.mxu0 0.0
  %1223 = vmatpush1.msra.mxu0 %v1211
  %1224 = vmatprep.subr.mxu0 0.0
  %1225 = vmatpush1.msra.mxu0 %v1212
  %1226 = vmatprep.subr.mxu0 0.0
  %1227 = vmatpush1.msra.mxu0 %v1213
  %1228 = vmatprep.subr.mxu0 0.0
  %1229 = vmatpush1.msra.mxu0 0.0
  %1230 = vmatprep.subr.mxu0 0.0
  %1231 = vmatpush1.msra.mxu0 0.0
  %1232 = vmatprep.subr.mxu0 0.0
  %1233 = vmatpush1.msra.mxu0 0.0
  %1234 = vmatprep.subr.mxu0 0.0
  %1235 = vmatpush1.msra.mxu0 0.0
  %1236 = vmatprep.subr.mxu0 0.0
  %1237 = vmatpush1.msra.mxu0 0.0
  %1238 = vmatprep.subr.mxu0 0.0
  %1239 = vmatpush1.msra.mxu0 0.0
  %1240 = vmatprep.subr.mxu0 0.0
  %1241 = vmatpush1.msra.mxu0 0.0
  %1242 = vmatprep.subr.mxu0 0.0
  %1243 = vmatpush1.msra.mxu0 0.0
  %1244 = vmatprep.subr.mxu0 0.0
  %1245 = vmatpush1.msra.mxu0 0.0
  %1246 = vmatprep.subr.mxu0 0.0
  %1247 = vmatpush1.msra.mxu0 0.0
  %1248 = vmatprep.subr.mxu0 0.0
  %1249 = vmatpush1.msra.mxu0 0.0
  %1250 = vmatprep.subr.mxu0 0.0
  %1251 = vmatpush1.msra.mxu0 0.0
  %1252 = vmatprep.subr.mxu0 0.0
  %1253 = vmatpush1.msra.mxu0 0.0
  %1254 = vmatprep.subr.mxu0 0.0
  %1255 = vmatpush1.msra.mxu0 0.0
  %1256 = vmatprep.subr.mxu0 0.0
  %1257 = vmatpush1.msra.mxu0 0.0
  %1258 = vmatprep.subr.mxu0 0.0
  %1259 = vmatpush1.msra.mxu0 0.0
  %1260 = vmatprep.subr.mxu0 0.0
  %1261 = vmatpush1.msra.mxu0 0.0
  %1262 = vmatprep.subr.mxu0 0.0
  %1263 = vmatpush1.msra.mxu0 0.0
  %1264 = vmatprep.subr.mxu0 0.0
  %1265 = vmatpush1.msra.mxu0 0.0
  %1266 = vmatprep.subr.mxu0 0.0
  %1267 = vmatpush1.msra.mxu0 0.0
  %1268 = vmatprep.subr.mxu0 0.0
  %1269 = vmatpush1.msra.mxu0 0.0
  %1270 = vmatprep.subr.mxu0 0.0
  %1271 = vmatpush1.msra.mxu0 0.0
  %1272 = vmatprep.subr.mxu0 0.0
  %1273 = vmatpush1.msra.mxu0 0.0
  %1274 = vmatprep.subr.mxu0 0.0
  %1275 = vmatpush1.msra.mxu0 0.0
  %1276 = vmatprep.subr.mxu0 0.0
  %1277 = vmatpush1.msra.mxu0 0.0
  %1278 = vmatprep.subr.mxu0 0.0
  %1279 = vmatpush1.msra.mxu0 0.0
  %1280 = vmatprep.subr.mxu0 0.0
  %1281 = vmatpush1.msra.mxu0 0.0
  %1282 = vmatprep.subr.mxu0 0.0
  %1283 = vmatpush1.msra.mxu0 0.0
  %1284 = vmatprep.mubr.f32.mxu0 0.0
  %1285 = vmatmul.mubr.f32.gmra.mrb[0].mxu0 %v1215
  %v1286 = vpop.f32.mrb[0].mxu0
  %v1287 = vadd.f32 0.0, %v1286
  %v1288 = vpop.f32.mrb[0].mxu0
  %1289 = vmatprep.mubr.f32.mxu0 0.0
  %1290 = vmatmul.mubr.f32.gmra.mrb[0].mxu0 %v1218
  %v1291 = vpop.f32.mrb[0].mxu0
  %v1292 = vadd.f32 0.0, %v1291
  %v1293 = vpop.f32.mrb[0].mxu0
  %1294 = vdwg.mxu0
  %s1295 = scalar_lea.vmem %s5, 2
  %v1296 = vld [vmem:[%s1295] sm:$0x1]
  %v1298 = vlaneseq
  %v1299 = vshrl.u32 %v1298, 7
  %v1300 = vsub.s32 0, %v1299
  %v1301 = vrot.slane %v1296, %v1300
  %1303 = vmatprep.subr.mxu0 0.0
  %1304 = vmatpush1.msra.mxu0 %v1287
  %1305 = vmatprep.subr.mxu0 0.0
  %1306 = vmatpush1.msra.mxu0 %v1292
  %1307 = vmatprep.subr.mxu0 0.0
  %1308 = vmatpush1.msra.mxu0 0.0
  %1309 = vmatprep.subr.mxu0 0.0
  %1310 = vmatpush1.msra.mxu0 0.0
  %1311 = vmatprep.subr.mxu0 0.0
  %1312 = vmatpush1.msra.mxu0 0.0
  %1313 = vmatprep.subr.mxu0 0.0
  %1314 = vmatpush1.msra.mxu0 0.0
  %1315 = vmatprep.subr.mxu0 0.0
  %1316 = vmatpush1.msra.mxu0 0.0
  %1317 = vmatprep.subr.mxu0 0.0
  %1318 = vmatpush1.msra.mxu0 0.0
  %1319 = vmatprep.subr.mxu0 0.0
  %1320 = vmatpush1.msra.mxu0 0.0
  %1321 = vmatprep.subr.mxu0 0.0
  %1322 = vmatpush1.msra.mxu0 0.0
  %1323 = vmatprep.subr.mxu0 0.0
  %1324 = vmatpush1.msra.mxu0 0.0
  %1325 = vmatprep.subr.mxu0 0.0
  %1326 = vmatpush1.msra.mxu0 0.0
  %1327 = vmatprep.subr.mxu0 0.0
  %1328 = vmatpush1.msra.mxu0 0.0
  %1329 = vmatprep.subr.mxu0 0.0
  %1330 = vmatpush1.msra.mxu0 0.0
  %1331 = vmatprep.subr.mxu0 0.0
  %1332 = vmatpush1.msra.mxu0 0.0
  %1333 = vmatprep.subr.mxu0 0.0
  %1334 = vmatpush1.msra.mxu0 0.0
  %1335 = vmatprep.subr.mxu0 0.0
  %1336 = vmatpush1.msra.mxu0 0.0
  %1337 = vmatprep.subr.mxu0 0.0
  %1338 = vmatpush1.msra.mxu0 0.0
  %1339 = vmatprep.subr.mxu0 0.0
  %1340 = vmatpush1.msra.mxu0 0.0
  %1341 = vmatprep.subr.mxu0 0.0
  %1342 = vmatpush1.msra.mxu0 0.0
  %1343 = vmatprep.subr.mxu0 0.0
  %1344 = vmatpush1.msra.mxu0 0.0
  %1345 = vmatprep.subr.mxu0 0.0
  %1346 = vmatpush1.msra.mxu0 0.0
  %1347 = vmatprep.subr.mxu0 0.0
  %1348 = vmatpush1.msra.mxu0 0.0
  %1349 = vmatprep.subr.mxu0 0.0
  %1350 = vmatpush1.msra.mxu0 0.0
  %1351 = vmatprep.subr.mxu0 0.0
  %1352 = vmatpush1.msra.mxu0 0.0
  %1353 = vmatprep.subr.mxu0 0.0
  %1354 = vmatpush1.msra.mxu0 0.0
  %1355 = vmatprep.subr.mxu0 0.0
  %1356 = vmatpush1.msra.mxu0 0.0
  %1357 = vmatprep.subr.mxu0 0.0
  %1358 = vmatpush1.msra.mxu0 0.0
  %1359 = vmatprep.subr.mxu0 0.0
  %1360 = vmatpush1.msra.mxu0 0.0
  %1361 = vmatprep.subr.mxu0 0.0
  %1362 = vmatpush1.msra.mxu0 0.0
  %1363 = vmatprep.subr.mxu0 0.0
  %1364 = vmatpush1.msra.mxu0 0.0
  %1365 = vmatprep.subr.mxu0 0.0
  %1366 = vmatpush1.msra.mxu0 0.0
  %1367 = vmatprep.mubr.f32.mxu0 0.0
  %1368 = vmatmul.mubr.f32.gmra.mrb[0].mxu0 %v1127
  %v1369 = vpop.f32.mrb[0].mxu0
  %v1370 = vadd.f32 %v1301, %v1369
  %v1371 = vpop.f32.mrb[0].mxu0
  %1372 = vmatprep.mubr.f32.mxu0 0.0
  %1373 = vmatmul.mubr.f32.gmra.mrb[0].mxu0 %v1130
  %v1374 = vpop.f32.mrb[0].mxu0
  %v1375 = vadd.f32 %v1301, %v1374
  %v1376 = vpop.f32.mrb[0].mxu0
  %1377 = vdwg.mxu0
  %v1378 = vmax.f32 %v1370, 0.0
  %v1379 = vmax.f32 %v1375, 0.0
  %v1380 = vadd.f32 %v153, %v598
  %v1381 = vadd.f32 %v154, %v599
  %v1382 = vadd.f32 %v1380, %v1039
  %v1383 = vadd.f32 %v1381, %v1040
  %v1384 = vmul.f32 %v598, -0.5
  %v1385 = vmul.f32 %v599, -0.5
  %v1386 = vadd.f32 %v153, %v1384
  %v1387 = vadd.f32 %v154, %v1385
  %v1388 = vmul.f32 %v1039, -0.5
  %v1389 = vmul.f32 %v1040, -0.5
  %v1390 = vadd.f32 %v1386, %v1388
  %v1391 = vadd.f32 %v1387, %v1389
  %v1392 = vadd.f32 %v496, %v937
  %v1393 = vadd.f32 %v497, %v938
  %v1394 = vadd.f32 %v1392, %v1378
  %v1395 = vadd.f32 %v1393, %v1379
  %v1396 = vmul.f32 %v937, -0.5
  %v1397 = vmul.f32 %v938, -0.5
  %v1398 = vadd.f32 %v496, %v1396
  %v1399 = vadd.f32 %v497, %v1397
  %v1400 = vmul.f32 %v1378, -0.5
  %v1401 = vmul.f32 %v1379, -0.5
  %v1402 = vadd.f32 %v1398, %v1400
  %v1403 = vadd.f32 %v1399, %v1401
  %v1405 = vsel %vm59, %v1382, 0
  %v1408 = vsel %vm59, %v1383, 0
  %1410 = vmatprep.subr.mxu0 0.0
  %1411 = vmatpush1.msra.mxu0 %v1394
  %1412 = vmatprep.subr.mxu0 0.0
  %1413 = vmatpush1.msra.mxu0 %v1395
  %1414 = vmatprep.subr.mxu0 0.0
  %1415 = vmatpush1.msra.mxu0 0.0
  %1416 = vmatprep.subr.mxu0 0.0
  %1417 = vmatpush1.msra.mxu0 0.0
  %1418 = vmatprep.subr.mxu0 0.0
  %1419 = vmatpush1.msra.mxu0 0.0
  %1420 = vmatprep.subr.mxu0 0.0
  %1421 = vmatpush1.msra.mxu0 0.0
  %1422 = vmatprep.subr.mxu0 0.0
  %1423 = vmatpush1.msra.mxu0 0.0
  %1424 = vmatprep.subr.mxu0 0.0
  %1425 = vmatpush1.msra.mxu0 0.0
  %1426 = vmatprep.subr.mxu0 0.0
  %1427 = vmatpush1.msra.mxu0 0.0
  %1428 = vmatprep.subr.mxu0 0.0
  %1429 = vmatpush1.msra.mxu0 0.0
  %1430 = vmatprep.subr.mxu0 0.0
  %1431 = vmatpush1.msra.mxu0 0.0
  %1432 = vmatprep.subr.mxu0 0.0
  %1433 = vmatpush1.msra.mxu0 0.0
  %1434 = vmatprep.subr.mxu0 0.0
  %1435 = vmatpush1.msra.mxu0 0.0
  %1436 = vmatprep.subr.mxu0 0.0
  %1437 = vmatpush1.msra.mxu0 0.0
  %1438 = vmatprep.subr.mxu0 0.0
  %1439 = vmatpush1.msra.mxu0 0.0
  %1440 = vmatprep.subr.mxu0 0.0
  %1441 = vmatpush1.msra.mxu0 0.0
  %1442 = vmatprep.subr.mxu0 0.0
  %1443 = vmatpush1.msra.mxu0 0.0
  %1444 = vmatprep.subr.mxu0 0.0
  %1445 = vmatpush1.msra.mxu0 0.0
  %1446 = vmatprep.subr.mxu0 0.0
  %1447 = vmatpush1.msra.mxu0 0.0
  %1448 = vmatprep.subr.mxu0 0.0
  %1449 = vmatpush1.msra.mxu0 0.0
  %1450 = vmatprep.subr.mxu0 0.0
  %1451 = vmatpush1.msra.mxu0 0.0
  %1452 = vmatprep.subr.mxu0 0.0
  %1453 = vmatpush1.msra.mxu0 0.0
  %1454 = vmatprep.subr.mxu0 0.0
  %1455 = vmatpush1.msra.mxu0 0.0
  %1456 = vmatprep.subr.mxu0 0.0
  %1457 = vmatpush1.msra.mxu0 0.0
  %1458 = vmatprep.subr.mxu0 0.0
  %1459 = vmatpush1.msra.mxu0 0.0
  %1460 = vmatprep.subr.mxu0 0.0
  %1461 = vmatpush1.msra.mxu0 0.0
  %1462 = vmatprep.subr.mxu0 0.0
  %1463 = vmatpush1.msra.mxu0 0.0
  %1464 = vmatprep.subr.mxu0 0.0
  %1465 = vmatpush1.msra.mxu0 0.0
  %1466 = vmatprep.subr.mxu0 0.0
  %1467 = vmatpush1.msra.mxu0 0.0
  %1468 = vmatprep.subr.mxu0 0.0
  %1469 = vmatpush1.msra.mxu0 0.0
  %1470 = vmatprep.subr.mxu0 0.0
  %1471 = vmatpush1.msra.mxu0 0.0
  %1472 = vmatprep.subr.mxu0 0.0
  %1473 = vmatpush1.msra.mxu0 0.0
  %1474 = vmatprep.mubr.f32.mxu0 0.0
  %1475 = vmatmul.mubr.f32.gmra.mrb[0].mxu0 %v1405
  %v1476 = vpop.f32.mrb[0].mxu0
  %v1477 = vadd.f32 0.0, %v1476
  %v1478 = vpop.f32.mrb[0].mxu0
  %1479 = vmatprep.mubr.f32.mxu0 0.0
  %1480 = vmatmul.mubr.f32.gmra.mrb[0].mxu0 %v1408
  %v1481 = vpop.f32.mrb[0].mxu0
  %v1482 = vadd.f32 0.0, %v1481
  %v1483 = vpop.f32.mrb[0].mxu0
  %1484 = vdwg.mxu0
  %v1486 = vsel %vm59, %v1390, 0
  %v1489 = vsel %vm59, %v1391, 0
  %1491 = vmatprep.subr.mxu0 0.0
  %1492 = vmatpush1.msra.mxu0 %v1402
  %1493 = vmatprep.subr.mxu0 0.0
  %1494 = vmatpush1.msra.mxu0 %v1403
  %1495 = vmatprep.subr.mxu0 0.0
  %1496 = vmatpush1.msra.mxu0 0.0
  %1497 = vmatprep.subr.mxu0 0.0
  %1498 = vmatpush1.msra.mxu0 0.0
  %1499 = vmatprep.subr.mxu0 0.0
  %1500 = vmatpush1.msra.mxu0 0.0
  %1501 = vmatprep.subr.mxu0 0.0
  %1502 = vmatpush1.msra.mxu0 0.0
  %1503 = vmatprep.subr.mxu0 0.0
  %1504 = vmatpush1.msra.mxu0 0.0
  %1505 = vmatprep.subr.mxu0 0.0
  %1506 = vmatpush1.msra.mxu0 0.0
  %1507 = vmatprep.subr.mxu0 0.0
  %1508 = vmatpush1.msra.mxu0 0.0
  %1509 = vmatprep.subr.mxu0 0.0
  %1510 = vmatpush1.msra.mxu0 0.0
  %1511 = vmatprep.subr.mxu0 0.0
  %1512 = vmatpush1.msra.mxu0 0.0
  %1513 = vmatprep.subr.mxu0 0.0
  %1514 = vmatpush1.msra.mxu0 0.0
  %1515 = vmatprep.subr.mxu0 0.0
  %1516 = vmatpush1.msra.mxu0 0.0
  %1517 = vmatprep.subr.mxu0 0.0
  %1518 = vmatpush1.msra.mxu0 0.0
  %1519 = vmatprep.subr.mxu0 0.0
  %1520 = vmatpush1.msra.mxu0 0.0
  %1521 = vmatprep.subr.mxu0 0.0
  %1522 = vmatpush1.msra.mxu0 0.0
  %1523 = vmatprep.subr.mxu0 0.0
  %1524 = vmatpush1.msra.mxu0 0.0
  %1525 = vmatprep.subr.mxu0 0.0
  %1526 = vmatpush1.msra.mxu0 0.0
  %1527 = vmatprep.subr.mxu0 0.0
  %1528 = vmatpush1.msra.mxu0 0.0
  %1529 = vmatprep.subr.mxu0 0.0
  %1530 = vmatpush1.msra.mxu0 0.0
  %1531 = vmatprep.subr.mxu0 0.0
  %1532 = vmatpush1.msra.mxu0 0.0
  %1533 = vmatprep.subr.mxu0 0.0
  %1534 = vmatpush1.msra.mxu0 0.0
  %1535 = vmatprep.subr.mxu0 0.0
  %1536 = vmatpush1.msra.mxu0 0.0
  %1537 = vmatprep.subr.mxu0 0.0
  %1538 = vmatpush1.msra.mxu0 0.0
  %1539 = vmatprep.subr.mxu0 0.0
  %1540 = vmatpush1.msra.mxu0 0.0
  %1541 = vmatprep.subr.mxu0 0.0
  %1542 = vmatpush1.msra.mxu0 0.0
  %1543 = vmatprep.subr.mxu0 0.0
  %1544 = vmatpush1.msra.mxu0 0.0
  %1545 = vmatprep.subr.mxu0 0.0
  %1546 = vmatpush1.msra.mxu0 0.0
  %1547 = vmatprep.subr.mxu0 0.0
  %1548 = vmatpush1.msra.mxu0 0.0
  %1549 = vmatprep.subr.mxu0 0.0
  %1550 = vmatpush1.msra.mxu0 0.0
  %1551 = vmatprep.subr.mxu0 0.0
  %1552 = vmatpush1.msra.mxu0 0.0
  %1553 = vmatprep.subr.mxu0 0.0
  %1554 = vmatpush1.msra.mxu0 0.0
  %1555 = vmatprep.mubr.f32.mxu0 0.0
  %1556 = vmatmul.mubr.f32.gmra.mrb[0].mxu0 %v1486
  %v1557 = vpop.f32.mrb[0].mxu0
  %v1558 = vadd.f32 0.0, %v1557
  %v1559 = vpop.f32.mrb[0].mxu0
  %1560 = vmatprep.mubr.f32.mxu0 0.0
  %1561 = vmatmul.mubr.f32.gmra.mrb[0].mxu0 %v1489
  %v1562 = vpop.f32.mrb[0].mxu0
  %v1563 = vadd.f32 0.0, %v1562
  %v1564 = vpop.f32.mrb[0].mxu0
  %1565 = vdwg.mxu0
  %v1566 = vmul.f32 %v1477, 0.33333334
  %v1567 = vmul.f32 %v1482, 0.33333334
  %v1568 = vmul.f32 %v1558, 0.33333334
  %v1569 = vmul.f32 %v1563, 0.33333334
  %v1570 = vadd.f32 %v1566, %v1568
  %v1571 = vadd.f32 %v1567, %v1569
  %v1572 = vadd.f32 %v1570, %v1568
  %v1573 = vadd.f32 %v1571, %v1569
  %v1574 = vmul.f32 %v1558, -0.16666667
  %v1575 = vmul.f32 %v1563, -0.16666667
  %v1576 = vadd.f32 %v1566, %v1574
  %v1577 = vadd.f32 %v1567, %v1575
  %v1578 = vadd.f32 %v1576, %v1574
  %v1579 = vadd.f32 %v1577, %v1575
  %v1580 = vld [vmem:[%s6] sm:$0xff]
  %v1581 = vld [vmem:[%s6 + $0x8] sm:$0xff]
  %v1582 = vld [vmem:[%s6 + $0x10] sm:$0xff]
  %v1583 = vld [vmem:[%s6 + $0x18] sm:$0xff]
  %s1584 = scalar_lea.vmem %s6, 32
  %v1585 = vld [vmem:[%s1584] sm:$0xff]
  %v1586 = vld [vmem:[%s1584 + $0x8] sm:$0xff]
  %v1587 = vld [vmem:[%s1584 + $0x10] sm:$0xff]
  %v1588 = vld [vmem:[%s1584 + $0x18] sm:$0xff]
  %s1589 = scalar_lea.vmem %s6, 64
  %v1590 = vld [vmem:[%s1589] sm:$0xff]
  %v1591 = vld [vmem:[%s1589 + $0x8] sm:$0xff]
  %v1592 = vld [vmem:[%s1589 + $0x10] sm:$0xff]
  %v1593 = vld [vmem:[%s1589 + $0x18] sm:$0xff]
  %v1594 = vadd.f32 %v1580, %v1585
  %v1595 = vadd.f32 %v1581, %v1586
  %v1596 = vadd.f32 %v1582, %v1587
  %v1597 = vadd.f32 %v1583, %v1588
  %v1598 = vadd.f32 %v1594, %v1590
  %v1599 = vadd.f32 %v1595, %v1591
  %v1600 = vadd.f32 %v1596, %v1592
  %v1601 = vadd.f32 %v1597, %v1593
  %v1602 = vmul.f32 %v1585, -0.5
  %v1603 = vmul.f32 %v1586, -0.5
  %v1604 = vmul.f32 %v1587, -0.5
  %v1605 = vmul.f32 %v1588, -0.5
  %v1606 = vadd.f32 %v1580, %v1602
  %v1607 = vadd.f32 %v1581, %v1603
  %v1608 = vadd.f32 %v1582, %v1604
  %v1609 = vadd.f32 %v1583, %v1605
  %v1610 = vmul.f32 %v1590, -0.5
  %v1611 = vmul.f32 %v1591, -0.5
  %v1612 = vmul.f32 %v1592, -0.5
  %v1613 = vmul.f32 %v1593, -0.5
  %v1614 = vadd.f32 %v1606, %v1610
  %v1615 = vadd.f32 %v1607, %v1611
  %v1616 = vadd.f32 %v1608, %v1612
  %v1617 = vadd.f32 %v1609, %v1613
  %v1618 = vadd.f32 %v1572, %v1578
  %v1619 = vadd.f32 %v1573, %v1579
  %v1620 = vadd.f32 %v1618, %v1578
  %v1621 = vadd.f32 %v1619, %v1579
  %v1622 = vmul.f32 %v1578, -0.5
  %v1623 = vmul.f32 %v1579, -0.5
  %v1624 = vadd.f32 %v1572, %v1622
  %v1625 = vadd.f32 %v1573, %v1623
  %v1626 = vadd.f32 %v1624, %v1622
  %v1627 = vadd.f32 %v1625, %v1623
  %v1629 = vsel %vm332, %v1620, 0
  %v1632 = vsel %vm332, %v1621, 0
  %1634 = vmatprep.subr.mxu0 0.0
  %1635 = vmatpush1.msra.mxu0 %v1598
  %1636 = vmatprep.subr.mxu0 0.0
  %1637 = vmatpush1.msra.mxu0 %v1599
  %1638 = vmatprep.subr.mxu0 0.0
  %1639 = vmatpush1.msra.mxu0 %v1600
  %1640 = vmatprep.subr.mxu0 0.0
  %1641 = vmatpush1.msra.mxu0 %v1601
  %1642 = vmatprep.subr.mxu0 0.0
  %1643 = vmatpush1.msra.mxu0 0.0
  %1644 = vmatprep.subr.mxu0 0.0
  %1645 = vmatpush1.msra.mxu0 0.0
  %1646 = vmatprep.subr.mxu0 0.0
  %1647 = vmatpush1.msra.mxu0 0.0
  %1648 = vmatprep.subr.mxu0 0.0
  %1649 = vmatpush1.msra.mxu0 0.0
  %1650 = vmatprep.subr.mxu0 0.0
  %1651 = vmatpush1.msra.mxu0 0.0
  %1652 = vmatprep.subr.mxu0 0.0
  %1653 = vmatpush1.msra.mxu0 0.0
  %1654 = vmatprep.subr.mxu0 0.0
  %1655 = vmatpush1.msra.mxu0 0.0
  %1656 = vmatprep.subr.mxu0 0.0
  %1657 = vmatpush1.msra.mxu0 0.0
  %1658 = vmatprep.subr.mxu0 0.0
  %1659 = vmatpush1.msra.mxu0 0.0
  %1660 = vmatprep.subr.mxu0 0.0
  %1661 = vmatpush1.msra.mxu0 0.0
  %1662 = vmatprep.subr.mxu0 0.0
  %1663 = vmatpush1.msra.mxu0 0.0
  %1664 = vmatprep.subr.mxu0 0.0
  %1665 = vmatpush1.msra.mxu0 0.0
  %1666 = vmatprep.subr.mxu0 0.0
  %1667 = vmatpush1.msra.mxu0 0.0
  %1668 = vmatprep.subr.mxu0 0.0
  %1669 = vmatpush1.msra.mxu0 0.0
  %1670 = vmatprep.subr.mxu0 0.0
  %1671 = vmatpush1.msra.mxu0 0.0
  %1672 = vmatprep.subr.mxu0 0.0
  %1673 = vmatpush1.msra.mxu0 0.0
  %1674 = vmatprep.subr.mxu0 0.0
  %1675 = vmatpush1.msra.mxu0 0.0
  %1676 = vmatprep.subr.mxu0 0.0
  %1677 = vmatpush1.msra.mxu0 0.0
  %1678 = vmatprep.subr.mxu0 0.0
  %1679 = vmatpush1.msra.mxu0 0.0
  %1680 = vmatprep.subr.mxu0 0.0
  %1681 = vmatpush1.msra.mxu0 0.0
  %1682 = vmatprep.subr.mxu0 0.0
  %1683 = vmatpush1.msra.mxu0 0.0
  %1684 = vmatprep.subr.mxu0 0.0
  %1685 = vmatpush1.msra.mxu0 0.0
  %1686 = vmatprep.subr.mxu0 0.0
  %1687 = vmatpush1.msra.mxu0 0.0
  %1688 = vmatprep.subr.mxu0 0.0
  %1689 = vmatpush1.msra.mxu0 0.0
  %1690 = vmatprep.subr.mxu0 0.0
  %1691 = vmatpush1.msra.mxu0 0.0
  %1692 = vmatprep.subr.mxu0 0.0
  %1693 = vmatpush1.msra.mxu0 0.0
  %1694 = vmatprep.subr.mxu0 0.0
  %1695 = vmatpush1.msra.mxu0 0.0
  %1696 = vmatprep.subr.mxu0 0.0
  %1697 = vmatpush1.msra.mxu0 0.0
  %1698 = vmatprep.mubr.f32.mxu0 0.0
  %1699 = vmatmul.mubr.f32.gmra.mrb[0].mxu0 %v1629
  %v1700 = vpop.f32.mrb[0].mxu0
  %v1701 = vadd.f32 0.0, %v1700
  %v1702 = vpop.f32.mrb[0].mxu0
  %1703 = vmatprep.mubr.f32.mxu0 0.0
  %1704 = vmatmul.mubr.f32.gmra.mrb[0].mxu0 %v1632
  %v1705 = vpop.f32.mrb[0].mxu0
  %v1706 = vadd.f32 0.0, %v1705
  %v1707 = vpop.f32.mrb[0].mxu0
  %1708 = vdwg.mxu0
  %v1710 = vsel %vm332, %v1626, 0
  %v1713 = vsel %vm332, %v1627, 0
  %1715 = vmatprep.subr.mxu0 0.0
  %1716 = vmatpush1.msra.mxu0 %v1614
  %1717 = vmatprep.subr.mxu0 0.0
  %1718 = vmatpush1.msra.mxu0 %v1615
  %1719 = vmatprep.subr.mxu0 0.0
  %1720 = vmatpush1.msra.mxu0 %v1616
  %1721 = vmatprep.subr.mxu0 0.0
  %1722 = vmatpush1.msra.mxu0 %v1617
  %1723 = vmatprep.subr.mxu0 0.0
  %1724 = vmatpush1.msra.mxu0 0.0
  %1725 = vmatprep.subr.mxu0 0.0
  %1726 = vmatpush1.msra.mxu0 0.0
  %1727 = vmatprep.subr.mxu0 0.0
  %1728 = vmatpush1.msra.mxu0 0.0
  %1729 = vmatprep.subr.mxu0 0.0
  %1730 = vmatpush1.msra.mxu0 0.0
  %1731 = vmatprep.subr.mxu0 0.0
  %1732 = vmatpush1.msra.mxu0 0.0
  %1733 = vmatprep.subr.mxu0 0.0
  %1734 = vmatpush1.msra.mxu0 0.0
  %1735 = vmatprep.subr.mxu0 0.0
  %1736 = vmatpush1.msra.mxu0 0.0
  %1737 = vmatprep.subr.mxu0 0.0
  %1738 = vmatpush1.msra.mxu0 0.0
  %1739 = vmatprep.subr.mxu0 0.0
  %1740 = vmatpush1.msra.mxu0 0.0
  %1741 = vmatprep.subr.mxu0 0.0
  %1742 = vmatpush1.msra.mxu0 0.0
  %1743 = vmatprep.subr.mxu0 0.0
  %1744 = vmatpush1.msra.mxu0 0.0
  %1745 = vmatprep.subr.mxu0 0.0
  %1746 = vmatpush1.msra.mxu0 0.0
  %1747 = vmatprep.subr.mxu0 0.0
  %1748 = vmatpush1.msra.mxu0 0.0
  %1749 = vmatprep.subr.mxu0 0.0
  %1750 = vmatpush1.msra.mxu0 0.0
  %1751 = vmatprep.subr.mxu0 0.0
  %1752 = vmatpush1.msra.mxu0 0.0
  %1753 = vmatprep.subr.mxu0 0.0
  %1754 = vmatpush1.msra.mxu0 0.0
  %1755 = vmatprep.subr.mxu0 0.0
  %1756 = vmatpush1.msra.mxu0 0.0
  %1757 = vmatprep.subr.mxu0 0.0
  %1758 = vmatpush1.msra.mxu0 0.0
  %1759 = vmatprep.subr.mxu0 0.0
  %1760 = vmatpush1.msra.mxu0 0.0
  %1761 = vmatprep.subr.mxu0 0.0
  %1762 = vmatpush1.msra.mxu0 0.0
  %1763 = vmatprep.subr.mxu0 0.0
  %1764 = vmatpush1.msra.mxu0 0.0
  %1765 = vmatprep.subr.mxu0 0.0
  %1766 = vmatpush1.msra.mxu0 0.0
  %1767 = vmatprep.subr.mxu0 0.0
  %1768 = vmatpush1.msra.mxu0 0.0
  %1769 = vmatprep.subr.mxu0 0.0
  %1770 = vmatpush1.msra.mxu0 0.0
  %1771 = vmatprep.subr.mxu0 0.0
  %1772 = vmatpush1.msra.mxu0 0.0
  %1773 = vmatprep.subr.mxu0 0.0
  %1774 = vmatpush1.msra.mxu0 0.0
  %1775 = vmatprep.subr.mxu0 0.0
  %1776 = vmatpush1.msra.mxu0 0.0
  %1777 = vmatprep.subr.mxu0 0.0
  %1778 = vmatpush1.msra.mxu0 0.0
  %1779 = vmatprep.mubr.f32.mxu0 0.0
  %1780 = vmatmul.mubr.f32.gmra.mrb[0].mxu0 %v1710
  %v1781 = vpop.f32.mrb[0].mxu0
  %v1782 = vadd.f32 0.0, %v1781
  %v1783 = vpop.f32.mrb[0].mxu0
  %1784 = vmatprep.mubr.f32.mxu0 0.0
  %1785 = vmatmul.mubr.f32.gmra.mrb[0].mxu0 %v1713
  %v1786 = vpop.f32.mrb[0].mxu0
  %v1787 = vadd.f32 0.0, %v1786
  %v1788 = vpop.f32.mrb[0].mxu0
  %1789 = vdwg.mxu0
  %v1790 = vmul.f32 %v1701, 0.33333334
  %v1791 = vmul.f32 %v1706, 0.33333334
  %v1792 = vmul.f32 %v1782, 0.33333334
  %v1793 = vmul.f32 %v1787, 0.33333334
  %v1794 = vadd.f32 %v1790, %v1792
  %v1795 = vadd.f32 %v1791, %v1793
  %v1796 = vadd.f32 %v1794, %v1792
  %v1797 = vadd.f32 %v1795, %v1793
  %v1798 = vmul.f32 %v1782, -0.16666667
  %v1799 = vmul.f32 %v1787, -0.16666667
  %v1800 = vadd.f32 %v1790, %v1798
  %v1801 = vadd.f32 %v1791, %v1799
  %v1802 = vadd.f32 %v1800, %v1798
  %v1803 = vadd.f32 %v1801, %v1799
  %v1804 = vmax.f32 %v1796, 0.0
  %v1805 = vmax.f32 %v1797, 0.0
  %v1806 = vmax.f32 %v1802, 0.0
  %v1807 = vmax.f32 %v1803, 0.0
  %v1808 = vadd.f32 %v1804, %v1806
  %v1809 = vadd.f32 %v1805, %v1807
  %v1810 = vadd.f32 %v1808, %v1806
  %v1811 = vadd.f32 %v1809, %v1807
  %v1812 = vmul.f32 %v1806, -0.5
  %v1813 = vmul.f32 %v1807, -0.5
  %v1814 = vadd.f32 %v1804, %v1812
  %v1815 = vadd.f32 %v1805, %v1813
  %v1816 = vadd.f32 %v1814, %v1812
  %v1817 = vadd.f32 %v1815, %v1813
  %1818 = vmatprep.subr.mxu0 0.0
  %1819 = vmatpush1.msra.mxu0 %v1810
  %1820 = vmatprep.subr.mxu0 0.0
  %1821 = vmatpush1.msra.mxu0 %v1811
  %1822 = vmatprep.subr.mxu0 0.0
  %1823 = vmatpush1.msra.mxu0 0.0
  %1824 = vmatprep.subr.mxu0 0.0
  %1825 = vmatpush1.msra.mxu0 0.0
  %1826 = vmatprep.subr.mxu0 0.0
  %1827 = vmatpush1.msra.mxu0 0.0
  %1828 = vmatprep.subr.mxu0 0.0
  %1829 = vmatpush1.msra.mxu0 0.0
  %1830 = vmatprep.subr.mxu0 0.0
  %1831 = vmatpush1.msra.mxu0 0.0
  %1832 = vmatprep.subr.mxu0 0.0
  %1833 = vmatpush1.msra.mxu0 0.0
  %1834 = vmatprep.subr.mxu0 0.0
  %1835 = vmatpush1.msra.mxu0 0.0
  %1836 = vmatprep.subr.mxu0 0.0
  %1837 = vmatpush1.msra.mxu0 0.0
  %1838 = vmatprep.subr.mxu0 0.0
  %1839 = vmatpush1.msra.mxu0 0.0
  %1840 = vmatprep.subr.mxu0 0.0
  %1841 = vmatpush1.msra.mxu0 0.0
  %1842 = vmatprep.subr.mxu0 0.0
  %1843 = vmatpush1.msra.mxu0 0.0
  %1844 = vmatprep.subr.mxu0 0.0
  %1845 = vmatpush1.msra.mxu0 0.0
  %1846 = vmatprep.subr.mxu0 0.0
  %1847 = vmatpush1.msra.mxu0 0.0
  %1848 = vmatprep.subr.mxu0 0.0
  %1849 = vmatpush1.msra.mxu0 0.0
  %1850 = vmatprep.subr.mxu0 0.0
  %1851 = vmatpush1.msra.mxu0 0.0
  %1852 = vmatprep.subr.mxu0 0.0
  %1853 = vmatpush1.msra.mxu0 0.0
  %1854 = vmatprep.subr.mxu0 0.0
  %1855 = vmatpush1.msra.mxu0 0.0
  %1856 = vmatprep.subr.mxu0 0.0
  %1857 = vmatpush1.msra.mxu0 0.0
  %1858 = vmatprep.subr.mxu0 0.0
  %1859 = vmatpush1.msra.mxu0 0.0
  %1860 = vmatprep.subr.mxu0 0.0
  %1861 = vmatpush1.msra.mxu0 0.0
  %1862 = vmatprep.subr.mxu0 0.0
  %1863 = vmatpush1.msra.mxu0 0.0
  %1864 = vmatprep.subr.mxu0 0.0
  %1865 = vmatpush1.msra.mxu0 0.0
  %1866 = vmatprep.subr.mxu0 0.0
  %1867 = vmatpush1.msra.mxu0 0.0
  %1868 = vmatprep.subr.mxu0 0.0
  %1869 = vmatpush1.msra.mxu0 0.0
  %1870 = vmatprep.subr.mxu0 0.0
  %1871 = vmatpush1.msra.mxu0 0.0
  %1872 = vmatprep.subr.mxu0 0.0
  %1873 = vmatpush1.msra.mxu0 0.0
  %1874 = vmatprep.subr.mxu0 0.0
  %1875 = vmatpush1.msra.mxu0 0.0
  %1876 = vmatprep.subr.mxu0 0.0
  %1877 = vmatpush1.msra.mxu0 0.0
  %1878 = vmatprep.subr.mxu0 0.0
  %1879 = vmatpush1.msra.mxu0 0.0
  %1880 = vmatprep.subr.mxu0 0.0
  %1881 = vmatpush1.msra.mxu0 0.0
  %1882 = vmatprep.mubr.f32.mxu0 0.0
  %1883 = vmatmul.mubr.f32.gmra.mrb[0].mxu0 %v1405
  %v1884 = vpop.f32.mrb[0].mxu0
  %v1885 = vadd.f32 0.0, %v1884
  %v1886 = vpop.f32.mrb[0].mxu0
  %1887 = vmatprep.mubr.f32.mxu0 0.0
  %1888 = vmatmul.mubr.f32.gmra.mrb[0].mxu0 %v1408
  %v1889 = vpop.f32.mrb[0].mxu0
  %v1890 = vadd.f32 0.0, %v1889
  %v1891 = vpop.f32.mrb[0].mxu0
  %1892 = vdwg.mxu0
  %1893 = vmatprep.subr.mxu0 0.0
  %1894 = vmatpush1.msra.mxu0 %v1816
  %1895 = vmatprep.subr.mxu0 0.0
  %1896 = vmatpush1.msra.mxu0 %v1817
  %1897 = vmatprep.subr.mxu0 0.0
  %1898 = vmatpush1.msra.mxu0 0.0
  %1899 = vmatprep.subr.mxu0 0.0
  %1900 = vmatpush1.msra.mxu0 0.0
  %1901 = vmatprep.subr.mxu0 0.0
  %1902 = vmatpush1.msra.mxu0 0.0
  %1903 = vmatprep.subr.mxu0 0.0
  %1904 = vmatpush1.msra.mxu0 0.0
  %1905 = vmatprep.subr.mxu0 0.0
  %1906 = vmatpush1.msra.mxu0 0.0
  %1907 = vmatprep.subr.mxu0 0.0
  %1908 = vmatpush1.msra.mxu0 0.0
  %1909 = vmatprep.subr.mxu0 0.0
  %1910 = vmatpush1.msra.mxu0 0.0
  %1911 = vmatprep.subr.mxu0 0.0
  %1912 = vmatpush1.msra.mxu0 0.0
  %1913 = vmatprep.subr.mxu0 0.0
  %1914 = vmatpush1.msra.mxu0 0.0
  %1915 = vmatprep.subr.mxu0 0.0
  %1916 = vmatpush1.msra.mxu0 0.0
  %1917 = vmatprep.subr.mxu0 0.0
  %1918 = vmatpush1.msra.mxu0 0.0
  %1919 = vmatprep.subr.mxu0 0.0
  %1920 = vmatpush1.msra.mxu0 0.0
  %1921 = vmatprep.subr.mxu0 0.0
  %1922 = vmatpush1.msra.mxu0 0.0
  %1923 = vmatprep.subr.mxu0 0.0
  %1924 = vmatpush1.msra.mxu0 0.0
  %1925 = vmatprep.subr.mxu0 0.0
  %1926 = vmatpush1.msra.mxu0 0.0
  %1927 = vmatprep.subr.mxu0 0.0
  %1928 = vmatpush1.msra.mxu0 0.0
  %1929 = vmatprep.subr.mxu0 0.0
  %1930 = vmatpush1.msra.mxu0 0.0
  %1931 = vmatprep.subr.mxu0 0.0
  %1932 = vmatpush1.msra.mxu0 0.0
  %1933 = vmatprep.subr.mxu0 0.0
  %1934 = vmatpush1.msra.mxu0 0.0
  %1935 = vmatprep.subr.mxu0 0.0
  %1936 = vmatpush1.msra.mxu0 0.0
  %1937 = vmatprep.subr.mxu0 0.0
  %1938 = vmatpush1.msra.mxu0 0.0
  %1939 = vmatprep.subr.mxu0 0.0
  %1940 = vmatpush1.msra.mxu0 0.0
  %1941 = vmatprep.subr.mxu0 0.0
  %1942 = vmatpush1.msra.mxu0 0.0
  %1943 = vmatprep.subr.mxu0 0.0
  %1944 = vmatpush1.msra.mxu0 0.0
  %1945 = vmatprep.subr.mxu0 0.0
  %1946 = vmatpush1.msra.mxu0 0.0
  %1947 = vmatprep.subr.mxu0 0.0
  %1948 = vmatpush1.msra.mxu0 0.0
  %1949 = vmatprep.subr.mxu0 0.0
  %1950 = vmatpush1.msra.mxu0 0.0
  %1951 = vmatprep.subr.mxu0 0.0
  %1952 = vmatpush1.msra.mxu0 0.0
  %1953 = vmatprep.subr.mxu0 0.0
  %1954 = vmatpush1.msra.mxu0 0.0
  %1955 = vmatprep.subr.mxu0 0.0
  %1956 = vmatpush1.msra.mxu0 0.0
  %1957 = vmatprep.mubr.f32.mxu0 0.0
  %1958 = vmatmul.mubr.f32.gmra.mrb[0].mxu0 %v1486
  %v1959 = vpop.f32.mrb[0].mxu0
  %v1960 = vadd.f32 0.0, %v1959
  %v1961 = vpop.f32.mrb[0].mxu0
  %1962 = vmatprep.mubr.f32.mxu0 0.0
  %1963 = vmatmul.mubr.f32.gmra.mrb[0].mxu0 %v1489
  %v1964 = vpop.f32.mrb[0].mxu0
  %v1965 = vadd.f32 0.0, %v1964
  %v1966 = vpop.f32.mrb[0].mxu0
  %1967 = vdwg.mxu0
  %v1968 = vmul.f32 %v1885, 0.33333334
  %v1969 = vmul.f32 %v1890, 0.33333334
  %v1970 = vmul.f32 %v1960, 0.33333334
  %v1971 = vmul.f32 %v1965, 0.33333334
  %v1972 = vadd.f32 %v1968, %v1970
  %v1973 = vadd.f32 %v1969, %v1971
  %v1974 = vadd.f32 %v1972, %v1970
  %v1975 = vadd.f32 %v1973, %v1971
  %v1976 = vmul.f32 %v1960, -0.16666667
  %v1977 = vmul.f32 %v1965, -0.16666667
  %v1978 = vadd.f32 %v1968, %v1976
  %v1979 = vadd.f32 %v1969, %v1977
  %v1980 = vadd.f32 %v1978, %v1976
  %v1981 = vadd.f32 %v1979, %v1977
  %s1982 = scalar_lea.vmem %s6, 96
  %v1983 = vld [vmem:[%s1982] sm:$0xff]
  %v1984 = vld [vmem:[%s1982 + $0x8] sm:$0xff]
  %v1985 = vld [vmem:[%s1982 + $0x10] sm:$0xff]
  %v1986 = vld [vmem:[%s1982 + $0x18] sm:$0xff]
  %s1987 = scalar_lea.vmem %s6, 128
  %v1988 = vld [vmem:[%s1987] sm:$0xff]
  %v1989 = vld [vmem:[%s1987 + $0x8] sm:$0xff]
  %v1990 = vld [vmem:[%s1987 + $0x10] sm:$0xff]
  %v1991 = vld [vmem:[%s1987 + $0x18] sm:$0xff]
  %s1992 = scalar_lea.vmem %s6, 160
  %v1993 = vld [vmem:[%s1992] sm:$0xff]
  %v1994 = vld [vmem:[%s1992 + $0x8] sm:$0xff]
  %v1995 = vld [vmem:[%s1992 + $0x10] sm:$0xff]
  %v1996 = vld [vmem:[%s1992 + $0x18] sm:$0xff]
  %v1997 = vadd.f32 %v1983, %v1988
  %v1998 = vadd.f32 %v1984, %v1989
  %v1999 = vadd.f32 %v1985, %v1990
  %v2000 = vadd.f32 %v1986, %v1991
  %v2001 = vadd.f32 %v1997, %v1993
  %v2002 = vadd.f32 %v1998, %v1994
  %v2003 = vadd.f32 %v1999, %v1995
  %v2004 = vadd.f32 %v2000, %v1996
  %v2005 = vmul.f32 %v1988, -0.5
  %v2006 = vmul.f32 %v1989, -0.5
  %v2007 = vmul.f32 %v1990, -0.5
  %v2008 = vmul.f32 %v1991, -0.5
  %v2009 = vadd.f32 %v1983, %v2005
  %v2010 = vadd.f32 %v1984, %v2006
  %v2011 = vadd.f32 %v1985, %v2007
  %v2012 = vadd.f32 %v1986, %v2008
  %v2013 = vmul.f32 %v1993, -0.5
  %v2014 = vmul.f32 %v1994, -0.5
  %v2015 = vmul.f32 %v1995, -0.5
  %v2016 = vmul.f32 %v1996, -0.5
  %v2017 = vadd.f32 %v2009, %v2013
  %v2018 = vadd.f32 %v2010, %v2014
  %v2019 = vadd.f32 %v2011, %v2015
  %v2020 = vadd.f32 %v2012, %v2016
  %v2021 = vadd.f32 %v1974, %v1980
  %v2022 = vadd.f32 %v1975, %v1981
  %v2023 = vadd.f32 %v2021, %v1980
  %v2024 = vadd.f32 %v2022, %v1981
  %v2025 = vmul.f32 %v1980, -0.5
  %v2026 = vmul.f32 %v1981, -0.5
  %v2027 = vadd.f32 %v1974, %v2025
  %v2028 = vadd.f32 %v1975, %v2026
  %v2029 = vadd.f32 %v2027, %v2025
  %v2030 = vadd.f32 %v2028, %v2026
  %v2032 = vsel %vm332, %v2023, 0
  %v2035 = vsel %vm332, %v2024, 0
  %2037 = vmatprep.subr.mxu0 0.0
  %2038 = vmatpush1.msra.mxu0 %v2001
  %2039 = vmatprep.subr.mxu0 0.0
  %2040 = vmatpush1.msra.mxu0 %v2002
  %2041 = vmatprep.subr.mxu0 0.0
  %2042 = vmatpush1.msra.mxu0 %v2003
  %2043 = vmatprep.subr.mxu0 0.0
  %2044 = vmatpush1.msra.mxu0 %v2004
  %2045 = vmatprep.subr.mxu0 0.0
  %2046 = vmatpush1.msra.mxu0 0.0
  %2047 = vmatprep.subr.mxu0 0.0
  %2048 = vmatpush1.msra.mxu0 0.0
  %2049 = vmatprep.subr.mxu0 0.0
  %2050 = vmatpush1.msra.mxu0 0.0
  %2051 = vmatprep.subr.mxu0 0.0
  %2052 = vmatpush1.msra.mxu0 0.0
  %2053 = vmatprep.subr.mxu0 0.0
  %2054 = vmatpush1.msra.mxu0 0.0
  %2055 = vmatprep.subr.mxu0 0.0
  %2056 = vmatpush1.msra.mxu0 0.0
  %2057 = vmatprep.subr.mxu0 0.0
  %2058 = vmatpush1.msra.mxu0 0.0
  %2059 = vmatprep.subr.mxu0 0.0
  %2060 = vmatpush1.msra.mxu0 0.0
  %2061 = vmatprep.subr.mxu0 0.0
  %2062 = vmatpush1.msra.mxu0 0.0
  %2063 = vmatprep.subr.mxu0 0.0
  %2064 = vmatpush1.msra.mxu0 0.0
  %2065 = vmatprep.subr.mxu0 0.0
  %2066 = vmatpush1.msra.mxu0 0.0
  %2067 = vmatprep.subr.mxu0 0.0
  %2068 = vmatpush1.msra.mxu0 0.0
  %2069 = vmatprep.subr.mxu0 0.0
  %2070 = vmatpush1.msra.mxu0 0.0
  %2071 = vmatprep.subr.mxu0 0.0
  %2072 = vmatpush1.msra.mxu0 0.0
  %2073 = vmatprep.subr.mxu0 0.0
  %2074 = vmatpush1.msra.mxu0 0.0
  %2075 = vmatprep.subr.mxu0 0.0
  %2076 = vmatpush1.msra.mxu0 0.0
  %2077 = vmatprep.subr.mxu0 0.0
  %2078 = vmatpush1.msra.mxu0 0.0
  %2079 = vmatprep.subr.mxu0 0.0
  %2080 = vmatpush1.msra.mxu0 0.0
  %2081 = vmatprep.subr.mxu0 0.0
  %2082 = vmatpush1.msra.mxu0 0.0
  %2083 = vmatprep.subr.mxu0 0.0
  %2084 = vmatpush1.msra.mxu0 0.0
  %2085 = vmatprep.subr.mxu0 0.0
  %2086 = vmatpush1.msra.mxu0 0.0
  %2087 = vmatprep.subr.mxu0 0.0
  %2088 = vmatpush1.msra.mxu0 0.0
  %2089 = vmatprep.subr.mxu0 0.0
  %2090 = vmatpush1.msra.mxu0 0.0
  %2091 = vmatprep.subr.mxu0 0.0
  %2092 = vmatpush1.msra.mxu0 0.0
  %2093 = vmatprep.subr.mxu0 0.0
  %2094 = vmatpush1.msra.mxu0 0.0
  %2095 = vmatprep.subr.mxu0 0.0
  %2096 = vmatpush1.msra.mxu0 0.0
  %2097 = vmatprep.subr.mxu0 0.0
  %2098 = vmatpush1.msra.mxu0 0.0
  %2099 = vmatprep.subr.mxu0 0.0
  %2100 = vmatpush1.msra.mxu0 0.0
  %2101 = vmatprep.mubr.f32.mxu0 0.0
  %2102 = vmatmul.mubr.f32.gmra.mrb[0].mxu0 %v2032
  %v2103 = vpop.f32.mrb[0].mxu0
  %v2104 = vadd.f32 0.0, %v2103
  %v2105 = vpop.f32.mrb[0].mxu0
  %2106 = vmatprep.mubr.f32.mxu0 0.0
  %2107 = vmatmul.mubr.f32.gmra.mrb[0].mxu0 %v2035
  %v2108 = vpop.f32.mrb[0].mxu0
  %v2109 = vadd.f32 0.0, %v2108
  %v2110 = vpop.f32.mrb[0].mxu0
  %2111 = vdwg.mxu0
  %v2113 = vsel %vm332, %v2029, 0
  %v2116 = vsel %vm332, %v2030, 0
  %2118 = vmatprep.subr.mxu0 0.0
  %2119 = vmatpush1.msra.mxu0 %v2017
  %2120 = vmatprep.subr.mxu0 0.0
  %2121 = vmatpush1.msra.mxu0 %v2018
  %2122 = vmatprep.subr.mxu0 0.0
  %2123 = vmatpush1.msra.mxu0 %v2019
  %2124 = vmatprep.subr.mxu0 0.0
  %2125 = vmatpush1.msra.mxu0 %v2020
  %2126 = vmatprep.subr.mxu0 0.0
  %2127 = vmatpush1.msra.mxu0 0.0
  %2128 = vmatprep.subr.mxu0 0.0
  %2129 = vmatpush1.msra.mxu0 0.0
  %2130 = vmatprep.subr.mxu0 0.0
  %2131 = vmatpush1.msra.mxu0 0.0
  %2132 = vmatprep.subr.mxu0 0.0
  %2133 = vmatpush1.msra.mxu0 0.0
  %2134 = vmatprep.subr.mxu0 0.0
  %2135 = vmatpush1.msra.mxu0 0.0
  %2136 = vmatprep.subr.mxu0 0.0
  %2137 = vmatpush1.msra.mxu0 0.0
  %2138 = vmatprep.subr.mxu0 0.0
  %2139 = vmatpush1.msra.mxu0 0.0
  %2140 = vmatprep.subr.mxu0 0.0
  %2141 = vmatpush1.msra.mxu0 0.0
  %2142 = vmatprep.subr.mxu0 0.0
  %2143 = vmatpush1.msra.mxu0 0.0
  %2144 = vmatprep.subr.mxu0 0.0
  %2145 = vmatpush1.msra.mxu0 0.0
  %2146 = vmatprep.subr.mxu0 0.0
  %2147 = vmatpush1.msra.mxu0 0.0
  %2148 = vmatprep.subr.mxu0 0.0
  %2149 = vmatpush1.msra.mxu0 0.0
  %2150 = vmatprep.subr.mxu0 0.0
  %2151 = vmatpush1.msra.mxu0 0.0
  %2152 = vmatprep.subr.mxu0 0.0
  %2153 = vmatpush1.msra.mxu0 0.0
  %2154 = vmatprep.subr.mxu0 0.0
  %2155 = vmatpush1.msra.mxu0 0.0
  %2156 = vmatprep.subr.mxu0 0.0
  %2157 = vmatpush1.msra.mxu0 0.0
  %2158 = vmatprep.subr.mxu0 0.0
  %2159 = vmatpush1.msra.mxu0 0.0
  %2160 = vmatprep.subr.mxu0 0.0
  %2161 = vmatpush1.msra.mxu0 0.0
  %2162 = vmatprep.subr.mxu0 0.0
  %2163 = vmatpush1.msra.mxu0 0.0
  %2164 = vmatprep.subr.mxu0 0.0
  %2165 = vmatpush1.msra.mxu0 0.0
  %2166 = vmatprep.subr.mxu0 0.0
  %2167 = vmatpush1.msra.mxu0 0.0
  %2168 = vmatprep.subr.mxu0 0.0
  %2169 = vmatpush1.msra.mxu0 0.0
  %2170 = vmatprep.subr.mxu0 0.0
  %2171 = vmatpush1.msra.mxu0 0.0
  %2172 = vmatprep.subr.mxu0 0.0
  %2173 = vmatpush1.msra.mxu0 0.0
  %2174 = vmatprep.subr.mxu0 0.0
  %2175 = vmatpush1.msra.mxu0 0.0
  %2176 = vmatprep.subr.mxu0 0.0
  %2177 = vmatpush1.msra.mxu0 0.0
  %2178 = vmatprep.subr.mxu0 0.0
  %2179 = vmatpush1.msra.mxu0 0.0
  %2180 = vmatprep.subr.mxu0 0.0
  %2181 = vmatpush1.msra.mxu0 0.0
  %2182 = vmatprep.mubr.f32.mxu0 0.0
  %2183 = vmatmul.mubr.f32.gmra.mrb[0].mxu0 %v2113
  %v2184 = vpop.f32.mrb[0].mxu0
  %v2185 = vadd.f32 0.0, %v2184
  %v2186 = vpop.f32.mrb[0].mxu0
  %2187 = vmatprep.mubr.f32.mxu0 0.0
  %2188 = vmatmul.mubr.f32.gmra.mrb[0].mxu0 %v2116
  %v2189 = vpop.f32.mrb[0].mxu0
  %v2190 = vadd.f32 0.0, %v2189
  %v2191 = vpop.f32.mrb[0].mxu0
  %2192 = vdwg.mxu0
  %v2193 = vmul.f32 %v2104, 0.33333334
  %v2194 = vmul.f32 %v2109, 0.33333334
  %v2195 = vmul.f32 %v2185, 0.33333334
  %v2196 = vmul.f32 %v2190, 0.33333334
  %v2197 = vadd.f32 %v2193, %v2195
  %v2198 = vadd.f32 %v2194, %v2196
  %v2199 = vadd.f32 %v2197, %v2195
  %v2200 = vadd.f32 %v2198, %v2196
  %v2201 = vmul.f32 %v2185, -0.16666667
  %v2202 = vmul.f32 %v2190, -0.16666667
  %v2203 = vadd.f32 %v2193, %v2201
  %v2204 = vadd.f32 %v2194, %v2202
  %v2205 = vadd.f32 %v2203, %v2201
  %v2206 = vadd.f32 %v2204, %v2202
  %v2207 = vmax.f32 %v2199, 0.0
  %v2208 = vmax.f32 %v2200, 0.0
  %v2209 = vmax.f32 %v2205, 0.0
  %v2210 = vmax.f32 %v2206, 0.0
  %v2211 = vld [vmem:[%s8] sm:$0x1]
  %v2212 = vld [vmem:[%s7] sm:$0xff]
  %v2213 = vld [vmem:[%s7 + $0x8] sm:$0xff]
  %v2214 = vld [vmem:[%s7 + $0x10] sm:$0xff]
  %v2215 = vld [vmem:[%s7 + $0x18] sm:$0xff]
  %v2217 = vsel %vm332, %v2207, 0
  %v2220 = vsel %vm332, %v2208, 0
  %2222 = vmatprep.subr.mxu0 0.0
  %2223 = vmatpush1.msra.mxu0 %v2212
  %2224 = vmatprep.subr.mxu0 0.0
  %2225 = vmatpush1.msra.mxu0 %v2213
  %2226 = vmatprep.subr.mxu0 0.0
  %2227 = vmatpush1.msra.mxu0 %v2214
  %2228 = vmatprep.subr.mxu0 0.0
  %2229 = vmatpush1.msra.mxu0 %v2215
  %2230 = vmatprep.subr.mxu0 0.0
  %2231 = vmatpush1.msra.mxu0 0.0
  %2232 = vmatprep.subr.mxu0 0.0
  %2233 = vmatpush1.msra.mxu0 0.0
  %2234 = vmatprep.subr.mxu0 0.0
  %2235 = vmatpush1.msra.mxu0 0.0
  %2236 = vmatprep.subr.mxu0 0.0
  %2237 = vmatpush1.msra.mxu0 0.0
  %2238 = vmatprep.subr.mxu0 0.0
  %2239 = vmatpush1.msra.mxu0 0.0
  %2240 = vmatprep.subr.mxu0 0.0
  %2241 = vmatpush1.msra.mxu0 0.0
  %2242 = vmatprep.subr.mxu0 0.0
  %2243 = vmatpush1.msra.mxu0 0.0
  %2244 = vmatprep.subr.mxu0 0.0
  %2245 = vmatpush1.msra.mxu0 0.0
  %2246 = vmatprep.subr.mxu0 0.0
  %2247 = vmatpush1.msra.mxu0 0.0
  %2248 = vmatprep.subr.mxu0 0.0
  %2249 = vmatpush1.msra.mxu0 0.0
  %2250 = vmatprep.subr.mxu0 0.0
  %2251 = vmatpush1.msra.mxu0 0.0
  %2252 = vmatprep.subr.mxu0 0.0
  %2253 = vmatpush1.msra.mxu0 0.0
  %2254 = vmatprep.subr.mxu0 0.0
  %2255 = vmatpush1.msra.mxu0 0.0
  %2256 = vmatprep.subr.mxu0 0.0
  %2257 = vmatpush1.msra.mxu0 0.0
  %2258 = vmatprep.subr.mxu0 0.0
  %2259 = vmatpush1.msra.mxu0 0.0
  %2260 = vmatprep.subr.mxu0 0.0
  %2261 = vmatpush1.msra.mxu0 0.0
  %2262 = vmatprep.subr.mxu0 0.0
  %2263 = vmatpush1.msra.mxu0 0.0
  %2264 = vmatprep.subr.mxu0 0.0
  %2265 = vmatpush1.msra.mxu0 0.0
  %2266 = vmatprep.subr.mxu0 0.0
  %2267 = vmatpush1.msra.mxu0 0.0
  %2268 = vmatprep.subr.mxu0 0.0
  %2269 = vmatpush1.msra.mxu0 0.0
  %2270 = vmatprep.subr.mxu0 0.0
  %2271 = vmatpush1.msra.mxu0 0.0
  %2272 = vmatprep.subr.mxu0 0.0
  %2273 = vmatpush1.msra.mxu0 0.0
  %2274 = vmatprep.subr.mxu0 0.0
  %2275 = vmatpush1.msra.mxu0 0.0
  %2276 = vmatprep.subr.mxu0 0.0
  %2277 = vmatpush1.msra.mxu0 0.0
  %2278 = vmatprep.subr.mxu0 0.0
  %2279 = vmatpush1.msra.mxu0 0.0
  %2280 = vmatprep.subr.mxu0 0.0
  %2281 = vmatpush1.msra.mxu0 0.0
  %2282 = vmatprep.subr.mxu0 0.0
  %2283 = vmatpush1.msra.mxu0 0.0
  %2284 = vmatprep.subr.mxu0 0.0
  %2285 = vmatpush1.msra.mxu0 0.0
  %2286 = vmatprep.mubr.f32.mxu0 0.0
  %2287 = vmatmul.mubr.f32.gmra.mrb[0].mxu0 %v2217
  %v2288 = vpop.f32.mrb[0].mxu0
  %v2289 = vadd.f32 0.0, %v2288
  %v2290 = vpop.f32.mrb[0].mxu0
  %2291 = vmatprep.mubr.f32.mxu0 0.0
  %2292 = vmatmul.mubr.f32.gmra.mrb[0].mxu0 %v2220
  %v2293 = vpop.f32.mrb[0].mxu0
  %v2294 = vadd.f32 0.0, %v2293
  %v2295 = vpop.f32.mrb[0].mxu0
  %2296 = vdwg.mxu0
  %v2298 = vlaneseq
  %v2299 = vshrl.u32 %v2298, 7
  %v2300 = vsub.s32 0, %v2299
  %v2301 = vrot.slane %v2211, %v2300
  %v2303 = vadd.f32 %v2301, %v2289
  %v2304 = vadd.f32 %v2301, %v2294
  %s2305 = scalar_lea.vmem %s7, 32
  %v2306 = vld [vmem:[%s2305] sm:$0xff]
  %v2307 = vld [vmem:[%s2305 + $0x8] sm:$0xff]
  %v2308 = vld [vmem:[%s2305 + $0x10] sm:$0xff]
  %v2309 = vld [vmem:[%s2305 + $0x18] sm:$0xff]
  %v2311 = vsel %vm332, %v2209, 0
  %v2314 = vsel %vm332, %v2210, 0
  %2316 = vmatprep.subr.mxu0 0.0
  %2317 = vmatpush1.msra.mxu0 %v2306
  %2318 = vmatprep.subr.mxu0 0.0
  %2319 = vmatpush1.msra.mxu0 %v2307
  %2320 = vmatprep.subr.mxu0 0.0
  %2321 = vmatpush1.msra.mxu0 %v2308
  %2322 = vmatprep.subr.mxu0 0.0
  %2323 = vmatpush1.msra.mxu0 %v2309
  %2324 = vmatprep.subr.mxu0 0.0
  %2325 = vmatpush1.msra.mxu0 0.0
  %2326 = vmatprep.subr.mxu0 0.0
  %2327 = vmatpush1.msra.mxu0 0.0
  %2328 = vmatprep.subr.mxu0 0.0
  %2329 = vmatpush1.msra.mxu0 0.0
  %2330 = vmatprep.subr.mxu0 0.0
  %2331 = vmatpush1.msra.mxu0 0.0
  %2332 = vmatprep.subr.mxu0 0.0
  %2333 = vmatpush1.msra.mxu0 0.0
  %2334 = vmatprep.subr.mxu0 0.0
  %2335 = vmatpush1.msra.mxu0 0.0
  %2336 = vmatprep.subr.mxu0 0.0
  %2337 = vmatpush1.msra.mxu0 0.0
  %2338 = vmatprep.subr.mxu0 0.0
  %2339 = vmatpush1.msra.mxu0 0.0
  %2340 = vmatprep.subr.mxu0 0.0
  %2341 = vmatpush1.msra.mxu0 0.0
  %2342 = vmatprep.subr.mxu0 0.0
  %2343 = vmatpush1.msra.mxu0 0.0
  %2344 = vmatprep.subr.mxu0 0.0
  %2345 = vmatpush1.msra.mxu0 0.0
  %2346 = vmatprep.subr.mxu0 0.0
  %2347 = vmatpush1.msra.mxu0 0.0
  %2348 = vmatprep.subr.mxu0 0.0
  %2349 = vmatpush1.msra.mxu0 0.0
  %2350 = vmatprep.subr.mxu0 0.0
  %2351 = vmatpush1.msra.mxu0 0.0
  %2352 = vmatprep.subr.mxu0 0.0
  %2353 = vmatpush1.msra.mxu0 0.0
  %2354 = vmatprep.subr.mxu0 0.0
  %2355 = vmatpush1.msra.mxu0 0.0
  %2356 = vmatprep.subr.mxu0 0.0
  %2357 = vmatpush1.msra.mxu0 0.0
  %2358 = vmatprep.subr.mxu0 0.0
  %2359 = vmatpush1.msra.mxu0 0.0
  %2360 = vmatprep.subr.mxu0 0.0
  %2361 = vmatpush1.msra.mxu0 0.0
  %2362 = vmatprep.subr.mxu0 0.0
  %2363 = vmatpush1.msra.mxu0 0.0
  %2364 = vmatprep.subr.mxu0 0.0
  %2365 = vmatpush1.msra.mxu0 0.0
  %2366 = vmatprep.subr.mxu0 0.0
  %2367 = vmatpush1.msra.mxu0 0.0
  %2368 = vmatprep.subr.mxu0 0.0
  %2369 = vmatpush1.msra.mxu0 0.0
  %2370 = vmatprep.subr.mxu0 0.0
  %2371 = vmatpush1.msra.mxu0 0.0
  %2372 = vmatprep.subr.mxu0 0.0
  %2373 = vmatpush1.msra.mxu0 0.0
  %2374 = vmatprep.subr.mxu0 0.0
  %2375 = vmatpush1.msra.mxu0 0.0
  %2376 = vmatprep.subr.mxu0 0.0
  %2377 = vmatpush1.msra.mxu0 0.0
  %2378 = vmatprep.subr.mxu0 0.0
  %2379 = vmatpush1.msra.mxu0 0.0
  %2380 = vmatprep.mubr.f32.mxu0 0.0
  %2381 = vmatmul.mubr.f32.gmra.mrb[0].mxu0 %v2311
  %v2382 = vpop.f32.mrb[0].mxu0
  %v2383 = vadd.f32 0.0, %v2382
  %v2384 = vpop.f32.mrb[0].mxu0
  %2385 = vmatprep.mubr.f32.mxu0 0.0
  %2386 = vmatmul.mubr.f32.gmra.mrb[0].mxu0 %v2314
  %v2387 = vpop.f32.mrb[0].mxu0
  %v2388 = vadd.f32 0.0, %v2387
  %v2389 = vpop.f32.mrb[0].mxu0
  %2390 = vdwg.mxu0
  %v2391 = vadd.f32 %v2303, %v2383
  %v2392 = vadd.f32 %v2304, %v2388
  %s2393 = scalar_lea.vmem %s7, 64
  %v2394 = vld [vmem:[%s2393] sm:$0xff]
  %v2395 = vld [vmem:[%s2393 + $0x8] sm:$0xff]
  %v2396 = vld [vmem:[%s2393 + $0x10] sm:$0xff]
  %v2397 = vld [vmem:[%s2393 + $0x18] sm:$0xff]
  %2398 = vmatprep.subr.mxu0 0.0
  %2399 = vmatpush1.msra.mxu0 %v2394
  %2400 = vmatprep.subr.mxu0 0.0
  %2401 = vmatpush1.msra.mxu0 %v2395
  %2402 = vmatprep.subr.mxu0 0.0
  %2403 = vmatpush1.msra.mxu0 %v2396
  %2404 = vmatprep.subr.mxu0 0.0
  %2405 = vmatpush1.msra.mxu0 %v2397
  %2406 = vmatprep.subr.mxu0 0.0
  %2407 = vmatpush1.msra.mxu0 0.0
  %2408 = vmatprep.subr.mxu0 0.0
  %2409 = vmatpush1.msra.mxu0 0.0
  %2410 = vmatprep.subr.mxu0 0.0
  %2411 = vmatpush1.msra.mxu0 0.0
  %2412 = vmatprep.subr.mxu0 0.0
  %2413 = vmatpush1.msra.mxu0 0.0
  %2414 = vmatprep.subr.mxu0 0.0
  %2415 = vmatpush1.msra.mxu0 0.0
  %2416 = vmatprep.subr.mxu0 0.0
  %2417 = vmatpush1.msra.mxu0 0.0
  %2418 = vmatprep.subr.mxu0 0.0
  %2419 = vmatpush1.msra.mxu0 0.0
  %2420 = vmatprep.subr.mxu0 0.0
  %2421 = vmatpush1.msra.mxu0 0.0
  %2422 = vmatprep.subr.mxu0 0.0
  %2423 = vmatpush1.msra.mxu0 0.0
  %2424 = vmatprep.subr.mxu0 0.0
  %2425 = vmatpush1.msra.mxu0 0.0
  %2426 = vmatprep.subr.mxu0 0.0
  %2427 = vmatpush1.msra.mxu0 0.0
  %2428 = vmatprep.subr.mxu0 0.0
  %2429 = vmatpush1.msra.mxu0 0.0
  %2430 = vmatprep.subr.mxu0 0.0
  %2431 = vmatpush1.msra.mxu0 0.0
  %2432 = vmatprep.subr.mxu0 0.0
  %2433 = vmatpush1.msra.mxu0 0.0
  %2434 = vmatprep.subr.mxu0 0.0
  %2435 = vmatpush1.msra.mxu0 0.0
  %2436 = vmatprep.subr.mxu0 0.0
  %2437 = vmatpush1.msra.mxu0 0.0
  %2438 = vmatprep.subr.mxu0 0.0
  %2439 = vmatpush1.msra.mxu0 0.0
  %2440 = vmatprep.subr.mxu0 0.0
  %2441 = vmatpush1.msra.mxu0 0.0
  %2442 = vmatprep.subr.mxu0 0.0
  %2443 = vmatpush1.msra.mxu0 0.0
  %2444 = vmatprep.subr.mxu0 0.0
  %2445 = vmatpush1.msra.mxu0 0.0
  %2446 = vmatprep.subr.mxu0 0.0
  %2447 = vmatpush1.msra.mxu0 0.0
  %2448 = vmatprep.subr.mxu0 0.0
  %2449 = vmatpush1.msra.mxu0 0.0
  %2450 = vmatprep.subr.mxu0 0.0
  %2451 = vmatpush1.msra.mxu0 0.0
  %2452 = vmatprep.subr.mxu0 0.0
  %2453 = vmatpush1.msra.mxu0 0.0
  %2454 = vmatprep.subr.mxu0 0.0
  %2455 = vmatpush1.msra.mxu0 0.0
  %2456 = vmatprep.subr.mxu0 0.0
  %2457 = vmatpush1.msra.mxu0 0.0
  %2458 = vmatprep.subr.mxu0 0.0
  %2459 = vmatpush1.msra.mxu0 0.0
  %2460 = vmatprep.subr.mxu0 0.0
  %2461 = vmatpush1.msra.mxu0 0.0
  %2462 = vmatprep.mubr.f32.mxu0 0.0
  %2463 = vmatmul.mubr.f32.gmra.mrb[0].mxu0 %v2311
  %v2464 = vpop.f32.mrb[0].mxu0
  %v2465 = vadd.f32 0.0, %v2464
  %v2466 = vpop.f32.mrb[0].mxu0
  %2467 = vmatprep.mubr.f32.mxu0 0.0
  %2468 = vmatmul.mubr.f32.gmra.mrb[0].mxu0 %v2314
  %v2469 = vpop.f32.mrb[0].mxu0
  %v2470 = vadd.f32 0.0, %v2469
  %v2471 = vpop.f32.mrb[0].mxu0
  %2472 = vdwg.mxu0
  %v2473 = vadd.f32 %v2391, %v2465
  %v2474 = vadd.f32 %v2392, %v2470
  %v2475 = vmax.f32 %v2473, 0.0
  %v2476 = vmax.f32 %v2474, 0.0
  %v2477 = vld [vmem:[%s9] sm:$0xff]
  %v2478 = vld [vmem:[%s9 + $0x8] sm:$0xff]
  %v2479 = vld [vmem:[%s9 + $0x10] sm:$0xff]
  %v2480 = vld [vmem:[%s9 + $0x18] sm:$0xff]
  %v2481 = vld [vmem:[%s10] sm:$0x1]
  %v2483 = vlaneseq
  %v2484 = vshrl.u32 %v2483, 7
  %v2485 = vsub.s32 0, %v2484
  %v2486 = vrot.slane %v2481, %v2485
  %v2489 = vsel %vm332, %v2475, 0
  %v2492 = vsel %vm332, %v2476, 0
  %2494 = vmatprep.subr.mxu0 0.0
  %2495 = vmatpush1.msra.mxu0 %v2477
  %2496 = vmatprep.subr.mxu0 0.0
  %2497 = vmatpush1.msra.mxu0 %v2478
  %2498 = vmatprep.subr.mxu0 0.0
  %2499 = vmatpush1.msra.mxu0 %v2479
  %2500 = vmatprep.subr.mxu0 0.0
  %2501 = vmatpush1.msra.mxu0 %v2480
  %2502 = vmatprep.subr.mxu0 0.0
  %2503 = vmatpush1.msra.mxu0 0.0
  %2504 = vmatprep.subr.mxu0 0.0
  %2505 = vmatpush1.msra.mxu0 0.0
  %2506 = vmatprep.subr.mxu0 0.0
  %2507 = vmatpush1.msra.mxu0 0.0
  %2508 = vmatprep.subr.mxu0 0.0
  %2509 = vmatpush1.msra.mxu0 0.0
  %2510 = vmatprep.subr.mxu0 0.0
  %2511 = vmatpush1.msra.mxu0 0.0
  %2512 = vmatprep.subr.mxu0 0.0
  %2513 = vmatpush1.msra.mxu0 0.0
  %2514 = vmatprep.subr.mxu0 0.0
  %2515 = vmatpush1.msra.mxu0 0.0
  %2516 = vmatprep.subr.mxu0 0.0
  %2517 = vmatpush1.msra.mxu0 0.0
  %2518 = vmatprep.subr.mxu0 0.0
  %2519 = vmatpush1.msra.mxu0 0.0
  %2520 = vmatprep.subr.mxu0 0.0
  %2521 = vmatpush1.msra.mxu0 0.0
  %2522 = vmatprep.subr.mxu0 0.0
  %2523 = vmatpush1.msra.mxu0 0.0
  %2524 = vmatprep.subr.mxu0 0.0
  %2525 = vmatpush1.msra.mxu0 0.0
  %2526 = vmatprep.subr.mxu0 0.0
  %2527 = vmatpush1.msra.mxu0 0.0
  %2528 = vmatprep.subr.mxu0 0.0
  %2529 = vmatpush1.msra.mxu0 0.0
  %2530 = vmatprep.subr.mxu0 0.0
  %2531 = vmatpush1.msra.mxu0 0.0
  %2532 = vmatprep.subr.mxu0 0.0
  %2533 = vmatpush1.msra.mxu0 0.0
  %2534 = vmatprep.subr.mxu0 0.0
  %2535 = vmatpush1.msra.mxu0 0.0
  %2536 = vmatprep.subr.mxu0 0.0
  %2537 = vmatpush1.msra.mxu0 0.0
  %2538 = vmatprep.subr.mxu0 0.0
  %2539 = vmatpush1.msra.mxu0 0.0
  %2540 = vmatprep.subr.mxu0 0.0
  %2541 = vmatpush1.msra.mxu0 0.0
  %2542 = vmatprep.subr.mxu0 0.0
  %2543 = vmatpush1.msra.mxu0 0.0
  %2544 = vmatprep.subr.mxu0 0.0
  %2545 = vmatpush1.msra.mxu0 0.0
  %2546 = vmatprep.subr.mxu0 0.0
  %2547 = vmatpush1.msra.mxu0 0.0
  %2548 = vmatprep.subr.mxu0 0.0
  %2549 = vmatpush1.msra.mxu0 0.0
  %2550 = vmatprep.subr.mxu0 0.0
  %2551 = vmatpush1.msra.mxu0 0.0
  %2552 = vmatprep.subr.mxu0 0.0
  %2553 = vmatpush1.msra.mxu0 0.0
  %2554 = vmatprep.subr.mxu0 0.0
  %2555 = vmatpush1.msra.mxu0 0.0
  %2556 = vmatprep.subr.mxu0 0.0
  %2557 = vmatpush1.msra.mxu0 0.0
  %2558 = vmatprep.mubr.f32.mxu0 0.0
  %2559 = vmatmul.mubr.f32.gmra.mrb[0].mxu0 %v2489
  %v2560 = vpop.f32.mrb[0].mxu0
  %v2561 = vadd.f32 %v2486, %v2560
  %v2562 = vpop.f32.mrb[0].mxu0
  %2563 = vmatprep.mubr.f32.mxu0 0.0
  %2564 = vmatmul.mubr.f32.gmra.mrb[0].mxu0 %v2492
  %v2565 = vpop.f32.mrb[0].mxu0
  %v2566 = vadd.f32 %v2486, %v2565
  %v2567 = vpop.f32.mrb[0].mxu0
  %2568 = vdwg.mxu0
  %vm2569 = vcmask 31744
  %2570 = vst.msk [vmem:[%s11] sm:$0xff] %vm2569, %v2561
  %2571 = vst.msk [vmem:[%s11 + $0x8] sm:$0xff] %vm2569, %v2566
  // Predicated region
  $region46: #{mrgcn_forward.1} parent=0 // pred_check
    _
  $region47: #{mrgcn_forward.1} parent=0 // pred_check_branch
    %2573 = sbr.rel (0) target = $region49
  $region48: #{mrgcn_forward.1} parent=0 // pred_region
    _
  $region49: #{mrgcn_forward.1} parent=0 // pred_fallthru
    _
  // Predicated region
  $region50: #{mrgcn_forward.1} parent=0 // pred_check
    _
  $region51: #{mrgcn_forward.1} parent=0 // pred_check_branch
    %2575 = sbr.rel (0) target = $region53
  $region52: #{mrgcn_forward.1} parent=0 // pred_region
    _
  $region53: #{mrgcn_forward.1} parent=0 // pred_fallthru
    _

</llo_original>
